<compile_context>
chip_gen: v6e
topology: v6e:2x2x1
jax: 0.10.0
libtpu: 0.0.40
codegen_flags: <defaults>
</compile_context>

<pallas_src>
import functools
import math

import jax
import jax.numpy as jnp
from jax import lax
from jax.experimental import pallas as pl
from jax.experimental.pallas import tpu as pltpu


def _round_up(x, m):
    return (x + m - 1) // m * m


def _cross_attention_kernel(
    s1_ref, s2_ref, mask_ref,
    wq_ref, bq_ref, wk_ref, bk_ref, wv_ref, bv_ref,
    wo_ref, bo_ref, gamma_ref, beta_ref,
    out_ref,
    ctx_ref,
    *, num_heads, head_dim, kv_width, ln_eps):
    f32 = jnp.float32
    bf16 = jnp.bfloat16

    s1 = s1_ref[0]                       # (BS1, H)  query-side block (residual)
    s2 = s2_ref[0]                       # (S2, H)   key/value-side hidden states
    mask = mask_ref[0].astype(f32)       # (1, S2)   additive attention mask

    bs1_rows = s1.shape[0]
    s2_rows = s2.shape[0]

    s1_bf = s1.astype(bf16)
    s2_bf = s2.astype(bf16)

    # --- BertCoAttention projections: bf16 MXU operands, f32 accumulate -----
    q = jnp.dot(s1_bf, wq_ref[...], preferred_element_type=f32) + bq_ref[...]
    k3 = jnp.dot(s2_bf, wk_ref[...], preferred_element_type=f32) + bk_ref[...]
    v3 = jnp.dot(s2_bf, wv_ref[...], preferred_element_type=f32) + bv_ref[...]

    # Fold the 1/sqrt(head_dim) score scale into q once (loop invariant).
    q_bf = (q * (1.0 / math.sqrt(head_dim))).astype(bf16)

    shares_kv = (kv_width % head_dim == 0)
    if shares_kv:
        # torch.cat([k3,k3,k3],-1) never materialized: per-head K/V slices are
        # modular slices of k3/v3.  Hoist the single K transpose out of the
        # head loop so the score matmul RHS is already (head_dim, S2).
        k_src_t = k3.astype(bf16).T      # (kv_width, S2) -- one XLU transpose
        v_src = v3.astype(bf16)          # (S2, kv_width)
    else:
        # Fallback: head slices straddle copy boundaries -> materialize concat.
        k_full = jnp.concatenate([k3, k3, k3], axis=-1)
        v_full = jnp.concatenate([v3, v3, v3], axis=-1)
        k_src_t = k_full.astype(bf16).T
        v_src = v_full.astype(bf16)

    # Broadcast the additive mask once (JAX does not CSE broadcast_in_dim).
    mask_b = jnp.broadcast_to(mask, (bs1_rows, s2_rows))

    # --- per-head scaled-dot-product attention -------------------------------
    # TODO(synk): on v6e/v7x the per-head (bs1,128)x(128,S2) matmuls quarter-
    # fill the 256x256 MXU; heads could be stacked into M at the cost of a
    # tile-crossing reshape.
    for h in range(num_heads):           # num_heads is small & static
        lo = h * head_dim
        src_lo = (lo % kv_width) if shares_kv else lo

        qh = q_bf[:, lo:lo + head_dim]                    # (BS1, hd)  bf16
        kht = k_src_t[src_lo:src_lo + head_dim, :]        # (hd, S2)   bf16
        vh = v_src[:, src_lo:src_lo + head_dim]           # (S2, hd)   bf16

        s = jnp.dot(qh, kht, preferred_element_type=f32) + mask_b
        m = jnp.max(s, axis=-1, keepdims=True)
        e = jnp.exp(s - m)
        p = e * pl.reciprocal(jnp.sum(e, axis=-1, keepdims=True), approx=True)

        # TODO(synk): attention-probs dropout treated as identity (eval mode).
        ctx_ref[:, lo:lo + head_dim] = jnp.dot(
            p.astype(bf16), vh, preferred_element_type=f32).astype(bf16)

    # --- BertSelfOutput: dense -> (+ residual) -> LayerNorm ------------------
    proj = jnp.dot(ctx_ref[...], wo_ref[...],
                   preferred_element_type=f32) + bo_ref[...]
    # TODO(synk): hidden-states dropout treated as identity (eval mode).
    x = proj + s1.astype(f32)
    mean = jnp.mean(x, axis=-1, keepdims=True)
    var = jnp.mean(jnp.square(x - mean), axis=-1, keepdims=True)
    xn = (x - mean) * lax.rsqrt(var + ln_eps)
    out_ref[0] = (xn * gamma_ref[...] + beta_ref[...]).astype(out_ref.dtype)


def bert_cross_attention(s1, s2, attention_mask, params, *, num_heads,
                         block_s1=256, ln_eps=1e-12, min_grid_steps=4):
    """Fused forward of BertCrossAttention.

    s1:  (B, S1, H) query-side hidden states (also the residual input)
    s2:  (B, S2, H) key/value-side hidden states
    attention_mask: additive mask with B*S2 elements (e.g. (B, 1, 1, S2)),
        0 for attend / large negative for masked.
    params: linear weights stored (in, out) so the kernel computes x @ W + b.
    """
    B, S1, H = s1.shape
    _, S2, _ = s2.shape
    if H % 3 != 0 or H % num_heads != 0:
        raise ValueError("hidden size must be divisible by 3 and num_heads")
    head_dim = H // num_heads
    hk = H // 3

    mask3 = attention_mask.reshape(B, 1, S2).astype(jnp.float32)

    # Row-block size: as large as allowed, but shrink (down to 64) until the
    # grid has >= min_grid_steps steps so each megacore TensorCore gets at
    # least two steps and the s1/out DMAs overlap with compute.
    bs1 = min(block_s1, _round_up(S1, 8))
    while bs1 > 64 and B * ((S1 + bs1 - 1) // bs1) < min_grid_steps:
        bs1 = max(64, _round_up(max(bs1 // 2, 8), 8))
    s1p_len = _round_up(S1, bs1)
    s1_p = s1 if s1p_len == S1 else jnp.pad(
        s1, ((0, 0), (0, s1p_len - S1), (0, 0)))

    # Weights feed the MXU: store them bf16 (halves HBM/VMEM bytes).  Biases,
    # gamma and beta stay f32 (vector math is f32).
    bf16 = jnp.bfloat16
    f32 = jnp.float32
    wq = params["wq"].astype(bf16)
    wk = params["wk"].astype(bf16)
    wv = params["wv"].astype(bf16)
    wo = params["wo"].astype(bf16)
    bq = params["bq"].reshape(1, H).astype(f32)
    bk = params["bk"].reshape(1, hk).astype(f32)
    bv = params["bv"].reshape(1, hk).astype(f32)
    bo = params["bo"].reshape(1, H).astype(f32)
    gamma = params["gamma"].reshape(1, H).astype(f32)
    beta = params["beta"].reshape(1, H).astype(f32)

    grid = (B, s1p_len // bs1)
    full = lambda b, i: (0, 0)

    kernel = functools.partial(_cross_attention_kernel,
                               num_heads=num_heads, head_dim=head_dim,
                               kv_width=hk, ln_eps=ln_eps)

    out = pl.pallas_call(
        kernel,
        out_shape=jax.ShapeDtypeStruct((B, s1p_len, H), s1.dtype),
        grid=grid,
        in_specs=[
            pl.BlockSpec((1, bs1, H), lambda b, i: (b, i, 0)),    # s1 block
            pl.BlockSpec((1, S2, H), lambda b, i: (b, 0, 0)),     # s2 (full)
            pl.BlockSpec((1, 1, S2), lambda b, i: (b, 0, 0)),     # mask
            pl.BlockSpec((H, H), full),                            # wq (bf16)
            pl.BlockSpec((1, H), full),                            # bq
            pl.BlockSpec((H, hk), full),                           # wk (bf16)
            pl.BlockSpec((1, hk), full),                           # bk
            pl.BlockSpec((H, hk), full),                           # wv (bf16)
            pl.BlockSpec((1, hk), full),                           # bv
            pl.BlockSpec((H, H), full),                            # wo (bf16)
            pl.BlockSpec((1, H), full),                            # bo
            pl.BlockSpec((1, H), full),                            # gamma
            pl.BlockSpec((1, H), full),                            # beta
        ],
        out_specs=pl.BlockSpec((1, bs1, H), lambda b, i: (b, i, 0)),
        scratch_shapes=[pltpu.VMEM((bs1, H), jnp.bfloat16)],       # per-head ctx
        compiler_params=pltpu.CompilerParams(
            dimension_semantics=("parallel", "parallel"),
            # Plenty at these shapes; re-derive for production sizes on v7x
            # (64 MiB physical VMEM) -- block over S2 if full-S2 K/V no
            # longer fits.
            vmem_limit_bytes=32 * 1024 * 1024,
        ),
    )(s1_p, s2, mask3, wq, bq, wk, bk, wv, bv, wo, bo, gamma, beta)

    return out[:, :S1, :]


def _reference(s1, s2, attention_mask, params, *, num_heads, ln_eps=1e-12):
    """Pure-JAX replica of the PyTorch forward (eval-mode dropout)."""
    B, S1, H = s1.shape
    _, S2, _ = s2.shape
    hd = H // num_heads
    hp = lax.Precision.HIGHEST
    q = jnp.dot(s1, params["wq"], precision=hp) + params["bq"]
    k3 = jnp.dot(s2, params["wk"], precision=hp) + params["bk"]
    v3 = jnp.dot(s2, params["wv"], precision=hp) + params["bv"]
    k = jnp.concatenate([k3, k3, k3], axis=-1)
    v = jnp.concatenate([v3, v3, v3], axis=-1)

    def split(x):
        return x.reshape(B, -1, num_heads, hd).transpose(0, 2, 1, 3)

    ql, kl, vl = split(q), split(k), split(v)
    scores = jnp.einsum("bhqd,bhkd->bhqk", ql, kl, precision=hp) / math.sqrt(hd)
    scores = scores + attention_mask.reshape(B, 1, 1, S2)
    probs = jax.nn.softmax(scores, axis=-1)
    ctx = jnp.einsum("bhqk,bhkd->bhqd", probs, vl, precision=hp)
    ctx = ctx.transpose(0, 2, 1, 3).reshape(B, S1, H)
    proj = jnp.dot(ctx, params["wo"], precision=hp) + params["bo"]
    x = proj + s1
    mean = x.mean(axis=-1, keepdims=True)
    var = ((x - mean) ** 2).mean(axis=-1, keepdims=True)
    return (x - mean) / jnp.sqrt(var + ln_eps) * params["gamma"] + params["beta"]


if __name__ == "__main__":
    # Small but TPU-friendly config: hidden must be divisible by 3 and by
    # num_heads -> H=384 (=3*128), num_heads=3, head_dim=128.
    B, S1, S2, H, NH = 2, 128, 128, 384, 3
    HK = H // 3

    key = jax.random.PRNGKey(0)
    ks = jax.random.split(key, 14)
    s1 = jax.random.normal(ks[0], (B, S1, H), jnp.float32)
    s2 = jax.random.normal(ks[1], (B, S2, H), jnp.float32)
    valid = jax.random.bernoulli(ks[2], 0.9, (B, S2))
    mask = jnp.where(valid, 0.0, -10000.0).astype(jnp.float32).reshape(B, 1, 1, S2)

    params = dict(
        wq=0.02 * jax.random.normal(ks[3], (H, H), jnp.float32),
        bq=0.02 * jax.random.normal(ks[4], (H,), jnp.float32),
        wk=0.02 * jax.random.normal(ks[5], (H, HK), jnp.float32),
        bk=0.02 * jax.random.normal(ks[6], (HK,), jnp.float32),
        wv=0.02 * jax.random.normal(ks[7], (H, HK), jnp.float32),
        bv=0.02 * jax.random.normal(ks[8], (HK,), jnp.float32),
        wo=0.02 * jax.random.normal(ks[9], (H, H), jnp.float32),
        bo=0.02 * jax.random.normal(ks[10], (H,), jnp.float32),
        gamma=1.0 + 0.1 * jax.random.normal(ks[11], (H,), jnp.float32),
        beta=0.1 * jax.random.normal(ks[12], (H,), jnp.float32),
    )

    out = bert_cross_attention(s1, s2, mask, params, num_heads=NH)
    jax.block_until_ready(out)

    ref = _reference(s1, s2, mask, params, num_heads=NH)
    assert out.shape == (B, S1, H)
    # bf16 MXU operands (f32 accumulate, f32 softmax/LayerNorm) -> tolerance
    # re-validated vs. the HIGHEST-precision f32 reference.
    assert jnp.allclose(out, ref, atol=2e-2, rtol=2e-2), (
        float(jnp.max(jnp.abs(out - ref))))

    print("KERNEL_OK")
</pallas_src>

<mosaic_0001>
module attributes {stable_mosaic.version = 11 : i64} {
  func.func @_cross_attention_kernel(%arg0: i32, %arg1: i32, %arg2: memref<1x64x384xf32, #tpu.memory_space<vmem>>, %arg3: memref<1x128x384xf32, #tpu.memory_space<vmem>>, %arg4: memref<1x1x128xf32, #tpu.memory_space<vmem>>, %arg5: memref<384x384xbf16, #tpu.memory_space<vmem>>, %arg6: memref<1x384xf32, #tpu.memory_space<vmem>>, %arg7: memref<384x128xbf16, #tpu.memory_space<vmem>>, %arg8: memref<1x128xf32, #tpu.memory_space<vmem>>, %arg9: memref<384x128xbf16, #tpu.memory_space<vmem>>, %arg10: memref<1x128xf32, #tpu.memory_space<vmem>>, %arg11: memref<384x384xbf16, #tpu.memory_space<vmem>>, %arg12: memref<1x384xf32, #tpu.memory_space<vmem>>, %arg13: memref<1x384xf32, #tpu.memory_space<vmem>>, %arg14: memref<1x384xf32, #tpu.memory_space<vmem>>, %arg15: memref<1x64x384xf32, #tpu.memory_space<vmem>>, %arg16: memref<64x384xbf16, #tpu.memory_space<vmem>>) attributes {dimension_semantics = [#tpu.dimension_semantics<parallel>, #tpu.dimension_semantics<parallel>], iteration_bounds = array<i64: 2, 2>, scalar_prefetch = 0 : i64, scratch_operands = 1 : i64, tpu.core_type = #tpu.core_type<tc>, window_params = [{transform_indices = @transform_0, window_bounds = array<i64: 1, 64, 384>}, {transform_indices = @transform_1, window_bounds = array<i64: 1, 128, 384>}, {transform_indices = @transform_2, window_bounds = array<i64: 1, 1, 128>}, {pipeline_mode = #tpu.pipeline_mode<synchronous>, transform_indices = @transform_3, window_bounds = array<i64: 384, 384>}, {pipeline_mode = #tpu.pipeline_mode<synchronous>, transform_indices = @transform_4, window_bounds = array<i64: 1, 384>}, {pipeline_mode = #tpu.pipeline_mode<synchronous>, transform_indices = @transform_5, window_bounds = array<i64: 384, 128>}, {pipeline_mode = #tpu.pipeline_mode<synchronous>, transform_indices = @transform_6, window_bounds = array<i64: 1, 128>}, {pipeline_mode = #tpu.pipeline_mode<synchronous>, transform_indices = @transform_7, window_bounds = array<i64: 384, 128>}, {pipeline_mode = #tpu.pipeline_mode<synchronous>, transform_indices = @transform_8, window_bounds = array<i64: 1, 128>}, {pipeline_mode = #tpu.pipeline_mode<synchronous>, transform_indices = @transform_9, window_bounds = array<i64: 384, 384>}, {pipeline_mode = #tpu.pipeline_mode<synchronous>, transform_indices = @transform_10, window_bounds = array<i64: 1, 384>}, {pipeline_mode = #tpu.pipeline_mode<synchronous>, transform_indices = @transform_11, window_bounds = array<i64: 1, 384>}, {pipeline_mode = #tpu.pipeline_mode<synchronous>, transform_indices = @transform_12, window_bounds = array<i64: 1, 384>}, {transform_indices = @transform_13, window_bounds = array<i64: 1, 64, 384>}]} {
    %c0 = arith.constant 0 : index
    %c0_0 = arith.constant 0 : index
    %c0_1 = arith.constant 0 : index
    %0 = vector.load %arg2[%c0, %c0_0, %c0_1] : memref<1x64x384xf32, #tpu.memory_space<vmem>>, vector<1x64x384xf32>
    %1 = vector.shape_cast %0 : vector<1x64x384xf32> to vector<64x384xf32>
    %c0_2 = arith.constant 0 : index
    %c0_3 = arith.constant 0 : index
    %c0_4 = arith.constant 0 : index
    %2 = vector.load %arg3[%c0_2, %c0_3, %c0_4] : memref<1x128x384xf32, #tpu.memory_space<vmem>>, vector<1x128x384xf32>
    %3 = vector.shape_cast %2 : vector<1x128x384xf32> to vector<128x384xf32>
    %c0_5 = arith.constant 0 : index
    %c0_6 = arith.constant 0 : index
    %c0_7 = arith.constant 0 : index
    %4 = vector.load %arg4[%c0_5, %c0_6, %c0_7] : memref<1x1x128xf32, #tpu.memory_space<vmem>>, vector<1x1x128xf32>
    %5 = vector.shape_cast %4 : vector<1x1x128xf32> to vector<1x128xf32>
    %6 = arith.truncf %1 : vector<64x384xf32> to vector<64x384xbf16>
    %7 = arith.truncf %3 : vector<128x384xf32> to vector<128x384xbf16>
    %c0_8 = arith.constant 0 : index
    %c0_9 = arith.constant 0 : index
    %8 = vector.load %arg5[%c0_8, %c0_9] : memref<384x384xbf16, #tpu.memory_space<vmem>>, vector<384x384xbf16>
    %cst = arith.constant dense<0.000000e+00> : vector<64x384xf32>
    %9 = tpu.matmul %6, %8, %cst {dimension_numbers = #tpu.dot_dimension_numbers<[1], [0], [0], [1], [0, 0, 1, 1], [], []>} : vector<64x384xbf16>, vector<384x384xbf16>, vector<64x384xf32> -> vector<64x384xf32>
    %c0_10 = arith.constant 0 : index
    %c0_11 = arith.constant 0 : index
    %10 = vector.load %arg6[%c0_10, %c0_11] : memref<1x384xf32, #tpu.memory_space<vmem>>, vector<1x384xf32>
    %11 = vector.broadcast %10 : vector<1x384xf32> to vector<64x384xf32>
    %12 = arith.addf %9, %11 : vector<64x384xf32>
    %c0_12 = arith.constant 0 : index
    %c0_13 = arith.constant 0 : index
    %13 = vector.load %arg7[%c0_12, %c0_13] : memref<384x128xbf16, #tpu.memory_space<vmem>>, vector<384x128xbf16>
    %cst_14 = arith.constant dense<0.000000e+00> : vector<128x128xf32>
    %14 = tpu.matmul %7, %13, %cst_14 {dimension_numbers = #tpu.dot_dimension_numbers<[1], [0], [0], [1], [0, 0, 1, 1], [], []>} : vector<128x384xbf16>, vector<384x128xbf16>, vector<128x128xf32> -> vector<128x128xf32>
    %c0_15 = arith.constant 0 : index
    %c0_16 = arith.constant 0 : index
    %15 = vector.load %arg8[%c0_15, %c0_16] : memref<1x128xf32, #tpu.memory_space<vmem>>, vector<1x128xf32>
    %16 = vector.broadcast %15 : vector<1x128xf32> to vector<128x128xf32>
    %17 = arith.addf %14, %16 : vector<128x128xf32>
    %c0_17 = arith.constant 0 : index
    %c0_18 = arith.constant 0 : index
    %18 = vector.load %arg9[%c0_17, %c0_18] : memref<384x128xbf16, #tpu.memory_space<vmem>>, vector<384x128xbf16>
    %cst_19 = arith.constant dense<0.000000e+00> : vector<128x128xf32>
    %19 = tpu.matmul %7, %18, %cst_19 {dimension_numbers = #tpu.dot_dimension_numbers<[1], [0], [0], [1], [0, 0, 1, 1], [], []>} : vector<128x384xbf16>, vector<384x128xbf16>, vector<128x128xf32> -> vector<128x128xf32>
    %c0_20 = arith.constant 0 : index
    %c0_21 = arith.constant 0 : index
    %20 = vector.load %arg10[%c0_20, %c0_21] : memref<1x128xf32, #tpu.memory_space<vmem>>, vector<1x128xf32>
    %21 = vector.broadcast %20 : vector<1x128xf32> to vector<128x128xf32>
    %22 = arith.addf %19, %21 : vector<128x128xf32>
    %cst_22 = arith.constant 0.0883883461 : f32
    %23 = vector.broadcast %cst_22 : f32 to vector<64x384xf32>
    %24 = arith.mulf %12, %23 : vector<64x384xf32>
    %25 = arith.truncf %24 : vector<64x384xf32> to vector<64x384xbf16>
    %26 = arith.truncf %17 : vector<128x128xf32> to vector<128x128xbf16>
    %27 = tpu.transpose %26, [1, 0] : vector<128x128xbf16> -> vector<128x128xbf16>
    %28 = arith.truncf %22 : vector<128x128xf32> to vector<128x128xbf16>
    %29 = vector.shape_cast %5 : vector<1x128xf32> to vector<1x128xf32>
    %30 = vector.broadcast %29 : vector<1x128xf32> to vector<64x128xf32>
    %31 = vector.extract_strided_slice %25 {offsets = [0, 0], sizes = [64, 128], strides = [1, 1]} : vector<64x384xbf16> to vector<64x128xbf16>
    %cst_23 = arith.constant dense<0.000000e+00> : vector<64x128xf32>
    %32 = tpu.matmul %31, %27, %cst_23 {dimension_numbers = #tpu.dot_dimension_numbers<[1], [0], [0], [1], [0, 0, 1, 1], [], []>} : vector<64x128xbf16>, vector<128x128xbf16>, vector<64x128xf32> -> vector<64x128xf32>
    %33 = arith.addf %32, %30 : vector<64x128xf32>
    %cst_24 = arith.constant dense<0xFF800000> : vector<64xf32>
    %34 = vector.multi_reduction <maximumf>, %33, %cst_24 [1] : vector<64x128xf32> to vector<64xf32>
    %35 = vector.shape_cast %34 : vector<64xf32> to vector<64x1xf32>
    %36 = vector.broadcast %35 : vector<64x1xf32> to vector<64x128xf32>
    %37 = arith.subf %33, %36 : vector<64x128xf32>
    %38 = math.exp %37 : vector<64x128xf32>
    %cst_25 = arith.constant dense<0.000000e+00> : vector<64xf32>
    %39 = vector.multi_reduction <add>, %38, %cst_25 [1] : vector<64x128xf32> to vector<64xf32>
    %40 = vector.shape_cast %39 : vector<64xf32> to vector<64x1xf32>
    %41 = tpu.reciprocal %40 {approx = true} : vector<64x1xf32> -> vector<64x1xf32>
    %42 = vector.broadcast %41 : vector<64x1xf32> to vector<64x128xf32>
    %43 = arith.mulf %38, %42 : vector<64x128xf32>
    %44 = arith.truncf %43 : vector<64x128xf32> to vector<64x128xbf16>
    %cst_26 = arith.constant dense<0.000000e+00> : vector<64x128xf32>
    %45 = tpu.matmul %44, %28, %cst_26 {dimension_numbers = #tpu.dot_dimension_numbers<[1], [0], [0], [1], [0, 0, 1, 1], [], []>} : vector<64x128xbf16>, vector<128x128xbf16>, vector<64x128xf32> -> vector<64x128xf32>
    %46 = arith.truncf %45 : vector<64x128xf32> to vector<64x128xbf16>
    %c0_27 = arith.constant 0 : index
    %c0_28 = arith.constant 0 : index
    %47 = vector.load %arg16[%c0_27, %c0_28] : memref<64x384xbf16, #tpu.memory_space<vmem>>, vector<64x128xbf16>
    tpu.vector_store %arg16[%c0_27, %c0_28], %46 {strides = array<i32>} : memref<64x384xbf16, #tpu.memory_space<vmem>>, vector<64x128xbf16>,
    %48 = vector.extract_strided_slice %25 {offsets = [0, 128], sizes = [64, 128], strides = [1, 1]} : vector<64x384xbf16> to vector<64x128xbf16>
    %cst_29 = arith.constant dense<0.000000e+00> : vector<64x128xf32>
    %49 = tpu.matmul %48, %27, %cst_29 {dimension_numbers = #tpu.dot_dimension_numbers<[1], [0], [0], [1], [0, 0, 1, 1], [], []>} : vector<64x128xbf16>, vector<128x128xbf16>, vector<64x128xf32> -> vector<64x128xf32>
    %50 = arith.addf %49, %30 : vector<64x128xf32>
    %cst_30 = arith.constant dense<0xFF800000> : vector<64xf32>
    %51 = vector.multi_reduction <maximumf>, %50, %cst_30 [1] : vector<64x128xf32> to vector<64xf32>
    %52 = vector.shape_cast %51 : vector<64xf32> to vector<64x1xf32>
    %53 = vector.broadcast %52 : vector<64x1xf32> to vector<64x128xf32>
    %54 = arith.subf %50, %53 : vector<64x128xf32>
    %55 = math.exp %54 : vector<64x128xf32>
    %cst_31 = arith.constant dense<0.000000e+00> : vector<64xf32>
    %56 = vector.multi_reduction <add>, %55, %cst_31 [1] : vector<64x128xf32> to vector<64xf32>
    %57 = vector.shape_cast %56 : vector<64xf32> to vector<64x1xf32>
    %58 = tpu.reciprocal %57 {approx = true} : vector<64x1xf32> -> vector<64x1xf32>
    %59 = vector.broadcast %58 : vector<64x1xf32> to vector<64x128xf32>
    %60 = arith.mulf %55, %59 : vector<64x128xf32>
    %61 = arith.truncf %60 : vector<64x128xf32> to vector<64x128xbf16>
    %cst_32 = arith.constant dense<0.000000e+00> : vector<64x128xf32>
    %62 = tpu.matmul %61, %28, %cst_32 {dimension_numbers = #tpu.dot_dimension_numbers<[1], [0], [0], [1], [0, 0, 1, 1], [], []>} : vector<64x128xbf16>, vector<128x128xbf16>, vector<64x128xf32> -> vector<64x128xf32>
    %63 = arith.truncf %62 : vector<64x128xf32> to vector<64x128xbf16>
    %c0_33 = arith.constant 0 : index
    %c128 = arith.constant 128 : index
    %64 = vector.load %arg16[%c0_33, %c128] : memref<64x384xbf16, #tpu.memory_space<vmem>>, vector<64x128xbf16>
    tpu.vector_store %arg16[%c0_33, %c128], %63 {strides = array<i32>} : memref<64x384xbf16, #tpu.memory_space<vmem>>, vector<64x128xbf16>,
    %65 = vector.extract_strided_slice %25 {offsets = [0, 256], sizes = [64, 128], strides = [1, 1]} : vector<64x384xbf16> to vector<64x128xbf16>
    %cst_34 = arith.constant dense<0.000000e+00> : vector<64x128xf32>
    %66 = tpu.matmul %65, %27, %cst_34 {dimension_numbers = #tpu.dot_dimension_numbers<[1], [0], [0], [1], [0, 0, 1, 1], [], []>} : vector<64x128xbf16>, vector<128x128xbf16>, vector<64x128xf32> -> vector<64x128xf32>
    %67 = arith.addf %66, %30 : vector<64x128xf32>
    %cst_35 = arith.constant dense<0xFF800000> : vector<64xf32>
    %68 = vector.multi_reduction <maximumf>, %67, %cst_35 [1] : vector<64x128xf32> to vector<64xf32>
    %69 = vector.shape_cast %68 : vector<64xf32> to vector<64x1xf32>
    %70 = vector.broadcast %69 : vector<64x1xf32> to vector<64x128xf32>
    %71 = arith.subf %67, %70 : vector<64x128xf32>
    %72 = math.exp %71 : vector<64x128xf32>
    %cst_36 = arith.constant dense<0.000000e+00> : vector<64xf32>
    %73 = vector.multi_reduction <add>, %72, %cst_36 [1] : vector<64x128xf32> to vector<64xf32>
    %74 = vector.shape_cast %73 : vector<64xf32> to vector<64x1xf32>
    %75 = tpu.reciprocal %74 {approx = true} : vector<64x1xf32> -> vector<64x1xf32>
    %76 = vector.broadcast %75 : vector<64x1xf32> to vector<64x128xf32>
    %77 = arith.mulf %72, %76 : vector<64x128xf32>
    %78 = arith.truncf %77 : vector<64x128xf32> to vector<64x128xbf16>
    %cst_37 = arith.constant dense<0.000000e+00> : vector<64x128xf32>
    %79 = tpu.matmul %78, %28, %cst_37 {dimension_numbers = #tpu.dot_dimension_numbers<[1], [0], [0], [1], [0, 0, 1, 1], [], []>} : vector<64x128xbf16>, vector<128x128xbf16>, vector<64x128xf32> -> vector<64x128xf32>
    %80 = arith.truncf %79 : vector<64x128xf32> to vector<64x128xbf16>
    %c0_38 = arith.constant 0 : index
    %c256 = arith.constant 256 : index
    %81 = vector.load %arg16[%c0_38, %c256] : memref<64x384xbf16, #tpu.memory_space<vmem>>, vector<64x128xbf16>
    tpu.vector_store %arg16[%c0_38, %c256], %80 {strides = array<i32>} : memref<64x384xbf16, #tpu.memory_space<vmem>>, vector<64x128xbf16>,
    %c0_39 = arith.constant 0 : index
    %c0_40 = arith.constant 0 : index
    %82 = vector.load %arg16[%c0_39, %c0_40] : memref<64x384xbf16, #tpu.memory_space<vmem>>, vector<64x384xbf16>
    %c0_41 = arith.constant 0 : index
    %c0_42 = arith.constant 0 : index
    %83 = vector.load %arg11[%c0_41, %c0_42] : memref<384x384xbf16, #tpu.memory_space<vmem>>, vector<384x384xbf16>
    %cst_43 = arith.constant dense<0.000000e+00> : vector<64x384xf32>
    %84 = tpu.matmul %82, %83, %cst_43 {dimension_numbers = #tpu.dot_dimension_numbers<[1], [0], [0], [1], [0, 0, 1, 1], [], []>} : vector<64x384xbf16>, vector<384x384xbf16>, vector<64x384xf32> -> vector<64x384xf32>
    %c0_44 = arith.constant 0 : index
    %c0_45 = arith.constant 0 : index
    %85 = vector.load %arg12[%c0_44, %c0_45] : memref<1x384xf32, #tpu.memory_space<vmem>>, vector<1x384xf32>
    %86 = vector.broadcast %85 : vector<1x384xf32> to vector<64x384xf32>
    %87 = arith.addf %84, %86 : vector<64x384xf32>
    %88 = arith.addf %87, %1 : vector<64x384xf32>
    %cst_46 = arith.constant dense<0.000000e+00> : vector<64xf32>
    %89 = vector.multi_reduction <add>, %88, %cst_46 [1] : vector<64x384xf32> to vector<64xf32>
    %90 = vector.shape_cast %89 : vector<64xf32> to vector<64x1xf32>
    %cst_47 = arith.constant 3.840000e+02 : f32
    %91 = vector.broadcast %cst_47 : f32 to vector<64x1xf32>
    %92 = arith.divf %90, %91 : vector<64x1xf32>
    %93 = vector.broadcast %92 : vector<64x1xf32> to vector<64x384xf32>
    %94 = arith.subf %88, %93 : vector<64x384xf32>
    %95 = arith.mulf %94, %94 : vector<64x384xf32>
    %cst_48 = arith.constant dense<0.000000e+00> : vector<64xf32>
    %96 = vector.multi_reduction <add>, %95, %cst_48 [1] : vector<64x384xf32> to vector<64xf32>
    %97 = vector.shape_cast %96 : vector<64xf32> to vector<64x1xf32>
    %cst_49 = arith.constant 3.840000e+02 : f32
    %98 = vector.broadcast %cst_49 : f32 to vector<64x1xf32>
    %99 = arith.divf %97, %98 : vector<64x1xf32>
    %100 = vector.broadcast %92 : vector<64x1xf32> to vector<64x384xf32>
    %101 = arith.subf %88, %100 : vector<64x384xf32>
    %cst_50 = arith.constant 9.99999996E-13 : f32
    %102 = vector.broadcast %cst_50 : f32 to vector<64x1xf32>
    %103 = arith.addf %99, %102 : vector<64x1xf32>
    %104 = math.rsqrt %103 : vector<64x1xf32>
    %105 = vector.broadcast %104 : vector<64x1xf32> to vector<64x384xf32>
    %106 = arith.mulf %101, %105 : vector<64x384xf32>
    %c0_51 = arith.constant 0 : index
    %c0_52 = arith.constant 0 : index
    %107 = vector.load %arg13[%c0_51, %c0_52] : memref<1x384xf32, #tpu.memory_space<vmem>>, vector<1x384xf32>
    %108 = vector.broadcast %107 : vector<1x384xf32> to vector<64x384xf32>
    %109 = arith.mulf %106, %108 : vector<64x384xf32>
    %c0_53 = arith.constant 0 : index
    %c0_54 = arith.constant 0 : index
    %110 = vector.load %arg14[%c0_53, %c0_54] : memref<1x384xf32, #tpu.memory_space<vmem>>, vector<1x384xf32>
    %111 = vector.broadcast %110 : vector<1x384xf32> to vector<64x384xf32>
    %112 = arith.addf %109, %111 : vector<64x384xf32>
    %c0_55 = arith.constant 0 : index
    %c0_56 = arith.constant 0 : index
    %c0_57 = arith.constant 0 : index
    %113 = vector.load %arg15[%c0_55, %c0_56, %c0_57] : memref<1x64x384xf32, #tpu.memory_space<vmem>>, vector<1x64x384xf32>
    %114 = vector.shape_cast %113 : vector<1x64x384xf32> to vector<64x384xf32>
    %115 = vector.shape_cast %112 : vector<64x384xf32> to vector<1x64x384xf32>
    tpu.vector_store %arg15[%c0_55, %c0_56, %c0_57], %115 {strides = array<i32>} : memref<1x64x384xf32, #tpu.memory_space<vmem>>, vector<1x64x384xf32>,
    return
  }
  func.func @transform_0(%arg0: i32, %arg1: i32) -> (i32, i32, i32) {
    %c0_i32 = arith.constant 0 : i32
    %c0_i32_0 = arith.constant 0 : i32
    return %arg0, %arg1, %c0_i32 : i32, i32, i32
  }
  func.func @transform_1(%arg0: i32, %arg1: i32) -> (i32, i32, i32) {
    %c0_i32 = arith.constant 0 : i32
    %c0_i32_0 = arith.constant 0 : i32
    %c0_i32_1 = arith.constant 0 : i32
    return %arg0, %c0_i32, %c0_i32_0 : i32, i32, i32
  }
  func.func @transform_2(%arg0: i32, %arg1: i32) -> (i32, i32, i32) {
    %c0_i32 = arith.constant 0 : i32
    %c0_i32_0 = arith.constant 0 : i32
    %c0_i32_1 = arith.constant 0 : i32
    return %arg0, %c0_i32, %c0_i32_0 : i32, i32, i32
  }
  func.func @transform_3(%arg0: i32, %arg1: i32) -> (i32, i32) {
    %c0_i32 = arith.constant 0 : i32
    %c0_i32_0 = arith.constant 0 : i32
    %c0_i32_1 = arith.constant 0 : i32
    return %c0_i32, %c0_i32_0 : i32, i32
  }
  func.func @transform_4(%arg0: i32, %arg1: i32) -> (i32, i32) {
    %c0_i32 = arith.constant 0 : i32
    %c0_i32_0 = arith.constant 0 : i32
    %c0_i32_1 = arith.constant 0 : i32
    return %c0_i32, %c0_i32_0 : i32, i32
  }
  func.func @transform_5(%arg0: i32, %arg1: i32) -> (i32, i32) {
    %c0_i32 = arith.constant 0 : i32
    %c0_i32_0 = arith.constant 0 : i32
    %c0_i32_1 = arith.constant 0 : i32
    return %c0_i32, %c0_i32_0 : i32, i32
  }
  func.func @transform_6(%arg0: i32, %arg1: i32) -> (i32, i32) {
    %c0_i32 = arith.constant 0 : i32
    %c0_i32_0 = arith.constant 0 : i32
    %c0_i32_1 = arith.constant 0 : i32
    return %c0_i32, %c0_i32_0 : i32, i32
  }
  func.func @transform_7(%arg0: i32, %arg1: i32) -> (i32, i32) {
    %c0_i32 = arith.constant 0 : i32
    %c0_i32_0 = arith.constant 0 : i32
    %c0_i32_1 = arith.constant 0 : i32
    return %c0_i32, %c0_i32_0 : i32, i32
  }
  func.func @transform_8(%arg0: i32, %arg1: i32) -> (i32, i32) {
    %c0_i32 = arith.constant 0 : i32
    %c0_i32_0 = arith.constant 0 : i32
    %c0_i32_1 = arith.constant 0 : i32
    return %c0_i32, %c0_i32_0 : i32, i32
  }
  func.func @transform_9(%arg0: i32, %arg1: i32) -> (i32, i32) {
    %c0_i32 = arith.constant 0 : i32
    %c0_i32_0 = arith.constant 0 : i32
    %c0_i32_1 = arith.constant 0 : i32
    return %c0_i32, %c0_i32_0 : i32, i32
  }
  func.func @transform_10(%arg0: i32, %arg1: i32) -> (i32, i32) {
    %c0_i32 = arith.constant 0 : i32
    %c0_i32_0 = arith.constant 0 : i32
    %c0_i32_1 = arith.constant 0 : i32
    return %c0_i32, %c0_i32_0 : i32, i32
  }
  func.func @transform_11(%arg0: i32, %arg1: i32) -> (i32, i32) {
    %c0_i32 = arith.constant 0 : i32
    %c0_i32_0 = arith.constant 0 : i32
    %c0_i32_1 = arith.constant 0 : i32
    return %c0_i32, %c0_i32_0 : i32, i32
  }
  func.func @transform_12(%arg0: i32, %arg1: i32) -> (i32, i32) {
    %c0_i32 = arith.constant 0 : i32
    %c0_i32_0 = arith.constant 0 : i32
    %c0_i32_1 = arith.constant 0 : i32
    return %c0_i32, %c0_i32_0 : i32, i32
  }
  func.func @transform_13(%arg0: i32, %arg1: i32) -> (i32, i32, i32) {
    %c0_i32 = arith.constant 0 : i32
    %c0_i32_0 = arith.constant 0 : i32
    return %arg0, %arg1, %c0_i32 : i32, i32, i32
  }
}

</mosaic_0001>

<llo_original>
// kernel: tpu_custom_call.1
$region0: #{tpu_custom_call.1}
  #allocation0 [shape = 'u32[]', space=smem, size = 0x4, offset = 0x4, fixed_abs, tag = 'smem constant byte address 0x4 - core index']
  #allocation1 [shape = 'u32[144,128]{1,0:T(1,128)}', space=vmem, size = 0x12000, scoped, tag = 'internal scratch']
  #allocation2 [shape = 'bf16[64,384]{1,0:T(8,128)(2,1)}', space=vmem, size = 0xc000, scoped, tag = 'scratch operand']
  %s0 = inlined_call_operand.hbm [shape: f32[2,128,384], index: 0, kind: input, shape index: {}]
  %s1 = inlined_call_operand.hbm [shape: f32[2,128,384], index: 1, kind: input, shape index: {}]
  %s2 = inlined_call_operand.hbm [shape: f32[2,1,128], index: 2, kind: input, shape index: {}]
  %s3 = inlined_call_operand.hbm [shape: bf16[384,384], index: 3, kind: input, shape index: {}]
  %s4 = inlined_call_operand.vmem [shape: f32[1,384], index: 4, kind: input, shape index: {}]
  %s5 = inlined_call_operand.hbm [shape: bf16[384,128], index: 5, kind: input, shape index: {}]
  %s6 = inlined_call_operand.hbm [shape: f32[1,128], index: 6, kind: input, shape index: {}]
  %s7 = inlined_call_operand.hbm [shape: bf16[384,128], index: 7, kind: input, shape index: {}]
  %s8 = inlined_call_operand.vmem [shape: f32[1,128], index: 8, kind: input, shape index: {}]
  %s9 = inlined_call_operand.hbm [shape: bf16[384,384], index: 9, kind: input, shape index: {}]
  %s10 = inlined_call_operand.vmem [shape: f32[1,384], index: 10, kind: input, shape index: {}]
  %s11 = inlined_call_operand.vmem [shape: f32[1,384], index: 11, kind: input, shape index: {}]
  %s12 = inlined_call_operand.vmem [shape: f32[1,384], index: 12, kind: input, shape index: {}]
  %s13 = inlined_call_operand.hbm [shape: f32[2,128,384], index: 13, kind: output, shape index: {}]
  %s14 = sld [smem:[#allocation0]]
  $region117: #{tpu_custom_call.1} parent=0
    _
  %s16 = ssub.s32 1, %s14
  %s17 = scalar_select 0, %s16, %s14
  $region1: #{tpu_custom_call.1} parent=0
    #allocation3 [shape = 'u8[196608]{0}', space=vmem, size = 0x30000, scoped, tag = 'input window, operand 0']
    #allocation4 [shape = 's32[2]{0}', space=sflag, size = 0x8, scoped, tag = 'scoped memory for tpu_custom_call.1']
    #allocation5 [shape = 's32[2]{0}', space=sflag, size = 0x8, scoped, tag = 'scoped memory for tpu_custom_call.1']
    #allocation6 [shape = 'u8[393216]{0}', space=vmem, size = 0x60000, scoped, tag = 'input window, operand 1']
    #allocation7 [shape = 's32[2]{0}', space=sflag, size = 0x8, scoped, tag = 'scoped memory for tpu_custom_call.1']
    #allocation8 [shape = 'u8[1024]{0}', space=vmem, size = 0x400, scoped, tag = 'input window, operand 2']
    #allocation9 [shape = 'u8[294912]{0}', space=vmem, size = 0x48000, scoped, tag = 'input window, operand 3, single buffered']
    #allocation10 [shape = 's32[1]{0}', space=sflag, size = 0x4, scoped, tag = 'scoped memory for tpu_custom_call.1']
    #allocation11 [shape = 'u8[98304]{0}', space=vmem, size = 0x18000, scoped, tag = 'input window, operand 5, single buffered']
    #allocation12 [shape = 'u8[512]{0}', space=vmem, size = 0x400, scoped, tag = 'input window, operand 6, single buffered']
    #allocation13 [shape = 's32[1]{0}', space=sflag, size = 0x4, scoped, tag = 'scoped memory for tpu_custom_call.1']
    #allocation14 [shape = 'u8[98304]{0}', space=vmem, size = 0x18000, scoped, tag = 'input window, operand 7, single buffered']
    #allocation15 [shape = 'u8[294912]{0}', space=vmem, size = 0x48000, scoped, tag = 'input window, operand 9, single buffered']
    #allocation16 [shape = 's32[1]{0}', space=sflag, size = 0x4, scoped, tag = 'scoped memory for tpu_custom_call.1']
    #allocation17 [shape = 'u8[196608]{0}', space=vmem, size = 0x30000, scoped, tag = 'output window, operand 0']
    %18 = vsyncpa [#allocation4], 0
    %s19 = scalar_lea.sflag [#allocation4], 1
    %20 = vsyncpa %s19, 0
    %21 = vsyncpa [#allocation7], 0
    %s22 = scalar_lea.sflag [#allocation7], 1
    %23 = vsyncpa %s22, 0
    %24 = vsyncpa [#allocation10], 0
    %25 = vsyncpa [#allocation13], 0
    %26 = vsyncpa [#allocation16], 0
    %27 = vsyncpa [#allocation5], 0
    %s28 = scalar_lea.sflag [#allocation5], 1
    %29 = vsyncpa %s28, 0
    loop: start=0, step=1, limit=6
    $region2: #{tpu_custom_call.1} parent=1 // loop_pre_header
      _
    $region3: #{tpu_custom_call.1} parent=1 // loop_header
      %s31 = sphi 0, %s35
      %p32 = scmp.ge.s32.totalorder %s31, 6
      %s38 = sphi 0, %s50
      %s39 = sphi 0, %s46
      %s40 = sphi 0, %s38
      %s41 = sphi 0, %s39
      %s42 = sphi 0, %s40
      %s43 = sphi 0, %s41
      %s55 = sphi 0, %s57
      %s58 = sphi 0, %s55
      %s59 = sphi 0, %s58
      %s75 = sphi 0, %s59
      %s81 = sphi 0, %s83
      %s84 = sphi 0, %s81
      %s85 = sphi 0, %s84
      %s101 = sphi 0, %s85
      %s107 = sphi 0, %s109
      %s110 = sphi 0, %s107
      %s111 = sphi 0, %s110
      %s127 = sphi 0, %s111
      %s131 = sphi 0, %s131
      %s133 = sphi 0, %s131
      %s134 = sphi 0, %s133
      %s148 = sphi 0, %s134
      %s152 = sphi 0, %s152
      %s154 = sphi 0, %s152
      %s155 = sphi 0, %s154
      %s169 = sphi 0, %s155
      %s173 = sphi 0, %s173
      %s175 = sphi 0, %s173
      %s176 = sphi 0, %s175
      %s190 = sphi 0, %s176
      %s194 = sphi 0, %s194
      %s196 = sphi 0, %s194
      %s197 = sphi 0, %s196
      %s211 = sphi 0, %s197
      %s215 = sphi 0, %s215
      %s217 = sphi 0, %s215
      %s218 = sphi 0, %s217
      %s232 = sphi 0, %s218
      %s236 = sphi 0, %s236
      %s238 = sphi 0, %s236
      %s239 = sphi 0, %s238
      %s253 = sphi 0, %s239
      %s257 = sphi 0, %s257
      %s259 = sphi 0, %s257
      %s260 = sphi 0, %s259
      %s274 = sphi 0, %s260
      %s278 = sphi 0, %s278
      %s280 = sphi 0, %s278
      %s281 = sphi 0, %s280
      %s295 = sphi 0, %s281
      %s299 = sphi 0, %s299
      %s301 = sphi 0, %s299
      %s302 = sphi 0, %s301
      %s316 = sphi 0, %s302
      %s320 = sphi 0, %s320
      %s322 = sphi 0, %s320
      %s323 = sphi 0, %s322
      %s337 = sphi 0, %s323
      %s345 = sphi 0, %s347
      %s348 = sphi 0, %s345
      %s349 = sphi 0, %s348
      %s365 = sphi 0, %s349
    $region4: #{tpu_custom_call.1} parent=1 // loop_header_branch
      %34 = sbr.rel (%p32) target = $region8
    $region5: #{tpu_custom_call.1} parent=1 // loop_body
      %s36 = ssub.s32 %s31, 1
      %s37 = ssub.s32 %s31, 2
      %s44 = sadd.s32 1, %s39
      %p45 = scmp.ge.s32.totalorder %s44, 2
      %s46 = scalar_select %p45, 0, %s44
      %s47 = sadd.s32 1, %s38
      %s48 = scalar_select %p45, %s47, %s38
      %p49 = scmp.ge.s32.totalorder %s48, 2
      %s50 = scalar_select %p49, 0, %s48
      %s51 = ssub.s32 %s38, %s50
      %s52 = ssub.s32 %s39, %s46
      %s53 = sor.u32 %s51, %s52
      %p54 = scmp.eq.s32.totalorder %s53, 0
      %s56 = sadd.s32 %s55, 1
      %s57 = scalar_select %p54, %s55, %s56
      %p60 = pneg %p54
      %p61 = scmp.eq.s32.totalorder %s31, 3
      %p62 = por %p60, %p61
      %p63 = scmp.ne.s32.totalorder %s55, %s58
      %p64 = scmp.eq.s32.totalorder %s31, 0
      %p65 = por %p63, %p64
      %p66 = scmp.ne.s32.totalorder %s55, %s58
      %p67 = scmp.eq.s32.totalorder %s36, 3
      %p68 = por %p66, %p67
      %p69 = scmp.ne.s32.totalorder %s58, %s59
      %p70 = scmp.eq.s32.totalorder %s36, 0
      %p71 = por %p69, %p70
      %p72 = scmp.ne.s32.totalorder %s58, %s59
      %p73 = scmp.eq.s32.totalorder %s37, 3
      %p74 = por %p72, %p73
      %p76 = scmp.ne.s32.totalorder %s59, %s75
      %p77 = scmp.eq.s32.totalorder %s37, 0
      %p78 = por %p76, %p77
      %s79 = ssub.s32 %s38, %s50
      %p80 = scmp.eq.s32.totalorder %s79, 0
      %s82 = sadd.s32 %s81, 1
      %s83 = scalar_select %p80, %s81, %s82
      %p86 = pneg %p80
      %p87 = scmp.eq.s32.totalorder %s31, 3
      %p88 = por %p86, %p87
      %p89 = scmp.ne.s32.totalorder %s81, %s84
      %p90 = scmp.eq.s32.totalorder %s31, 0
      %p91 = por %p89, %p90
      %p92 = scmp.ne.s32.totalorder %s81, %s84
      %p93 = scmp.eq.s32.totalorder %s36, 3
      %p94 = por %p92, %p93
      %p95 = scmp.ne.s32.totalorder %s84, %s85
      %p96 = scmp.eq.s32.totalorder %s36, 0
      %p97 = por %p95, %p96
      %p98 = scmp.ne.s32.totalorder %s84, %s85
      %p99 = scmp.eq.s32.totalorder %s37, 3
      %p100 = por %p98, %p99
      %p102 = scmp.ne.s32.totalorder %s85, %s101
      %p103 = scmp.eq.s32.totalorder %s37, 0
      %p104 = por %p102, %p103
      %s105 = ssub.s32 %s38, %s50
      %p106 = scmp.eq.s32.totalorder %s105, 0
      %s108 = sadd.s32 %s107, 1
      %s109 = scalar_select %p106, %s107, %s108
      %p112 = pneg %p106
      %p113 = scmp.eq.s32.totalorder %s31, 3
      %p114 = por %p112, %p113
      %p115 = scmp.ne.s32.totalorder %s107, %s110
      %p116 = scmp.eq.s32.totalorder %s31, 0
      %p117 = por %p115, %p116
      %p118 = scmp.ne.s32.totalorder %s107, %s110
      %p119 = scmp.eq.s32.totalorder %s36, 3
      %p120 = por %p118, %p119
      %p121 = scmp.ne.s32.totalorder %s110, %s111
      %p122 = scmp.eq.s32.totalorder %s36, 0
      %p123 = por %p121, %p122
      %p124 = scmp.ne.s32.totalorder %s110, %s111
      %p125 = scmp.eq.s32.totalorder %s37, 3
      %p126 = por %p124, %p125
      %p128 = scmp.ne.s32.totalorder %s111, %s127
      %p129 = scmp.eq.s32.totalorder %s37, 0
      %p130 = por %p128, %p129
      %s132 = sadd.s32 %s131, 1
      %p135 = scmp.eq.s32.totalorder %s31, 3
      %p136 = scmp.ne.s32.totalorder %s131, %s133
      %p137 = scmp.eq.s32.totalorder %s31, 0
      %p138 = por %p136, %p137
      %p139 = scmp.ne.s32.totalorder %s131, %s133
      %p140 = scmp.eq.s32.totalorder %s36, 3
      %p141 = por %p139, %p140
      %p142 = scmp.ne.s32.totalorder %s133, %s134
      %p143 = scmp.eq.s32.totalorder %s36, 0
      %p144 = por %p142, %p143
      %p145 = scmp.ne.s32.totalorder %s133, %s134
      %p146 = scmp.eq.s32.totalorder %s37, 3
      %p147 = por %p145, %p146
      %p149 = scmp.ne.s32.totalorder %s134, %s148
      %p150 = scmp.eq.s32.totalorder %s37, 0
      %p151 = por %p149, %p150
      %s153 = sadd.s32 %s152, 1
      %p156 = scmp.eq.s32.totalorder %s31, 3
      %p157 = scmp.ne.s32.totalorder %s152, %s154
      %p158 = scmp.eq.s32.totalorder %s31, 0
      %p159 = por %p157, %p158
      %p160 = scmp.ne.s32.totalorder %s152, %s154
      %p161 = scmp.eq.s32.totalorder %s36, 3
      %p162 = por %p160, %p161
      %p163 = scmp.ne.s32.totalorder %s154, %s155
      %p164 = scmp.eq.s32.totalorder %s36, 0
      %p165 = por %p163, %p164
      %p166 = scmp.ne.s32.totalorder %s154, %s155
      %p167 = scmp.eq.s32.totalorder %s37, 3
      %p168 = por %p166, %p167
      %p170 = scmp.ne.s32.totalorder %s155, %s169
      %p171 = scmp.eq.s32.totalorder %s37, 0
      %p172 = por %p170, %p171
      %s174 = sadd.s32 %s173, 1
      %p177 = scmp.eq.s32.totalorder %s31, 3
      %p178 = scmp.ne.s32.totalorder %s173, %s175
      %p179 = scmp.eq.s32.totalorder %s31, 0
      %p180 = por %p178, %p179
      %p181 = scmp.ne.s32.totalorder %s173, %s175
      %p182 = scmp.eq.s32.totalorder %s36, 3
      %p183 = por %p181, %p182
      %p184 = scmp.ne.s32.totalorder %s175, %s176
      %p185 = scmp.eq.s32.totalorder %s36, 0
      %p186 = por %p184, %p185
      %p187 = scmp.ne.s32.totalorder %s175, %s176
      %p188 = scmp.eq.s32.totalorder %s37, 3
      %p189 = por %p187, %p188
      %p191 = scmp.ne.s32.totalorder %s176, %s190
      %p192 = scmp.eq.s32.totalorder %s37, 0
      %p193 = por %p191, %p192
      %s195 = sadd.s32 %s194, 1
      %p198 = scmp.eq.s32.totalorder %s31, 3
      %p199 = scmp.ne.s32.totalorder %s194, %s196
      %p200 = scmp.eq.s32.totalorder %s31, 0
      %p201 = por %p199, %p200
      %p202 = scmp.ne.s32.totalorder %s194, %s196
      %p203 = scmp.eq.s32.totalorder %s36, 3
      %p204 = por %p202, %p203
      %p205 = scmp.ne.s32.totalorder %s196, %s197
      %p206 = scmp.eq.s32.totalorder %s36, 0
      %p207 = por %p205, %p206
      %p208 = scmp.ne.s32.totalorder %s196, %s197
      %p209 = scmp.eq.s32.totalorder %s37, 3
      %p210 = por %p208, %p209
      %p212 = scmp.ne.s32.totalorder %s197, %s211
      %p213 = scmp.eq.s32.totalorder %s37, 0
      %p214 = por %p212, %p213
      %s216 = sadd.s32 %s215, 1
      %p219 = scmp.eq.s32.totalorder %s31, 3
      %p220 = scmp.ne.s32.totalorder %s215, %s217
      %p221 = scmp.eq.s32.totalorder %s31, 0
      %p222 = por %p220, %p221
      %p223 = scmp.ne.s32.totalorder %s215, %s217
      %p224 = scmp.eq.s32.totalorder %s36, 3
      %p225 = por %p223, %p224
      %p226 = scmp.ne.s32.totalorder %s217, %s218
      %p227 = scmp.eq.s32.totalorder %s36, 0
      %p228 = por %p226, %p227
      %p229 = scmp.ne.s32.totalorder %s217, %s218
      %p230 = scmp.eq.s32.totalorder %s37, 3
      %p231 = por %p229, %p230
      %p233 = scmp.ne.s32.totalorder %s218, %s232
      %p234 = scmp.eq.s32.totalorder %s37, 0
      %p235 = por %p233, %p234
      %s237 = sadd.s32 %s236, 1
      %p240 = scmp.eq.s32.totalorder %s31, 3
      %p241 = scmp.ne.s32.totalorder %s236, %s238
      %p242 = scmp.eq.s32.totalorder %s31, 0
      %p243 = por %p241, %p242
      %p244 = scmp.ne.s32.totalorder %s236, %s238
      %p245 = scmp.eq.s32.totalorder %s36, 3
      %p246 = por %p244, %p245
      %p247 = scmp.ne.s32.totalorder %s238, %s239
      %p248 = scmp.eq.s32.totalorder %s36, 0
      %p249 = por %p247, %p248
      %p250 = scmp.ne.s32.totalorder %s238, %s239
      %p251 = scmp.eq.s32.totalorder %s37, 3
      %p252 = por %p250, %p251
      %p254 = scmp.ne.s32.totalorder %s239, %s253
      %p255 = scmp.eq.s32.totalorder %s37, 0
      %p256 = por %p254, %p255
      %s258 = sadd.s32 %s257, 1
      %p261 = scmp.eq.s32.totalorder %s31, 3
      %p262 = scmp.ne.s32.totalorder %s257, %s259
      %p263 = scmp.eq.s32.totalorder %s31, 0
      %p264 = por %p262, %p263
      %p265 = scmp.ne.s32.totalorder %s257, %s259
      %p266 = scmp.eq.s32.totalorder %s36, 3
      %p267 = por %p265, %p266
      %p268 = scmp.ne.s32.totalorder %s259, %s260
      %p269 = scmp.eq.s32.totalorder %s36, 0
      %p270 = por %p268, %p269
      %p271 = scmp.ne.s32.totalorder %s259, %s260
      %p272 = scmp.eq.s32.totalorder %s37, 3
      %p273 = por %p271, %p272
      %p275 = scmp.ne.s32.totalorder %s260, %s274
      %p276 = scmp.eq.s32.totalorder %s37, 0
      %p277 = por %p275, %p276
      %s279 = sadd.s32 %s278, 1
      %p282 = scmp.eq.s32.totalorder %s31, 3
      %p283 = scmp.ne.s32.totalorder %s278, %s280
      %p284 = scmp.eq.s32.totalorder %s31, 0
      %p285 = por %p283, %p284
      %p286 = scmp.ne.s32.totalorder %s278, %s280
      %p287 = scmp.eq.s32.totalorder %s36, 3
      %p288 = por %p286, %p287
      %p289 = scmp.ne.s32.totalorder %s280, %s281
      %p290 = scmp.eq.s32.totalorder %s36, 0
      %p291 = por %p289, %p290
      %p292 = scmp.ne.s32.totalorder %s280, %s281
      %p293 = scmp.eq.s32.totalorder %s37, 3
      %p294 = por %p292, %p293
      %p296 = scmp.ne.s32.totalorder %s281, %s295
      %p297 = scmp.eq.s32.totalorder %s37, 0
      %p298 = por %p296, %p297
      %s300 = sadd.s32 %s299, 1
      %p303 = scmp.eq.s32.totalorder %s31, 3
      %p304 = scmp.ne.s32.totalorder %s299, %s301
      %p305 = scmp.eq.s32.totalorder %s31, 0
      %p306 = por %p304, %p305
      %p307 = scmp.ne.s32.totalorder %s299, %s301
      %p308 = scmp.eq.s32.totalorder %s36, 3
      %p309 = por %p307, %p308
      %p310 = scmp.ne.s32.totalorder %s301, %s302
      %p311 = scmp.eq.s32.totalorder %s36, 0
      %p312 = por %p310, %p311
      %p313 = scmp.ne.s32.totalorder %s301, %s302
      %p314 = scmp.eq.s32.totalorder %s37, 3
      %p315 = por %p313, %p314
      %p317 = scmp.ne.s32.totalorder %s302, %s316
      %p318 = scmp.eq.s32.totalorder %s37, 0
      %p319 = por %p317, %p318
      %s321 = sadd.s32 %s320, 1
      %p324 = scmp.eq.s32.totalorder %s31, 3
      %p325 = scmp.ne.s32.totalorder %s320, %s322
      %p326 = scmp.eq.s32.totalorder %s31, 0
      %p327 = por %p325, %p326
      %p328 = scmp.ne.s32.totalorder %s320, %s322
      %p329 = scmp.eq.s32.totalorder %s36, 3
      %p330 = por %p328, %p329
      %p331 = scmp.ne.s32.totalorder %s322, %s323
      %p332 = scmp.eq.s32.totalorder %s36, 0
      %p333 = por %p331, %p332
      %p334 = scmp.ne.s32.totalorder %s322, %s323
      %p335 = scmp.eq.s32.totalorder %s37, 3
      %p336 = por %p334, %p335
      %p338 = scmp.ne.s32.totalorder %s323, %s337
      %p339 = scmp.eq.s32.totalorder %s37, 0
      %p340 = por %p338, %p339
      %s341 = ssub.s32 %s38, %s50
      %s342 = ssub.s32 %s39, %s46
      %s343 = sor.u32 %s341, %s342
      %p344 = scmp.eq.s32.totalorder %s343, 0
      %s346 = sadd.s32 %s345, 1
      %s347 = scalar_select %p344, %s345, %s346
      %p350 = pneg %p344
      %p351 = scmp.eq.s32.totalorder %s31, 3
      %p352 = por %p350, %p351
      %p353 = scmp.ne.s32.totalorder %s345, %s348
      %p354 = scmp.eq.s32.totalorder %s31, 0
      %p355 = por %p353, %p354
      %p356 = scmp.ne.s32.totalorder %s345, %s348
      %p357 = scmp.eq.s32.totalorder %s36, 3
      %p358 = por %p356, %p357
      %p359 = scmp.ne.s32.totalorder %s348, %s349
      %p360 = scmp.eq.s32.totalorder %s36, 0
      %p361 = por %p359, %p360
      %p362 = scmp.ne.s32.totalorder %s348, %s349
      %p363 = scmp.eq.s32.totalorder %s37, 3
      %p364 = por %p362, %p363
      %p366 = scmp.ne.s32.totalorder %s349, %s365
      %p367 = scmp.eq.s32.totalorder %s37, 0
      %p368 = por %p366, %p367
      %p369 = scmp.le.s32.totalorder 1, %s31
      %p370 = scmp.lt.s32.totalorder %s31, 5
      %p371 = pnand %p369, %p370
      %p372 = pneg %p371
      // Predicated region
      $region9: #{tpu_custom_call.1} parent=5 // pred_check
        _
      $region10: #{tpu_custom_call.1} parent=5 // pred_check_branch
        %374 = sbr.rel (%p371) target = $region12
      $region11: #{tpu_custom_call.1} parent=5 // pred_region
        %s375 = ssub.s32 %s31, 1
        // Predicated region
        $region13: #{tpu_custom_call.1} parent=11 // pred_check
          %p376 = pneg %p144
        $region14: #{tpu_custom_call.1} parent=11 // pred_check_branch
          %378 = sbr.rel (%p376) target = $region16
        $region15: #{tpu_custom_call.1} parent=11 // pred_region
          %s380 = ssub.s32 9216, 9216
          %381 = vsyncadd [#allocation10], %s380
          %s382 = sshll.u32 [#allocation9], 4
          %s383 = int_to_ptr.vmem [resolvable:$true] %s382
          %388 = dma.hbm_to_vmem [thread:$0]  %s3, 9216, %s383, [#allocation10], 192, 192, 12
        $region16: #{tpu_custom_call.1} parent=11 // pred_fallthru
          _
        // Predicated region
        $region17: #{tpu_custom_call.1} parent=11 // pred_check
          %p389 = pneg %p165
        $region18: #{tpu_custom_call.1} parent=11 // pred_check_branch
          %391 = sbr.rel (%p389) target = $region20
        $region19: #{tpu_custom_call.1} parent=11 // pred_region
          _
        $region20: #{tpu_custom_call.1} parent=11 // pred_fallthru
          _
        // Predicated region
        $region21: #{tpu_custom_call.1} parent=11 // pred_check
          %p392 = pneg %p186
        $region22: #{tpu_custom_call.1} parent=11 // pred_check_branch
          %394 = sbr.rel (%p392) target = $region24
        $region23: #{tpu_custom_call.1} parent=11 // pred_region
          %s396 = ssub.s32 3072, 3072
          %397 = vsyncadd [#allocation10], %s396
          %s398 = sshll.u32 [#allocation11], 4
          %s399 = int_to_ptr.vmem [resolvable:$true] %s398
          %404 = dma.hbm_to_vmem [thread:$0]  %s5, 3072, %s399, [#allocation10], 64, 64, 4
        $region24: #{tpu_custom_call.1} parent=11 // pred_fallthru
          _
        // Predicated region
        $region25: #{tpu_custom_call.1} parent=11 // pred_check
          %p405 = pneg %p207
        $region26: #{tpu_custom_call.1} parent=11 // pred_check_branch
          %407 = sbr.rel (%p405) target = $region28
        $region27: #{tpu_custom_call.1} parent=11 // pred_region
          %s409 = ssub.s32 16, 16
          %410 = vsyncadd [#allocation13], %s409
          %s412 = sshll.u32 [#allocation12], 4
          %s413 = int_to_ptr.vmem [resolvable:$true] %s412
          %415 = dma.hbm_to_vmem [thread:$0]  %s6, 16, %s413, [#allocation13]
        $region28: #{tpu_custom_call.1} parent=11 // pred_fallthru
          _
        // Predicated region
        $region29: #{tpu_custom_call.1} parent=11 // pred_check
          %p416 = pneg %p228
        $region30: #{tpu_custom_call.1} parent=11 // pred_check_branch
          %418 = sbr.rel (%p416) target = $region32
        $region31: #{tpu_custom_call.1} parent=11 // pred_region
          %s420 = ssub.s32 3072, 3072
          %421 = vsyncadd [#allocation13], %s420
          %s422 = sshll.u32 [#allocation14], 4
          %s423 = int_to_ptr.vmem [resolvable:$true] %s422
          %428 = dma.hbm_to_vmem [thread:$0]  %s7, 3072, %s423, [#allocation13], 64, 64, 4
        $region32: #{tpu_custom_call.1} parent=11 // pred_fallthru
          _
        // Predicated region
        $region33: #{tpu_custom_call.1} parent=11 // pred_check
          %p429 = pneg %p249
        $region34: #{tpu_custom_call.1} parent=11 // pred_check_branch
          %431 = sbr.rel (%p429) target = $region36
        $region35: #{tpu_custom_call.1} parent=11 // pred_region
          _
        $region36: #{tpu_custom_call.1} parent=11 // pred_fallthru
          _
        // Predicated region
        $region37: #{tpu_custom_call.1} parent=11 // pred_check
          %p432 = pneg %p270
        $region38: #{tpu_custom_call.1} parent=11 // pred_check_branch
          %434 = sbr.rel (%p432) target = $region40
        $region39: #{tpu_custom_call.1} parent=11 // pred_region
          %s436 = ssub.s32 9216, 9216
          %437 = vsyncadd [#allocation16], %s436
          %s438 = sshll.u32 [#allocation15], 4
          %s439 = int_to_ptr.vmem [resolvable:$true] %s438
          %444 = dma.hbm_to_vmem [thread:$0]  %s9, 9216, %s439, [#allocation16], 192, 192, 12
        $region40: #{tpu_custom_call.1} parent=11 // pred_fallthru
          _
        // Predicated region
        $region41: #{tpu_custom_call.1} parent=11 // pred_check
          %p445 = pneg %p291
        $region42: #{tpu_custom_call.1} parent=11 // pred_check_branch
          %447 = sbr.rel (%p445) target = $region44
        $region43: #{tpu_custom_call.1} parent=11 // pred_region
          _
        $region44: #{tpu_custom_call.1} parent=11 // pred_fallthru
          _
        // Predicated region
        $region45: #{tpu_custom_call.1} parent=11 // pred_check
          %p448 = pneg %p312
        $region46: #{tpu_custom_call.1} parent=11 // pred_check_branch
          %450 = sbr.rel (%p448) target = $region48
        $region47: #{tpu_custom_call.1} parent=11 // pred_region
          _
        $region48: #{tpu_custom_call.1} parent=11 // pred_fallthru
          _
        // Predicated region
        $region49: #{tpu_custom_call.1} parent=11 // pred_check
          %p451 = pneg %p333
        $region50: #{tpu_custom_call.1} parent=11 // pred_check_branch
          %453 = sbr.rel (%p451) target = $region52
        $region51: #{tpu_custom_call.1} parent=11 // pred_region
          _
        $region52: #{tpu_custom_call.1} parent=11 // pred_fallthru
          _
      $region12: #{tpu_custom_call.1} parent=5 // pred_fallthru
        _
      %p454 = scmp.lt.s32.totalorder %s31, 4
      // Predicated region
      $region53: #{tpu_custom_call.1} parent=5 // pred_check
        %p455 = pneg %p454
      $region54: #{tpu_custom_call.1} parent=5 // pred_check_branch
        %457 = sbr.rel (%p455) target = $region56
      $region55: #{tpu_custom_call.1} parent=5 // pred_region
        // Predicated region
        $region57: #{tpu_custom_call.1} parent=55 // pred_check
          %p458 = pneg %p65
        $region58: #{tpu_custom_call.1} parent=55 // pred_check_branch
          %460 = sbr.rel (%p458) target = $region60
        $region59: #{tpu_custom_call.1} parent=55 // pred_region
          %s461 = sand.u32 %s55, 1
          %s462 = scalar_lea.sflag [#allocation4], %s461
          %s463 = sand.u32 %s55, 1
          %s464 = smul.addr %s463, 192
          %s465 = scalar_lea.vmem [#allocation3], %s464
          %s466 = smul.u32 8, %s39
          %s468 = ssub.s32 3072, 3072
          %469 = vsyncadd %s462, %s468
          %s470 = smul.addr %s466, 3
          %s471 = smul.addr %s38, 48
          %s472 = sadd.s32 %s470, %s471
          %s473 = smul.addr %s472, 128
          %s474 = scalar_lea.hbm %s0, %s473
          %s475 = sshll.u32 %s465, 4
          %s476 = int_to_ptr.vmem [resolvable:$true] %s475
          %481 = dma.hbm_to_vmem [thread:$0]  %s474, 3072, %s476, %s462, 384, 384, 24
        $region60: #{tpu_custom_call.1} parent=55 // pred_fallthru
          _
        // Predicated region
        $region61: #{tpu_custom_call.1} parent=55 // pred_check
          %p482 = pneg %p91
        $region62: #{tpu_custom_call.1} parent=55 // pred_check_branch
          %484 = sbr.rel (%p482) target = $region64
        $region63: #{tpu_custom_call.1} parent=55 // pred_region
          %s485 = sand.u32 %s31, 1
          %s486 = scalar_lea.sflag [#allocation7], %s485
          %s487 = sand.u32 %s81, 1
          %s488 = smul.addr %s487, 384
          %s489 = scalar_lea.vmem [#allocation6], %s488
          %s491 = ssub.s32 6144, 6144
          %492 = vsyncadd %s486, %s491
          %s493 = smul.addr %s38, 48
          %s494 = smul.addr %s493, 128
          %s495 = scalar_lea.hbm %s1, %s494
          %s496 = sshll.u32 %s489, 4
          %s497 = int_to_ptr.vmem [resolvable:$true] %s496
          %502 = dma.hbm_to_vmem [thread:$0]  %s495, 6144, %s497, %s486, 384, 384, 24
        $region64: #{tpu_custom_call.1} parent=55 // pred_fallthru
          _
        // Predicated region
        $region65: #{tpu_custom_call.1} parent=55 // pred_check
          %p503 = pneg %p117
        $region66: #{tpu_custom_call.1} parent=55 // pred_check_branch
          %505 = sbr.rel (%p503) target = $region68
        $region67: #{tpu_custom_call.1} parent=55 // pred_region
          %s506 = sand.u32 %s31, 1
          %s507 = scalar_lea.sflag [#allocation7], %s506
          %s508 = sand.u32 %s107, 1
          %s509 = scalar_lea.vmem [#allocation8], %s508
          %s511 = ssub.s32 16, 16
          %512 = vsyncadd %s507, %s511
          %s513 = smul.addr %s38, 16
          %s514 = scalar_lea.hbm %s2, %s513
          %s516 = sshll.u32 %s509, 4
          %s517 = int_to_ptr.vmem [resolvable:$true] %s516
          %519 = dma.hbm_to_vmem [thread:$0]  %s514, 16, %s517, %s507
        $region68: #{tpu_custom_call.1} parent=55 // pred_fallthru
          _
      $region56: #{tpu_custom_call.1} parent=5 // pred_fallthru
        _
      %p520 = scmp.le.s32.totalorder 1, %s31
      %p521 = scmp.lt.s32.totalorder %s31, 5
      %p522 = pnand %p520, %p521
      %p523 = pneg %p522
      // Predicated region
      $region69: #{tpu_custom_call.1} parent=5 // pred_check
        _
      $region70: #{tpu_custom_call.1} parent=5 // pred_check_branch
        %525 = sbr.rel (%p522) target = $region72
      $region71: #{tpu_custom_call.1} parent=5 // pred_region
        %s526 = ssub.s32 %s31, 1
        %s527 = sand.u32 %s58, 1
        %s528 = scalar_lea.sflag [#allocation4], %s527
        %s529 = sand.u32 %s58, 1
        %s530 = smul.addr %s529, 192
        %s531 = scalar_lea.vmem [#allocation3], %s530
        // Predicated region
        $region73: #{tpu_custom_call.1} parent=71 // pred_check
          %p532 = pneg %p71
        $region74: #{tpu_custom_call.1} parent=71 // pred_check_branch
          %534 = sbr.rel (%p532) target = $region76
        $region75: #{tpu_custom_call.1} parent=71 // pred_region
          %535 = dma.done %s528, 3072
        $region76: #{tpu_custom_call.1} parent=71 // pred_fallthru
          _
        %s536 = sand.u32 %s36, 1
        %s537 = scalar_lea.sflag [#allocation7], %s536
        %s538 = sand.u32 %s84, 1
        %s539 = smul.addr %s538, 384
        %s540 = scalar_lea.vmem [#allocation6], %s539
        // Predicated region
        $region77: #{tpu_custom_call.1} parent=71 // pred_check
          %p541 = pneg %p97
        $region78: #{tpu_custom_call.1} parent=71 // pred_check_branch
          %543 = sbr.rel (%p541) target = $region80
        $region79: #{tpu_custom_call.1} parent=71 // pred_region
          %544 = dma.done %s537, 6144
        $region80: #{tpu_custom_call.1} parent=71 // pred_fallthru
          _
        %s545 = sand.u32 %s36, 1
        %s546 = scalar_lea.sflag [#allocation7], %s545
        %s547 = sand.u32 %s110, 1
        %s548 = scalar_lea.vmem [#allocation8], %s547
        // Predicated region
        $region81: #{tpu_custom_call.1} parent=71 // pred_check
          %p549 = pneg %p123
        $region82: #{tpu_custom_call.1} parent=71 // pred_check_branch
          %551 = sbr.rel (%p549) target = $region84
        $region83: #{tpu_custom_call.1} parent=71 // pred_region
          %552 = dma.done %s546, 16
        $region84: #{tpu_custom_call.1} parent=71 // pred_fallthru
          _
        // Predicated region
        $region85: #{tpu_custom_call.1} parent=71 // pred_check
          %p553 = pneg %p144
        $region86: #{tpu_custom_call.1} parent=71 // pred_check_branch
          %555 = sbr.rel (%p553) target = $region88
        $region87: #{tpu_custom_call.1} parent=71 // pred_region
          %556 = dma.done [#allocation10], 9216
        $region88: #{tpu_custom_call.1} parent=71 // pred_fallthru
          _
        // Predicated region
        $region89: #{tpu_custom_call.1} parent=71 // pred_check
          %p557 = pneg %p186
        $region90: #{tpu_custom_call.1} parent=71 // pred_check_branch
          %559 = sbr.rel (%p557) target = $region92
        $region91: #{tpu_custom_call.1} parent=71 // pred_region
          %560 = dma.done [#allocation10], 3072
        $region92: #{tpu_custom_call.1} parent=71 // pred_fallthru
          _
        // Predicated region
        $region93: #{tpu_custom_call.1} parent=71 // pred_check
          %p561 = pneg %p207
        $region94: #{tpu_custom_call.1} parent=71 // pred_check_branch
          %563 = sbr.rel (%p561) target = $region96
        $region95: #{tpu_custom_call.1} parent=71 // pred_region
          %564 = dma.done [#allocation13], 16
        $region96: #{tpu_custom_call.1} parent=71 // pred_fallthru
          _
        // Predicated region
        $region97: #{tpu_custom_call.1} parent=71 // pred_check
          %p565 = pneg %p228
        $region98: #{tpu_custom_call.1} parent=71 // pred_check_branch
          %567 = sbr.rel (%p565) target = $region100
        $region99: #{tpu_custom_call.1} parent=71 // pred_region
          %568 = dma.done [#allocation13], 3072
        $region100: #{tpu_custom_call.1} parent=71 // pred_fallthru
          _
        // Predicated region
        $region101: #{tpu_custom_call.1} parent=71 // pred_check
          %p569 = pneg %p270
        $region102: #{tpu_custom_call.1} parent=71 // pred_check_branch
          %571 = sbr.rel (%p569) target = $region104
        $region103: #{tpu_custom_call.1} parent=71 // pred_region
          %572 = dma.done [#allocation16], 9216
        $region104: #{tpu_custom_call.1} parent=71 // pred_fallthru
          _
        %s573 = sand.u32 %s58, 1
        %s574 = scalar_lea.sflag [#allocation4], %s573
        %s575 = sand.u32 %s58, 1
        %s576 = smul.addr %s575, 192
        %s577 = scalar_lea.vmem [#allocation3], %s576
        %p578 = pneg %p71
        %p579 = pneg %p68
        %s580 = sand.u32 %s36, 1
        %s581 = scalar_lea.sflag [#allocation7], %s580
        %s582 = sand.u32 %s84, 1
        %s583 = smul.addr %s582, 384
        %s584 = scalar_lea.vmem [#allocation6], %s583
        %p585 = pneg %p97
        %p586 = pneg %p94
        %s587 = sand.u32 %s36, 1
        %s588 = scalar_lea.sflag [#allocation7], %s587
        %s589 = sand.u32 %s110, 1
        %s590 = scalar_lea.vmem [#allocation8], %s589
        %p591 = pneg %p123
        %p592 = pneg %p120
        %p593 = pneg %p144
        %p594 = pneg %p141
        %p595 = pneg %p165
        %p596 = pneg %p162
        %p597 = pneg %p186
        %p598 = pneg %p183
        %p599 = pneg %p207
        %p600 = pneg %p204
        %p601 = pneg %p228
        %p602 = pneg %p225
        %p603 = pneg %p249
        %p604 = pneg %p246
        %p605 = pneg %p270
        %p606 = pneg %p267
        %p607 = pneg %p291
        %p608 = pneg %p288
        %p609 = pneg %p312
        %p610 = pneg %p309
        %p611 = pneg %p333
        %p612 = pneg %p330
        %p613 = pneg %p361
        %p614 = pneg %p358
        %s615 = sand.u32 %s348, 1
        %s616 = scalar_lea.sflag [#allocation5], %s615
        %s617 = sand.u32 %s348, 1
        %s618 = smul.addr %s617, 192
        %s619 = scalar_lea.vmem [#allocation17], %s618
        %s620 = smul.u32 8, %s41
        %s621 = smul.u32 8, %s41
        %v623 = vld [vmem:[%s531] sm:$0xff]
        %v624 = vld [vmem:[%s531 + $0x8] sm:$0xff]
        %v625 = vld [vmem:[%s531 + $0x10] sm:$0xff]
        %v626 = vld [vmem:[%s531 + $0x18] sm:$0xff]
        %v627 = vld [vmem:[%s531 + $0x20] sm:$0xff]
        %v628 = vld [vmem:[%s531 + $0x28] sm:$0xff]
        %v629 = vld [vmem:[%s531 + $0x30] sm:$0xff]
        %v630 = vld [vmem:[%s531 + $0x38] sm:$0xff]
        %v631 = vld [vmem:[%s531 + $0x40] sm:$0xff]
        %v632 = vld [vmem:[%s531 + $0x48] sm:$0xff]
        %v633 = vld [vmem:[%s531 + $0x50] sm:$0xff]
        %v634 = vld [vmem:[%s531 + $0x58] sm:$0xff]
        %v635 = vld [vmem:[%s531 + $0x60] sm:$0xff]
        %v636 = vld [vmem:[%s531 + $0x68] sm:$0xff]
        %v637 = vld [vmem:[%s531 + $0x70] sm:$0xff]
        %v638 = vld [vmem:[%s531 + $0x78] sm:$0xff]
        %v639 = vld [vmem:[%s531 + $0x80] sm:$0xff]
        %v640 = vld [vmem:[%s531 + $0x88] sm:$0xff]
        %v641 = vld [vmem:[%s531 + $0x90] sm:$0xff]
        %v642 = vld [vmem:[%s531 + $0x98] sm:$0xff]
        %v643 = vld [vmem:[%s531 + $0xa0] sm:$0xff]
        %v644 = vld [vmem:[%s531 + $0xa8] sm:$0xff]
        %v645 = vld [vmem:[%s531 + $0xb0] sm:$0xff]
        %v646 = vld [vmem:[%s531 + $0xb8] sm:$0xff]
        %v647 = vld [vmem:[%s540] sm:$0xff]
        %v648 = vld [vmem:[%s540 + $0x8] sm:$0xff]
        %v649 = vld [vmem:[%s540 + $0x10] sm:$0xff]
        %v650 = vld [vmem:[%s540 + $0x18] sm:$0xff]
        %v651 = vld [vmem:[%s540 + $0x20] sm:$0xff]
        %v652 = vld [vmem:[%s540 + $0x28] sm:$0xff]
        %v653 = vld [vmem:[%s540 + $0x30] sm:$0xff]
        %v654 = vld [vmem:[%s540 + $0x38] sm:$0xff]
        %v655 = vld [vmem:[%s540 + $0x40] sm:$0xff]
        %v656 = vld [vmem:[%s540 + $0x48] sm:$0xff]
        %v657 = vld [vmem:[%s540 + $0x50] sm:$0xff]
        %v658 = vld [vmem:[%s540 + $0x58] sm:$0xff]
        %v659 = vld [vmem:[%s540 + $0x60] sm:$0xff]
        %v660 = vld [vmem:[%s540 + $0x68] sm:$0xff]
        %v661 = vld [vmem:[%s540 + $0x70] sm:$0xff]
        %v662 = vld [vmem:[%s540 + $0x78] sm:$0xff]
        %v663 = vld [vmem:[%s540 + $0x80] sm:$0xff]
        %v664 = vld [vmem:[%s540 + $0x88] sm:$0xff]
        %v665 = vld [vmem:[%s540 + $0x90] sm:$0xff]
        %v666 = vld [vmem:[%s540 + $0x98] sm:$0xff]
        %v667 = vld [vmem:[%s540 + $0xa0] sm:$0xff]
        %v668 = vld [vmem:[%s540 + $0xa8] sm:$0xff]
        %v669 = vld [vmem:[%s540 + $0xb0] sm:$0xff]
        %v670 = vld [vmem:[%s540 + $0xb8] sm:$0xff]
        %v671 = vld [vmem:[%s540 + $0xc0] sm:$0xff]
        %v672 = vld [vmem:[%s540 + $0xc8] sm:$0xff]
        %v673 = vld [vmem:[%s540 + $0xd0] sm:$0xff]
        %v674 = vld [vmem:[%s540 + $0xd8] sm:$0xff]
        %v675 = vld [vmem:[%s540 + $0xe0] sm:$0xff]
        %v676 = vld [vmem:[%s540 + $0xe8] sm:$0xff]
        %v677 = vld [vmem:[%s540 + $0xf0] sm:$0xff]
        %v678 = vld [vmem:[%s540 + $0xf8] sm:$0xff]
        %v679 = vld [vmem:[%s540 + $0x100] sm:$0xff]
        %v680 = vld [vmem:[%s540 + $0x108] sm:$0xff]
        %v681 = vld [vmem:[%s540 + $0x110] sm:$0xff]
        %v682 = vld [vmem:[%s540 + $0x118] sm:$0xff]
        %v683 = vld [vmem:[%s540 + $0x120] sm:$0xff]
        %v684 = vld [vmem:[%s540 + $0x128] sm:$0xff]
        %v685 = vld [vmem:[%s540 + $0x130] sm:$0xff]
        %v686 = vld [vmem:[%s540 + $0x138] sm:$0xff]
        %v687 = vld [vmem:[%s540 + $0x140] sm:$0xff]
        %v688 = vld [vmem:[%s540 + $0x148] sm:$0xff]
        %v689 = vld [vmem:[%s540 + $0x150] sm:$0xff]
        %v690 = vld [vmem:[%s540 + $0x158] sm:$0xff]
        %v691 = vld [vmem:[%s540 + $0x160] sm:$0xff]
        %v692 = vld [vmem:[%s540 + $0x168] sm:$0xff]
        %v693 = vld [vmem:[%s540 + $0x170] sm:$0xff]
        %v694 = vld [vmem:[%s540 + $0x178] sm:$0xff]
        %v695 = vld [vmem:[%s548] sm:$0x1]
        %v696 = vpack.c.bf16 %v626, %v623
        %v697 = vpack.c.bf16 %v627, %v624
        %v698 = vpack.c.bf16 %v628, %v625
        %v699 = vpack.c.bf16 %v632, %v629
        %v700 = vpack.c.bf16 %v633, %v630
        %v701 = vpack.c.bf16 %v634, %v631
        %v702 = vpack.c.bf16 %v638, %v635
        %v703 = vpack.c.bf16 %v639, %v636
        %v704 = vpack.c.bf16 %v640, %v637
        %v705 = vpack.c.bf16 %v644, %v641
        %v706 = vpack.c.bf16 %v645, %v642
        %v707 = vpack.c.bf16 %v646, %v643
        %v708 = vpack.c.bf16 %v650, %v647
        %v709 = vpack.c.bf16 %v651, %v648
        %v710 = vpack.c.bf16 %v652, %v649
        %v711 = vpack.c.bf16 %v656, %v653
        %v712 = vpack.c.bf16 %v657, %v654
        %v713 = vpack.c.bf16 %v658, %v655
        %v714 = vpack.c.bf16 %v662, %v659
        %v715 = vpack.c.bf16 %v663, %v660
        %v716 = vpack.c.bf16 %v664, %v661
        %v717 = vpack.c.bf16 %v668, %v665
        %v718 = vpack.c.bf16 %v669, %v666
        %v719 = vpack.c.bf16 %v670, %v667
        %v720 = vpack.c.bf16 %v674, %v671
        %v721 = vpack.c.bf16 %v675, %v672
        %v722 = vpack.c.bf16 %v676, %v673
        %v723 = vpack.c.bf16 %v680, %v677
        %v724 = vpack.c.bf16 %v681, %v678
        %v725 = vpack.c.bf16 %v682, %v679
        %v726 = vpack.c.bf16 %v686, %v683
        %v727 = vpack.c.bf16 %v687, %v684
        %v728 = vpack.c.bf16 %v688, %v685
        %v729 = vpack.c.bf16 %v692, %v689
        %v730 = vpack.c.bf16 %v693, %v690
        %v731 = vpack.c.bf16 %v694, %v691
        %v732 = vld [vmem:[#allocation9] sm:$0xff]
        %v733 = vld [vmem:[#allocation9 + $0x8] sm:$0xf]
        %v734 = vld [vmem:[#allocation9 + $0xc] sm:$0xff]
        %v735 = vld [vmem:[#allocation9 + $0x14] sm:$0xf]
        %v736 = vld [vmem:[#allocation9 + $0x18] sm:$0xff]
        %v737 = vld [vmem:[#allocation9 + $0x20] sm:$0xf]
        %v738 = vld [vmem:[#allocation9 + $0x24] sm:$0xff]
        %v739 = vld [vmem:[#allocation9 + $0x2c] sm:$0xf]
        %v740 = vld [vmem:[#allocation9 + $0x30] sm:$0xff]
        %v741 = vld [vmem:[#allocation9 + $0x38] sm:$0xf]
        %v742 = vld [vmem:[#allocation9 + $0x3c] sm:$0xff]
        %v743 = vld [vmem:[#allocation9 + $0x44] sm:$0xf]
        %v744 = vld [vmem:[#allocation9 + $0x48] sm:$0xff]
        %v745 = vld [vmem:[#allocation9 + $0x50] sm:$0xf]
        %v746 = vld [vmem:[#allocation9 + $0x54] sm:$0xff]
        %v747 = vld [vmem:[#allocation9 + $0x5c] sm:$0xf]
        %v748 = vld [vmem:[#allocation9 + $0x60] sm:$0xff]
        %v749 = vld [vmem:[#allocation9 + $0x68] sm:$0xf]
        %v750 = vld [vmem:[#allocation9 + $0x6c] sm:$0xff]
        %v751 = vld [vmem:[#allocation9 + $0x74] sm:$0xf]
        %v752 = vld [vmem:[#allocation9 + $0x78] sm:$0xff]
        %v753 = vld [vmem:[#allocation9 + $0x80] sm:$0xf]
        %v754 = vld [vmem:[#allocation9 + $0x84] sm:$0xff]
        %v755 = vld [vmem:[#allocation9 + $0x8c] sm:$0xf]
        %v756 = vld [vmem:[#allocation9 + $0x90] sm:$0xff]
        %v757 = vld [vmem:[#allocation9 + $0x98] sm:$0xf]
        %v758 = vld [vmem:[#allocation9 + $0x9c] sm:$0xff]
        %v759 = vld [vmem:[#allocation9 + $0xa4] sm:$0xf]
        %v760 = vld [vmem:[#allocation9 + $0xa8] sm:$0xff]
        %v761 = vld [vmem:[#allocation9 + $0xb0] sm:$0xf]
        %v762 = vld [vmem:[#allocation9 + $0xb4] sm:$0xff]
        %v763 = vld [vmem:[#allocation9 + $0xbc] sm:$0xf]
        %v764 = vld [vmem:[#allocation9 + $0xc0] sm:$0xff]
        %v765 = vld [vmem:[#allocation9 + $0xc8] sm:$0xf]
        %v766 = vld [vmem:[#allocation9 + $0xcc] sm:$0xff]
        %v767 = vld [vmem:[#allocation9 + $0xd4] sm:$0xf]
        %v768 = vld [vmem:[#allocation9 + $0xd8] sm:$0xff]
        %v769 = vld [vmem:[#allocation9 + $0xe0] sm:$0xf]
        %v770 = vld [vmem:[#allocation9 + $0xe4] sm:$0xff]
        %v771 = vld [vmem:[#allocation9 + $0xec] sm:$0xf]
        %v772 = vld [vmem:[#allocation9 + $0xf0] sm:$0xff]
        %v773 = vld [vmem:[#allocation9 + $0xf8] sm:$0xf]
        %v774 = vld [vmem:[#allocation9 + $0xfc] sm:$0xff]
        %v775 = vld [vmem:[#allocation9 + $0x104] sm:$0xf]
        %v776 = vld [vmem:[#allocation9 + $0x108] sm:$0xff]
        %v777 = vld [vmem:[#allocation9 + $0x110] sm:$0xf]
        %v778 = vld [vmem:[#allocation9 + $0x114] sm:$0xff]
        %v779 = vld [vmem:[#allocation9 + $0x11c] sm:$0xf]
        %v780 = vld [vmem:[#allocation9 + $0x120] sm:$0xff]
        %v781 = vld [vmem:[#allocation9 + $0x128] sm:$0xf]
        %v782 = vld [vmem:[#allocation9 + $0x12c] sm:$0xff]
        %v783 = vld [vmem:[#allocation9 + $0x134] sm:$0xf]
        %v784 = vld [vmem:[#allocation9 + $0x138] sm:$0xff]
        %v785 = vld [vmem:[#allocation9 + $0x140] sm:$0xf]
        %v786 = vld [vmem:[#allocation9 + $0x144] sm:$0xff]
        %v787 = vld [vmem:[#allocation9 + $0x14c] sm:$0xf]
        %v788 = vld [vmem:[#allocation9 + $0x150] sm:$0xff]
        %v789 = vld [vmem:[#allocation9 + $0x158] sm:$0xf]
        %v790 = vld [vmem:[#allocation9 + $0x15c] sm:$0xff]
        %v791 = vld [vmem:[#allocation9 + $0x164] sm:$0xf]
        %v792 = vld [vmem:[#allocation9 + $0x168] sm:$0xff]
        %v793 = vld [vmem:[#allocation9 + $0x170] sm:$0xf]
        %v794 = vld [vmem:[#allocation9 + $0x174] sm:$0xff]
        %v795 = vld [vmem:[#allocation9 + $0x17c] sm:$0xf]
        %v796 = vld [vmem:[#allocation9 + $0x180] sm:$0xff]
        %v797 = vld [vmem:[#allocation9 + $0x188] sm:$0xf]
        %v798 = vld [vmem:[#allocation9 + $0x18c] sm:$0xff]
        %v799 = vld [vmem:[#allocation9 + $0x194] sm:$0xf]
        %v800 = vld [vmem:[#allocation9 + $0x198] sm:$0xff]
        %v801 = vld [vmem:[#allocation9 + $0x1a0] sm:$0xf]
        %v802 = vld [vmem:[#allocation9 + $0x1a4] sm:$0xff]
        %v803 = vld [vmem:[#allocation9 + $0x1ac] sm:$0xf]
        %v804 = vld [vmem:[#allocation9 + $0x1b0] sm:$0xff]
        %v805 = vld [vmem:[#allocation9 + $0x1b8] sm:$0xf]
        %v806 = vld [vmem:[#allocation9 + $0x1bc] sm:$0xff]
        %v807 = vld [vmem:[#allocation9 + $0x1c4] sm:$0xf]
        %v808 = vld [vmem:[#allocation9 + $0x1c8] sm:$0xff]
        %v809 = vld [vmem:[#allocation9 + $0x1d0] sm:$0xf]
        %v810 = vld [vmem:[#allocation9 + $0x1d4] sm:$0xff]
        %v811 = vld [vmem:[#allocation9 + $0x1dc] sm:$0xf]
        %v812 = vld [vmem:[#allocation9 + $0x1e0] sm:$0xff]
        %v813 = vld [vmem:[#allocation9 + $0x1e8] sm:$0xf]
        %v814 = vld [vmem:[#allocation9 + $0x1ec] sm:$0xff]
        %v815 = vld [vmem:[#allocation9 + $0x1f4] sm:$0xf]
        %v816 = vld [vmem:[#allocation9 + $0x1f8] sm:$0xff]
        %v817 = vld [vmem:[#allocation9 + $0x200] sm:$0xf]
        %v818 = vld [vmem:[#allocation9 + $0x204] sm:$0xff]
        %v819 = vld [vmem:[#allocation9 + $0x20c] sm:$0xf]
        %v820 = vld [vmem:[#allocation9 + $0x210] sm:$0xff]
        %v821 = vld [vmem:[#allocation9 + $0x218] sm:$0xf]
        %v822 = vld [vmem:[#allocation9 + $0x21c] sm:$0xff]
        %v823 = vld [vmem:[#allocation9 + $0x224] sm:$0xf]
        %v824 = vld [vmem:[#allocation9 + $0x228] sm:$0xff]
        %v825 = vld [vmem:[#allocation9 + $0x230] sm:$0xf]
        %v826 = vld [vmem:[#allocation9 + $0x234] sm:$0xff]
        %v827 = vld [vmem:[#allocation9 + $0x23c] sm:$0xf]
        %v828 = vld [vmem:[%s4] sm:$0x7]
        %v830 = vlaneseq
        %v831 = vshrl.u32 %v830, 7
        %v832 = vsub.s32 0, %v831
        %v833 = vrot.slane %v828, %v832
        %v834 = vlaneseq
        %v835 = vshrl.u32 %v834, 7
        %v836 = vsub.s32 1, %v835
        %v837 = vrot.slane %v828, %v836
        %v838 = vlaneseq
        %v839 = vshrl.u32 %v838, 7
        %v840 = vsub.s32 2, %v839
        %v841 = vrot.slane %v828, %v840
        %v941 = vunpack.c.l.b16 %v732
        %v942 = vunpack.c.h.b16 %v732
        %v943 = vunpack.c.l.b16 %v733
        %v944 = vunpack.c.l.b16 %v734
        %v945 = vunpack.c.h.b16 %v734
        %v946 = vunpack.c.l.b16 %v735
        %v947 = vunpack.c.l.b16 %v736
        %v948 = vunpack.c.h.b16 %v736
        %v949 = vunpack.c.l.b16 %v737
        %v950 = vunpack.c.l.b16 %v738
        %v951 = vunpack.c.h.b16 %v738
        %v952 = vunpack.c.l.b16 %v739
        %v953 = vunpack.c.l.b16 %v740
        %v954 = vunpack.c.h.b16 %v740
        %v955 = vunpack.c.l.b16 %v741
        %v956 = vunpack.c.l.b16 %v742
        %v957 = vunpack.c.h.b16 %v742
        %v958 = vunpack.c.l.b16 %v743
        %v959 = vunpack.c.l.b16 %v744
        %v960 = vunpack.c.h.b16 %v744
        %v961 = vunpack.c.l.b16 %v745
        %v962 = vunpack.c.l.b16 %v746
        %v963 = vunpack.c.h.b16 %v746
        %v964 = vunpack.c.l.b16 %v747
        %v965 = vunpack.c.l.b16 %v748
        %v966 = vunpack.c.h.b16 %v748
        %v967 = vunpack.c.l.b16 %v749
        %v968 = vunpack.c.l.b16 %v750
        %v969 = vunpack.c.h.b16 %v750
        %v970 = vunpack.c.l.b16 %v751
        %v971 = vunpack.c.l.b16 %v752
        %v972 = vunpack.c.h.b16 %v752
        %v973 = vunpack.c.l.b16 %v753
        %v974 = vunpack.c.l.b16 %v754
        %v975 = vunpack.c.h.b16 %v754
        %v976 = vunpack.c.l.b16 %v755
        %v977 = vunpack.c.l.b16 %v756
        %v978 = vunpack.c.h.b16 %v756
        %v979 = vunpack.c.l.b16 %v757
        %v980 = vunpack.c.l.b16 %v758
        %v981 = vunpack.c.h.b16 %v758
        %v982 = vunpack.c.l.b16 %v759
        %v983 = vunpack.c.l.b16 %v760
        %v984 = vunpack.c.h.b16 %v760
        %v985 = vunpack.c.l.b16 %v761
        %v986 = vunpack.c.l.b16 %v762
        %v987 = vunpack.c.h.b16 %v762
        %v988 = vunpack.c.l.b16 %v763
        %v989 = vunpack.c.l.b16 %v764
        %v990 = vunpack.c.h.b16 %v764
        %v991 = vunpack.c.l.b16 %v765
        %v992 = vunpack.c.l.b16 %v766
        %v993 = vunpack.c.h.b16 %v766
        %v994 = vunpack.c.l.b16 %v767
        %v995 = vunpack.c.l.b16 %v768
        %v996 = vunpack.c.h.b16 %v768
        %v997 = vunpack.c.l.b16 %v769
        %v998 = vunpack.c.l.b16 %v770
        %v999 = vunpack.c.h.b16 %v770
        %v1000 = vunpack.c.l.b16 %v771
        %v1001 = vunpack.c.l.b16 %v772
        %v1002 = vunpack.c.h.b16 %v772
        %v1003 = vunpack.c.l.b16 %v773
        %v1004 = vunpack.c.l.b16 %v774
        %v1005 = vunpack.c.h.b16 %v774
        %v1006 = vunpack.c.l.b16 %v775
        %v1007 = vunpack.c.l.b16 %v776
        %v1008 = vunpack.c.h.b16 %v776
        %v1009 = vunpack.c.l.b16 %v777
        %v1010 = vunpack.c.l.b16 %v778
        %v1011 = vunpack.c.h.b16 %v778
        %v1012 = vunpack.c.l.b16 %v779
        %v1013 = vunpack.c.l.b16 %v780
        %v1014 = vunpack.c.h.b16 %v780
        %v1015 = vunpack.c.l.b16 %v781
        %v1016 = vunpack.c.l.b16 %v782
        %v1017 = vunpack.c.h.b16 %v782
        %v1018 = vunpack.c.l.b16 %v783
        %v1019 = vunpack.c.l.b16 %v784
        %v1020 = vunpack.c.h.b16 %v784
        %v1021 = vunpack.c.l.b16 %v785
        %v1022 = vunpack.c.l.b16 %v786
        %v1023 = vunpack.c.h.b16 %v786
        %v1024 = vunpack.c.l.b16 %v787
        %v1025 = vunpack.c.l.b16 %v788
        %v1026 = vunpack.c.h.b16 %v788
        %v1027 = vunpack.c.l.b16 %v789
        %v1028 = vunpack.c.l.b16 %v790
        %v1029 = vunpack.c.h.b16 %v790
        %v1030 = vunpack.c.l.b16 %v791
        %v1031 = vunpack.c.l.b16 %v792
        %v1032 = vunpack.c.h.b16 %v792
        %v1033 = vunpack.c.l.b16 %v793
        %v1034 = vunpack.c.l.b16 %v794
        %v1035 = vunpack.c.h.b16 %v794
        %v1036 = vunpack.c.l.b16 %v795
        %v1037 = vunpack.c.l.b16 %v796
        %v1038 = vunpack.c.h.b16 %v796
        %v1039 = vunpack.c.l.b16 %v797
        %v1040 = vunpack.c.l.b16 %v798
        %v1041 = vunpack.c.h.b16 %v798
        %v1042 = vunpack.c.l.b16 %v799
        %v1043 = vunpack.c.l.b16 %v800
        %v1044 = vunpack.c.h.b16 %v800
        %v1045 = vunpack.c.l.b16 %v801
        %v1046 = vunpack.c.l.b16 %v802
        %v1047 = vunpack.c.h.b16 %v802
        %v1048 = vunpack.c.l.b16 %v803
        %v1049 = vunpack.c.l.b16 %v804
        %v1050 = vunpack.c.h.b16 %v804
        %v1051 = vunpack.c.l.b16 %v805
        %v1052 = vunpack.c.l.b16 %v806
        %v1053 = vunpack.c.h.b16 %v806
        %v1054 = vunpack.c.l.b16 %v807
        %v1055 = vunpack.c.l.b16 %v808
        %v1056 = vunpack.c.h.b16 %v808
        %v1057 = vunpack.c.l.b16 %v809
        %v1058 = vunpack.c.l.b16 %v810
        %v1059 = vunpack.c.h.b16 %v810
        %v1060 = vunpack.c.l.b16 %v811
        %v1061 = vunpack.c.l.b16 %v812
        %v1062 = vunpack.c.h.b16 %v812
        %v1063 = vunpack.c.l.b16 %v813
        %v1064 = vunpack.c.l.b16 %v814
        %v1065 = vunpack.c.h.b16 %v814
        %v1066 = vunpack.c.l.b16 %v815
        %v1067 = vunpack.c.l.b16 %v816
        %v1068 = vunpack.c.h.b16 %v816
        %v1069 = vunpack.c.l.b16 %v817
        %v1070 = vunpack.c.l.b16 %v818
        %v1071 = vunpack.c.h.b16 %v818
        %v1072 = vunpack.c.l.b16 %v819
        %v1073 = vunpack.c.l.b16 %v820
        %v1074 = vunpack.c.h.b16 %v820
        %v1075 = vunpack.c.l.b16 %v821
        %v1076 = vunpack.c.l.b16 %v822
        %v1077 = vunpack.c.h.b16 %v822
        %v1078 = vunpack.c.l.b16 %v823
        %v1079 = vunpack.c.l.b16 %v824
        %v1080 = vunpack.c.h.b16 %v824
        %v1081 = vunpack.c.l.b16 %v825
        %v1082 = vunpack.c.l.b16 %v826
        %v1083 = vunpack.c.h.b16 %v826
        %v1084 = vunpack.c.l.b16 %v827
        %v1085 = vpack.c.b16 %v944, %v941
        %v1086 = vpack.c.b16 %v945, %v942
        %v1087 = vpack.c.b16 %v946, %v943
        %v1088 = vpack.c.b16 %v950, %v947
        %v1089 = vpack.c.b16 %v951, %v948
        %v1090 = vpack.c.b16 %v952, %v949
        %v1091 = vpack.c.b16 %v956, %v953
        %v1092 = vpack.c.b16 %v957, %v954
        %v1093 = vpack.c.b16 %v958, %v955
        %v1094 = vpack.c.b16 %v962, %v959
        %v1095 = vpack.c.b16 %v963, %v960
        %v1096 = vpack.c.b16 %v964, %v961
        %v1097 = vpack.c.b16 %v968, %v965
        %v1098 = vpack.c.b16 %v969, %v966
        %v1099 = vpack.c.b16 %v970, %v967
        %v1100 = vpack.c.b16 %v974, %v971
        %v1101 = vpack.c.b16 %v975, %v972
        %v1102 = vpack.c.b16 %v976, %v973
        %v1103 = vpack.c.b16 %v980, %v977
        %v1104 = vpack.c.b16 %v981, %v978
        %v1105 = vpack.c.b16 %v982, %v979
        %v1106 = vpack.c.b16 %v986, %v983
        %v1107 = vpack.c.b16 %v987, %v984
        %v1108 = vpack.c.b16 %v988, %v985
        %v1109 = vpack.c.b16 %v992, %v989
        %v1110 = vpack.c.b16 %v993, %v990
        %v1111 = vpack.c.b16 %v994, %v991
        %v1112 = vpack.c.b16 %v998, %v995
        %v1113 = vpack.c.b16 %v999, %v996
        %v1114 = vpack.c.b16 %v1000, %v997
        %v1115 = vpack.c.b16 %v1004, %v1001
        %v1116 = vpack.c.b16 %v1005, %v1002
        %v1117 = vpack.c.b16 %v1006, %v1003
        %v1118 = vpack.c.b16 %v1010, %v1007
        %v1119 = vpack.c.b16 %v1011, %v1008
        %v1120 = vpack.c.b16 %v1012, %v1009
        %v1121 = vpack.c.b16 %v1016, %v1013
        %v1122 = vpack.c.b16 %v1017, %v1014
        %v1123 = vpack.c.b16 %v1018, %v1015
        %v1124 = vpack.c.b16 %v1022, %v1019
        %v1125 = vpack.c.b16 %v1023, %v1020
        %v1126 = vpack.c.b16 %v1024, %v1021
        %v1127 = vpack.c.b16 %v1028, %v1025
        %v1128 = vpack.c.b16 %v1029, %v1026
        %v1129 = vpack.c.b16 %v1030, %v1027
        %v1130 = vpack.c.b16 %v1034, %v1031
        %v1131 = vpack.c.b16 %v1035, %v1032
        %v1132 = vpack.c.b16 %v1036, %v1033
        %v1133 = vpack.c.b16 %v1040, %v1037
        %v1134 = vpack.c.b16 %v1041, %v1038
        %v1135 = vpack.c.b16 %v1042, %v1039
        %v1136 = vpack.c.b16 %v1046, %v1043
        %v1137 = vpack.c.b16 %v1047, %v1044
        %v1138 = vpack.c.b16 %v1048, %v1045
        %v1139 = vpack.c.b16 %v1052, %v1049
        %v1140 = vpack.c.b16 %v1053, %v1050
        %v1141 = vpack.c.b16 %v1054, %v1051
        %v1142 = vpack.c.b16 %v1058, %v1055
        %v1143 = vpack.c.b16 %v1059, %v1056
        %v1144 = vpack.c.b16 %v1060, %v1057
        %v1145 = vpack.c.b16 %v1064, %v1061
        %v1146 = vpack.c.b16 %v1065, %v1062
        %v1147 = vpack.c.b16 %v1066, %v1063
        %v1148 = vpack.c.b16 %v1070, %v1067
        %v1149 = vpack.c.b16 %v1071, %v1068
        %v1150 = vpack.c.b16 %v1072, %v1069
        %v1151 = vpack.c.b16 %v1076, %v1073
        %v1152 = vpack.c.b16 %v1077, %v1074
        %v1153 = vpack.c.b16 %v1078, %v1075
        %v1154 = vpack.c.b16 %v1082, %v1079
        %v1155 = vpack.c.b16 %v1083, %v1080
        %v1156 = vpack.c.b16 %v1084, %v1081
        %1229 = vmatprep.subr.bf16.mxu0 %v1107
        %1230 = vmatpush1.bf16.msra.mxu0 %v1106
        %1231 = vmatprep.subr.bf16.mxu0 %v1104
        %1232 = vmatpush1.bf16.msra.mxu0 %v1103
        %1233 = vmatprep.subr.bf16.mxu0 %v1101
        %1234 = vmatpush1.bf16.msra.mxu0 %v1100
        %1235 = vmatprep.subr.bf16.mxu0 %v1098
        %1236 = vmatpush1.bf16.msra.mxu0 %v1097
        %1237 = vmatprep.subr.bf16.mxu0 %v1095
        %1238 = vmatpush1.bf16.msra.mxu0 %v1094
        %1239 = vmatprep.subr.bf16.mxu0 %v1092
        %1240 = vmatpush1.bf16.msra.mxu0 %v1091
        %1241 = vmatprep.subr.bf16.mxu0 %v1089
        %1242 = vmatpush1.bf16.msra.mxu0 %v1088
        %1243 = vmatprep.subr.bf16.mxu0 %v1086
        %1244 = vmatpush1.bf16.msra.mxu0 %v1085
        %1245 = vmatprep.subr.bf16.mxu0 %v1131
        %1246 = vmatpush2.bf16.msra.mxu0 %v1130
        %1247 = vmatprep.subr.bf16.mxu0 %v1128
        %1248 = vmatpush2.bf16.msra.mxu0 %v1127
        %1249 = vmatprep.subr.bf16.mxu0 %v1125
        %1250 = vmatpush2.bf16.msra.mxu0 %v1124
        %1251 = vmatprep.subr.bf16.mxu0 %v1122
        %1252 = vmatpush2.bf16.msra.mxu0 %v1121
        %1253 = vmatprep.subr.bf16.mxu0 %v1119
        %1254 = vmatpush2.bf16.msra.mxu0 %v1118
        %1255 = vmatprep.subr.bf16.mxu0 %v1116
        %1256 = vmatpush2.bf16.msra.mxu0 %v1115
        %1257 = vmatprep.subr.bf16.mxu0 %v1113
        %1258 = vmatpush2.bf16.msra.mxu0 %v1112
        %1259 = vmatprep.subr.bf16.mxu0 %v1110
        %1260 = vmatpush2.bf16.msra.mxu0 %v1109
        %1261 = vmatprep.mubr.bf16.mxu0 %v697
        %1262 = vmatmul.mubr.bf16.gmra.mxu0 %v696
        %v1263 = vpop.f32.mrf.mxu0
        %v1264 = vadd.f32 %v833, %v1263
        %v1265 = vpop.f32.mrf.mxu0
        %v1266 = vadd.f32 %v837, %v1265
        %v1267 = vpop.f32.mrf.mxu0
        %v1268 = vadd.f32 %v833, %v1267
        %v1269 = vpop.f32.mrf.mxu0
        %v1270 = vadd.f32 %v837, %v1269
        %1271 = vmatprep.mubr.bf16.mxu0 %v700
        %1272 = vmatmul.mubr.bf16.gmra.mxu0 %v699
        %v1273 = vpop.f32.mrf.mxu0
        %v1274 = vadd.f32 %v833, %v1273
        %v1275 = vpop.f32.mrf.mxu0
        %v1276 = vadd.f32 %v837, %v1275
        %v1277 = vpop.f32.mrf.mxu0
        %v1278 = vadd.f32 %v833, %v1277
        %v1279 = vpop.f32.mrf.mxu0
        %v1280 = vadd.f32 %v837, %v1279
        %1281 = vmatprep.mubr.bf16.mxu0 %v703
        %1282 = vmatmul.mubr.bf16.gmra.mxu0 %v702
        %v1283 = vpop.f32.mrf.mxu0
        %v1284 = vadd.f32 %v833, %v1283
        %v1285 = vpop.f32.mrf.mxu0
        %v1286 = vadd.f32 %v837, %v1285
        %v1287 = vpop.f32.mrf.mxu0
        %v1288 = vadd.f32 %v833, %v1287
        %v1289 = vpop.f32.mrf.mxu0
        %v1290 = vadd.f32 %v837, %v1289
        %1291 = vmatprep.mubr.bf16.mxu0 %v706
        %1292 = vmatmul.mubr.bf16.gmra.mxu0 %v705
        %v1293 = vpop.f32.mrf.mxu0
        %v1294 = vadd.f32 %v833, %v1293
        %v1295 = vpop.f32.mrf.mxu0
        %v1296 = vadd.f32 %v837, %v1295
        %v1297 = vpop.f32.mrf.mxu0
        %v1298 = vadd.f32 %v833, %v1297
        %v1299 = vpop.f32.mrf.mxu0
        %v1300 = vadd.f32 %v837, %v1299
        %1301 = vdwg.mxu0
        %1302 = vmatprep.subr.bf16.mxu0 %v1155
        %1303 = vmatpush1.bf16.msra.mxu0 %v1154
        %1304 = vmatprep.subr.bf16.mxu0 %v1152
        %1305 = vmatpush1.bf16.msra.mxu0 %v1151
        %1306 = vmatprep.subr.bf16.mxu0 %v1149
        %1307 = vmatpush1.bf16.msra.mxu0 %v1148
        %1308 = vmatprep.subr.bf16.mxu0 %v1146
        %1309 = vmatpush1.bf16.msra.mxu0 %v1145
        %1310 = vmatprep.subr.bf16.mxu0 %v1143
        %1311 = vmatpush1.bf16.msra.mxu0 %v1142
        %1312 = vmatprep.subr.bf16.mxu0 %v1140
        %1313 = vmatpush1.bf16.msra.mxu0 %v1139
        %1314 = vmatprep.subr.bf16.mxu0 %v1137
        %1315 = vmatpush1.bf16.msra.mxu0 %v1136
        %1316 = vmatprep.subr.bf16.mxu0 %v1134
        %1317 = vmatpush1.bf16.msra.mxu0 %v1133
        %1318 = vmatprep.subr.bf16.mxu0 0
        %1319 = vmatpush2.bf16.msra.mxu0 0
        %1320 = vmatprep.subr.bf16.mxu0 0
        %1321 = vmatpush2.bf16.msra.mxu0 0
        %1322 = vmatprep.subr.bf16.mxu0 0
        %1323 = vmatpush2.bf16.msra.mxu0 0
        %1324 = vmatprep.subr.bf16.mxu0 0
        %1325 = vmatpush2.bf16.msra.mxu0 0
        %1326 = vmatprep.subr.bf16.mxu0 0
        %1327 = vmatpush2.bf16.msra.mxu0 0
        %1328 = vmatprep.subr.bf16.mxu0 0
        %1329 = vmatpush2.bf16.msra.mxu0 0
        %1330 = vmatprep.subr.bf16.mxu0 0
        %1331 = vmatpush2.bf16.msra.mxu0 0
        %1332 = vmatprep.subr.bf16.mxu0 0
        %1333 = vmatpush2.bf16.msra.mxu0 0
        %1334 = vmatprep.mubr.bf16.mxu0 0
        %1335 = vmatmul.mubr.bf16.gmra.mxu0 %v698
        %v1336 = vpop.f32.mrf.mxu0
        %v1337 = vadd.f32 %v1264, %v1336
        %v1338 = vpop.f32.mrf.mxu0
        %v1339 = vadd.f32 %v1266, %v1338
        %v1340 = vpop.f32.mrf.mxu0
        %v1341 = vadd.f32 %v1268, %v1340
        %v1342 = vpop.f32.mrf.mxu0
        %v1343 = vadd.f32 %v1270, %v1342
        %1344 = vmatprep.mubr.bf16.mxu0 0
        %1345 = vmatmul.mubr.bf16.gmra.mxu0 %v701
        %v1346 = vpop.f32.mrf.mxu0
        %v1347 = vadd.f32 %v1274, %v1346
        %v1348 = vpop.f32.mrf.mxu0
        %v1349 = vadd.f32 %v1276, %v1348
        %v1350 = vpop.f32.mrf.mxu0
        %v1351 = vadd.f32 %v1278, %v1350
        %v1352 = vpop.f32.mrf.mxu0
        %v1353 = vadd.f32 %v1280, %v1352
        %1354 = vmatprep.mubr.bf16.mxu0 0
        %1355 = vmatmul.mubr.bf16.gmra.mxu0 %v704
        %v1356 = vpop.f32.mrf.mxu0
        %v1357 = vadd.f32 %v1284, %v1356
        %v1358 = vpop.f32.mrf.mxu0
        %v1359 = vadd.f32 %v1286, %v1358
        %v1360 = vpop.f32.mrf.mxu0
        %v1361 = vadd.f32 %v1288, %v1360
        %v1362 = vpop.f32.mrf.mxu0
        %v1363 = vadd.f32 %v1290, %v1362
        %1364 = vmatprep.mubr.bf16.mxu0 0
        %1365 = vmatmul.mubr.bf16.gmra.mxu0 %v707
        %v1366 = vpop.f32.mrf.mxu0
        %v1367 = vadd.f32 %v1294, %v1366
        %v1368 = vpop.f32.mrf.mxu0
        %v1369 = vadd.f32 %v1296, %v1368
        %v1370 = vpop.f32.mrf.mxu0
        %v1371 = vadd.f32 %v1298, %v1370
        %v1372 = vpop.f32.mrf.mxu0
        %v1373 = vadd.f32 %v1300, %v1372
        %1374 = vdwg.mxu0
        %1375 = vmatprep.subr.bf16.mxu0 0
        %1376 = vmatpush1.bf16.msra.mxu0 %v1108
        %1377 = vmatprep.subr.bf16.mxu0 0
        %1378 = vmatpush1.bf16.msra.mxu0 %v1105
        %1379 = vmatprep.subr.bf16.mxu0 0
        %1380 = vmatpush1.bf16.msra.mxu0 %v1102
        %1381 = vmatprep.subr.bf16.mxu0 0
        %1382 = vmatpush1.bf16.msra.mxu0 %v1099
        %1383 = vmatprep.subr.bf16.mxu0 0
        %1384 = vmatpush1.bf16.msra.mxu0 %v1096
        %1385 = vmatprep.subr.bf16.mxu0 0
        %1386 = vmatpush1.bf16.msra.mxu0 %v1093
        %1387 = vmatprep.subr.bf16.mxu0 0
        %1388 = vmatpush1.bf16.msra.mxu0 %v1090
        %1389 = vmatprep.subr.bf16.mxu0 0
        %1390 = vmatpush1.bf16.msra.mxu0 %v1087
        %1391 = vmatprep.subr.bf16.mxu0 0
        %1392 = vmatpush2.bf16.msra.mxu0 %v1132
        %1393 = vmatprep.subr.bf16.mxu0 0
        %1394 = vmatpush2.bf16.msra.mxu0 %v1129
        %1395 = vmatprep.subr.bf16.mxu0 0
        %1396 = vmatpush2.bf16.msra.mxu0 %v1126
        %1397 = vmatprep.subr.bf16.mxu0 0
        %1398 = vmatpush2.bf16.msra.mxu0 %v1123
        %1399 = vmatprep.subr.bf16.mxu0 0
        %1400 = vmatpush2.bf16.msra.mxu0 %v1120
        %1401 = vmatprep.subr.bf16.mxu0 0
        %1402 = vmatpush2.bf16.msra.mxu0 %v1117
        %1403 = vmatprep.subr.bf16.mxu0 0
        %1404 = vmatpush2.bf16.msra.mxu0 %v1114
        %1405 = vmatprep.subr.bf16.mxu0 0
        %1406 = vmatpush2.bf16.msra.mxu0 %v1111
        %1407 = vmatprep.mubr.bf16.mxu0 %v697
        %1408 = vmatmul.mubr.bf16.gmra.mxu0 %v696
        %v1409 = vpop.f32.mrf.mxu0
        %v1410 = vadd.f32 %v841, %v1409
        %v1411 = vpop.f32.mrf.mxu0
        %v1412 = vpop.f32.mrf.mxu0
        %v1413 = vadd.f32 %v841, %v1412
        %v1414 = vpop.f32.mrf.mxu0
        %1415 = vmatprep.mubr.bf16.mxu0 %v700
        %1416 = vmatmul.mubr.bf16.gmra.mxu0 %v699
        %v1417 = vpop.f32.mrf.mxu0
        %v1418 = vadd.f32 %v841, %v1417
        %v1419 = vpop.f32.mrf.mxu0
        %v1420 = vpop.f32.mrf.mxu0
        %v1421 = vadd.f32 %v841, %v1420
        %v1422 = vpop.f32.mrf.mxu0
        %1423 = vmatprep.mubr.bf16.mxu0 %v703
        %1424 = vmatmul.mubr.bf16.gmra.mxu0 %v702
        %v1425 = vpop.f32.mrf.mxu0
        %v1426 = vadd.f32 %v841, %v1425
        %v1427 = vpop.f32.mrf.mxu0
        %v1428 = vpop.f32.mrf.mxu0
        %v1429 = vadd.f32 %v841, %v1428
        %v1430 = vpop.f32.mrf.mxu0
        %1431 = vmatprep.mubr.bf16.mxu0 %v706
        %1432 = vmatmul.mubr.bf16.gmra.mxu0 %v705
        %v1433 = vpop.f32.mrf.mxu0
        %v1434 = vadd.f32 %v841, %v1433
        %v1435 = vpop.f32.mrf.mxu0
        %v1436 = vpop.f32.mrf.mxu0
        %v1437 = vadd.f32 %v841, %v1436
        %v1438 = vpop.f32.mrf.mxu0
        %1439 = vdwg.mxu0
        %1440 = vmatprep.subr.bf16.mxu0 0
        %1441 = vmatpush1.bf16.msra.mxu0 %v1156
        %1442 = vmatprep.subr.bf16.mxu0 0
        %1443 = vmatpush1.bf16.msra.mxu0 %v1153
        %1444 = vmatprep.subr.bf16.mxu0 0
        %1445 = vmatpush1.bf16.msra.mxu0 %v1150
        %1446 = vmatprep.subr.bf16.mxu0 0
        %1447 = vmatpush1.bf16.msra.mxu0 %v1147
        %1448 = vmatprep.subr.bf16.mxu0 0
        %1449 = vmatpush1.bf16.msra.mxu0 %v1144
        %1450 = vmatprep.subr.bf16.mxu0 0
        %1451 = vmatpush1.bf16.msra.mxu0 %v1141
        %1452 = vmatprep.subr.bf16.mxu0 0
        %1453 = vmatpush1.bf16.msra.mxu0 %v1138
        %1454 = vmatprep.subr.bf16.mxu0 0
        %1455 = vmatpush1.bf16.msra.mxu0 %v1135
        %1456 = vmatprep.subr.bf16.mxu0 0
        %1457 = vmatpush2.bf16.msra.mxu0 0
        %1458 = vmatprep.subr.bf16.mxu0 0
        %1459 = vmatpush2.bf16.msra.mxu0 0
        %1460 = vmatprep.subr.bf16.mxu0 0
        %1461 = vmatpush2.bf16.msra.mxu0 0
        %1462 = vmatprep.subr.bf16.mxu0 0
        %1463 = vmatpush2.bf16.msra.mxu0 0
        %1464 = vmatprep.subr.bf16.mxu0 0
        %1465 = vmatpush2.bf16.msra.mxu0 0
        %1466 = vmatprep.subr.bf16.mxu0 0
        %1467 = vmatpush2.bf16.msra.mxu0 0
        %1468 = vmatprep.subr.bf16.mxu0 0
        %1469 = vmatpush2.bf16.msra.mxu0 0
        %1470 = vmatprep.subr.bf16.mxu0 0
        %1471 = vmatpush2.bf16.msra.mxu0 0
        %1472 = vmatprep.mubr.bf16.mxu0 0
        %1473 = vmatmul.mubr.bf16.gmra.mxu0 %v698
        %v1474 = vpop.f32.mrf.mxu0
        %v1475 = vadd.f32 %v1410, %v1474
        %v1476 = vpop.f32.mrf.mxu0
        %v1477 = vpop.f32.mrf.mxu0
        %v1478 = vadd.f32 %v1413, %v1477
        %v1479 = vpop.f32.mrf.mxu0
        %1480 = vmatprep.mubr.bf16.mxu0 0
        %1481 = vmatmul.mubr.bf16.gmra.mxu0 %v701
        %v1482 = vpop.f32.mrf.mxu0
        %v1483 = vadd.f32 %v1418, %v1482
        %v1484 = vpop.f32.mrf.mxu0
        %v1485 = vpop.f32.mrf.mxu0
        %v1486 = vadd.f32 %v1421, %v1485
        %v1487 = vpop.f32.mrf.mxu0
        %1488 = vmatprep.mubr.bf16.mxu0 0
        %1489 = vmatmul.mubr.bf16.gmra.mxu0 %v704
        %v1490 = vpop.f32.mrf.mxu0
        %v1491 = vadd.f32 %v1426, %v1490
        %v1492 = vpop.f32.mrf.mxu0
        %v1493 = vpop.f32.mrf.mxu0
        %v1494 = vadd.f32 %v1429, %v1493
        %v1495 = vpop.f32.mrf.mxu0
        %1496 = vmatprep.mubr.bf16.mxu0 0
        %1497 = vmatmul.mubr.bf16.gmra.mxu0 %v707
        %v1498 = vpop.f32.mrf.mxu0
        %v1499 = vadd.f32 %v1434, %v1498
        %v1500 = vpop.f32.mrf.mxu0
        %v1501 = vpop.f32.mrf.mxu0
        %v1502 = vadd.f32 %v1437, %v1501
        %v1503 = vpop.f32.mrf.mxu0
        %1504 = vdwg.mxu0
        %v1505 = vld [vmem:[#allocation11] sm:$0xf]
        %v1506 = vld [vmem:[#allocation11 + $0x4] sm:$0xf]
        %v1507 = vld [vmem:[#allocation11 + $0x8] sm:$0xf]
        %v1508 = vld [vmem:[#allocation11 + $0xc] sm:$0xf]
        %v1509 = vld [vmem:[#allocation11 + $0x10] sm:$0xf]
        %v1510 = vld [vmem:[#allocation11 + $0x14] sm:$0xf]
        %v1511 = vld [vmem:[#allocation11 + $0x18] sm:$0xf]
        %v1512 = vld [vmem:[#allocation11 + $0x1c] sm:$0xf]
        %v1513 = vld [vmem:[#allocation11 + $0x20] sm:$0xf]
        %v1514 = vld [vmem:[#allocation11 + $0x24] sm:$0xf]
        %v1515 = vld [vmem:[#allocation11 + $0x28] sm:$0xf]
        %v1516 = vld [vmem:[#allocation11 + $0x2c] sm:$0xf]
        %v1517 = vld [vmem:[#allocation11 + $0x30] sm:$0xf]
        %v1518 = vld [vmem:[#allocation11 + $0x34] sm:$0xf]
        %v1519 = vld [vmem:[#allocation11 + $0x38] sm:$0xf]
        %v1520 = vld [vmem:[#allocation11 + $0x3c] sm:$0xf]
        %v1521 = vld [vmem:[#allocation11 + $0x40] sm:$0xf]
        %v1522 = vld [vmem:[#allocation11 + $0x44] sm:$0xf]
        %v1523 = vld [vmem:[#allocation11 + $0x48] sm:$0xf]
        %v1524 = vld [vmem:[#allocation11 + $0x4c] sm:$0xf]
        %v1525 = vld [vmem:[#allocation11 + $0x50] sm:$0xf]
        %v1526 = vld [vmem:[#allocation11 + $0x54] sm:$0xf]
        %v1527 = vld [vmem:[#allocation11 + $0x58] sm:$0xf]
        %v1528 = vld [vmem:[#allocation11 + $0x5c] sm:$0xf]
        %v1529 = vld [vmem:[#allocation11 + $0x60] sm:$0xf]
        %v1530 = vld [vmem:[#allocation11 + $0x64] sm:$0xf]
        %v1531 = vld [vmem:[#allocation11 + $0x68] sm:$0xf]
        %v1532 = vld [vmem:[#allocation11 + $0x6c] sm:$0xf]
        %v1533 = vld [vmem:[#allocation11 + $0x70] sm:$0xf]
        %v1534 = vld [vmem:[#allocation11 + $0x74] sm:$0xf]
        %v1535 = vld [vmem:[#allocation11 + $0x78] sm:$0xf]
        %v1536 = vld [vmem:[#allocation11 + $0x7c] sm:$0xf]
        %v1537 = vld [vmem:[#allocation11 + $0x80] sm:$0xf]
        %v1538 = vld [vmem:[#allocation11 + $0x84] sm:$0xf]
        %v1539 = vld [vmem:[#allocation11 + $0x88] sm:$0xf]
        %v1540 = vld [vmem:[#allocation11 + $0x8c] sm:$0xf]
        %v1541 = vld [vmem:[#allocation11 + $0x90] sm:$0xf]
        %v1542 = vld [vmem:[#allocation11 + $0x94] sm:$0xf]
        %v1543 = vld [vmem:[#allocation11 + $0x98] sm:$0xf]
        %v1544 = vld [vmem:[#allocation11 + $0x9c] sm:$0xf]
        %v1545 = vld [vmem:[#allocation11 + $0xa0] sm:$0xf]
        %v1546 = vld [vmem:[#allocation11 + $0xa4] sm:$0xf]
        %v1547 = vld [vmem:[#allocation11 + $0xa8] sm:$0xf]
        %v1548 = vld [vmem:[#allocation11 + $0xac] sm:$0xf]
        %v1549 = vld [vmem:[#allocation11 + $0xb0] sm:$0xf]
        %v1550 = vld [vmem:[#allocation11 + $0xb4] sm:$0xf]
        %v1551 = vld [vmem:[#allocation11 + $0xb8] sm:$0xf]
        %v1552 = vld [vmem:[#allocation11 + $0xbc] sm:$0xf]
        %v1553 = vld [vmem:[#allocation12] sm:$0x1]
        %v1555 = vlaneseq
        %v1556 = vshrl.u32 %v1555, 7
        %v1557 = vsub.s32 0, %v1556
        %v1558 = vrot.slane %v1553, %v1557
        %v1608 = vunpack.c.l.b16 %v1505
        %v1609 = vunpack.c.l.b16 %v1506
        %v1610 = vunpack.c.l.b16 %v1507
        %v1611 = vunpack.c.l.b16 %v1508
        %v1612 = vunpack.c.l.b16 %v1509
        %v1613 = vunpack.c.l.b16 %v1510
        %v1614 = vunpack.c.l.b16 %v1511
        %v1615 = vunpack.c.l.b16 %v1512
        %v1616 = vunpack.c.l.b16 %v1513
        %v1617 = vunpack.c.l.b16 %v1514
        %v1618 = vunpack.c.l.b16 %v1515
        %v1619 = vunpack.c.l.b16 %v1516
        %v1620 = vunpack.c.l.b16 %v1517
        %v1621 = vunpack.c.l.b16 %v1518
        %v1622 = vunpack.c.l.b16 %v1519
        %v1623 = vunpack.c.l.b16 %v1520
        %v1624 = vunpack.c.l.b16 %v1521
        %v1625 = vunpack.c.l.b16 %v1522
        %v1626 = vunpack.c.l.b16 %v1523
        %v1627 = vunpack.c.l.b16 %v1524
        %v1628 = vunpack.c.l.b16 %v1525
        %v1629 = vunpack.c.l.b16 %v1526
        %v1630 = vunpack.c.l.b16 %v1527
        %v1631 = vunpack.c.l.b16 %v1528
        %v1632 = vunpack.c.l.b16 %v1529
        %v1633 = vunpack.c.l.b16 %v1530
        %v1634 = vunpack.c.l.b16 %v1531
        %v1635 = vunpack.c.l.b16 %v1532
        %v1636 = vunpack.c.l.b16 %v1533
        %v1637 = vunpack.c.l.b16 %v1534
        %v1638 = vunpack.c.l.b16 %v1535
        %v1639 = vunpack.c.l.b16 %v1536
        %v1640 = vunpack.c.l.b16 %v1537
        %v1641 = vunpack.c.l.b16 %v1538
        %v1642 = vunpack.c.l.b16 %v1539
        %v1643 = vunpack.c.l.b16 %v1540
        %v1644 = vunpack.c.l.b16 %v1541
        %v1645 = vunpack.c.l.b16 %v1542
        %v1646 = vunpack.c.l.b16 %v1543
        %v1647 = vunpack.c.l.b16 %v1544
        %v1648 = vunpack.c.l.b16 %v1545
        %v1649 = vunpack.c.l.b16 %v1546
        %v1650 = vunpack.c.l.b16 %v1547
        %v1651 = vunpack.c.l.b16 %v1548
        %v1652 = vunpack.c.l.b16 %v1549
        %v1653 = vunpack.c.l.b16 %v1550
        %v1654 = vunpack.c.l.b16 %v1551
        %v1655 = vunpack.c.l.b16 %v1552
        %v1656 = vpack.c.b16 %v1609, %v1608
        %v1657 = vpack.c.b16 %v1611, %v1610
        %v1658 = vpack.c.b16 %v1613, %v1612
        %v1659 = vpack.c.b16 %v1615, %v1614
        %v1660 = vpack.c.b16 %v1617, %v1616
        %v1661 = vpack.c.b16 %v1619, %v1618
        %v1662 = vpack.c.b16 %v1621, %v1620
        %v1663 = vpack.c.b16 %v1623, %v1622
        %v1664 = vpack.c.b16 %v1625, %v1624
        %v1665 = vpack.c.b16 %v1627, %v1626
        %v1666 = vpack.c.b16 %v1629, %v1628
        %v1667 = vpack.c.b16 %v1631, %v1630
        %v1668 = vpack.c.b16 %v1633, %v1632
        %v1669 = vpack.c.b16 %v1635, %v1634
        %v1670 = vpack.c.b16 %v1637, %v1636
        %v1671 = vpack.c.b16 %v1639, %v1638
        %v1672 = vpack.c.b16 %v1641, %v1640
        %v1673 = vpack.c.b16 %v1643, %v1642
        %v1674 = vpack.c.b16 %v1645, %v1644
        %v1675 = vpack.c.b16 %v1647, %v1646
        %v1676 = vpack.c.b16 %v1649, %v1648
        %v1677 = vpack.c.b16 %v1651, %v1650
        %v1678 = vpack.c.b16 %v1653, %v1652
        %v1679 = vpack.c.b16 %v1655, %v1654
        %1704 = vmatprep.subr.bf16.mxu0 0
        %1705 = vmatpush1.bf16.msra.mxu0 %v1663
        %1706 = vmatprep.subr.bf16.mxu0 0
        %1707 = vmatpush1.bf16.msra.mxu0 %v1662
        %1708 = vmatprep.subr.bf16.mxu0 0
        %1709 = vmatpush1.bf16.msra.mxu0 %v1661
        %1710 = vmatprep.subr.bf16.mxu0 0
        %1711 = vmatpush1.bf16.msra.mxu0 %v1660
        %1712 = vmatprep.subr.bf16.mxu0 0
        %1713 = vmatpush1.bf16.msra.mxu0 %v1659
        %1714 = vmatprep.subr.bf16.mxu0 0
        %1715 = vmatpush1.bf16.msra.mxu0 %v1658
        %1716 = vmatprep.subr.bf16.mxu0 0
        %1717 = vmatpush1.bf16.msra.mxu0 %v1657
        %1718 = vmatprep.subr.bf16.mxu0 0
        %1719 = vmatpush1.bf16.msra.mxu0 %v1656
        %1720 = vmatprep.subr.bf16.mxu0 0
        %1721 = vmatpush2.bf16.msra.mxu0 %v1671
        %1722 = vmatprep.subr.bf16.mxu0 0
        %1723 = vmatpush2.bf16.msra.mxu0 %v1670
        %1724 = vmatprep.subr.bf16.mxu0 0
        %1725 = vmatpush2.bf16.msra.mxu0 %v1669
        %1726 = vmatprep.subr.bf16.mxu0 0
        %1727 = vmatpush2.bf16.msra.mxu0 %v1668
        %1728 = vmatprep.subr.bf16.mxu0 0
        %1729 = vmatpush2.bf16.msra.mxu0 %v1667
        %1730 = vmatprep.subr.bf16.mxu0 0
        %1731 = vmatpush2.bf16.msra.mxu0 %v1666
        %1732 = vmatprep.subr.bf16.mxu0 0
        %1733 = vmatpush2.bf16.msra.mxu0 %v1665
        %1734 = vmatprep.subr.bf16.mxu0 0
        %1735 = vmatpush2.bf16.msra.mxu0 %v1664
        %1736 = vmatprep.mubr.bf16.mxu0 %v709
        %1737 = vmatmul.mubr.bf16.gmra.mxu0 %v708
        %v1738 = vpop.f32.mrf.mxu0
        %v1739 = vadd.f32 %v1558, %v1738
        %v1740 = vpop.f32.mrf.mxu0
        %v1741 = vpop.f32.mrf.mxu0
        %v1742 = vadd.f32 %v1558, %v1741
        %v1743 = vpop.f32.mrf.mxu0
        %1744 = vmatprep.mubr.bf16.mxu0 %v712
        %1745 = vmatmul.mubr.bf16.gmra.mxu0 %v711
        %v1746 = vpop.f32.mrf.mxu0
        %v1747 = vadd.f32 %v1558, %v1746
        %v1748 = vpop.f32.mrf.mxu0
        %v1749 = vpop.f32.mrf.mxu0
        %v1750 = vadd.f32 %v1558, %v1749
        %v1751 = vpop.f32.mrf.mxu0
        %1752 = vmatprep.mubr.bf16.mxu0 %v715
        %1753 = vmatmul.mubr.bf16.gmra.mxu0 %v714
        %v1754 = vpop.f32.mrf.mxu0
        %v1755 = vadd.f32 %v1558, %v1754
        %v1756 = vpop.f32.mrf.mxu0
        %v1757 = vpop.f32.mrf.mxu0
        %v1758 = vadd.f32 %v1558, %v1757
        %v1759 = vpop.f32.mrf.mxu0
        %1760 = vmatprep.mubr.bf16.mxu0 %v718
        %1761 = vmatmul.mubr.bf16.gmra.mxu0 %v717
        %v1762 = vpop.f32.mrf.mxu0
        %v1763 = vadd.f32 %v1558, %v1762
        %v1764 = vpop.f32.mrf.mxu0
        %v1765 = vpop.f32.mrf.mxu0
        %v1766 = vadd.f32 %v1558, %v1765
        %v1767 = vpop.f32.mrf.mxu0
        %1768 = vmatprep.mubr.bf16.mxu0 %v721
        %1769 = vmatmul.mubr.bf16.gmra.mxu0 %v720
        %v1770 = vpop.f32.mrf.mxu0
        %v1771 = vadd.f32 %v1558, %v1770
        %v1772 = vpop.f32.mrf.mxu0
        %v1773 = vpop.f32.mrf.mxu0
        %v1774 = vadd.f32 %v1558, %v1773
        %v1775 = vpop.f32.mrf.mxu0
        %1776 = vmatprep.mubr.bf16.mxu0 %v724
        %1777 = vmatmul.mubr.bf16.gmra.mxu0 %v723
        %v1778 = vpop.f32.mrf.mxu0
        %v1779 = vadd.f32 %v1558, %v1778
        %v1780 = vpop.f32.mrf.mxu0
        %v1781 = vpop.f32.mrf.mxu0
        %v1782 = vadd.f32 %v1558, %v1781
        %v1783 = vpop.f32.mrf.mxu0
        %1784 = vmatprep.mubr.bf16.mxu0 %v727
        %1785 = vmatmul.mubr.bf16.gmra.mxu0 %v726
        %v1786 = vpop.f32.mrf.mxu0
        %v1787 = vadd.f32 %v1558, %v1786
        %v1788 = vpop.f32.mrf.mxu0
        %v1789 = vpop.f32.mrf.mxu0
        %v1790 = vadd.f32 %v1558, %v1789
        %v1791 = vpop.f32.mrf.mxu0
        %1792 = vmatprep.mubr.bf16.mxu0 %v730
        %1793 = vmatmul.mubr.bf16.gmra.mxu0 %v729
        %v1794 = vpop.f32.mrf.mxu0
        %v1795 = vadd.f32 %v1558, %v1794
        %v1796 = vpop.f32.mrf.mxu0
        %v1797 = vpop.f32.mrf.mxu0
        %v1798 = vadd.f32 %v1558, %v1797
        %v1799 = vpop.f32.mrf.mxu0
        %1800 = vdwg.mxu0
        %1801 = vmatprep.subr.bf16.mxu0 0
        %1802 = vmatpush1.bf16.msra.mxu0 %v1679
        %1803 = vmatprep.subr.bf16.mxu0 0
        %1804 = vmatpush1.bf16.msra.mxu0 %v1678
        %1805 = vmatprep.subr.bf16.mxu0 0
        %1806 = vmatpush1.bf16.msra.mxu0 %v1677
        %1807 = vmatprep.subr.bf16.mxu0 0
        %1808 = vmatpush1.bf16.msra.mxu0 %v1676
        %1809 = vmatprep.subr.bf16.mxu0 0
        %1810 = vmatpush1.bf16.msra.mxu0 %v1675
        %1811 = vmatprep.subr.bf16.mxu0 0
        %1812 = vmatpush1.bf16.msra.mxu0 %v1674
        %1813 = vmatprep.subr.bf16.mxu0 0
        %1814 = vmatpush1.bf16.msra.mxu0 %v1673
        %1815 = vmatprep.subr.bf16.mxu0 0
        %1816 = vmatpush1.bf16.msra.mxu0 %v1672
        %1817 = vmatprep.subr.bf16.mxu0 0
        %1818 = vmatpush2.bf16.msra.mxu0 0
        %1819 = vmatprep.subr.bf16.mxu0 0
        %1820 = vmatpush2.bf16.msra.mxu0 0
        %1821 = vmatprep.subr.bf16.mxu0 0
        %1822 = vmatpush2.bf16.msra.mxu0 0
        %1823 = vmatprep.subr.bf16.mxu0 0
        %1824 = vmatpush2.bf16.msra.mxu0 0
        %1825 = vmatprep.subr.bf16.mxu0 0
        %1826 = vmatpush2.bf16.msra.mxu0 0
        %1827 = vmatprep.subr.bf16.mxu0 0
        %1828 = vmatpush2.bf16.msra.mxu0 0
        %1829 = vmatprep.subr.bf16.mxu0 0
        %1830 = vmatpush2.bf16.msra.mxu0 0
        %1831 = vmatprep.subr.bf16.mxu0 0
        %1832 = vmatpush2.bf16.msra.mxu0 0
        %1833 = vmatprep.mubr.bf16.mxu0 0
        %1834 = vmatmul.mubr.bf16.gmra.mxu0 %v710
        %v1835 = vpop.f32.mrf.mxu0
        %v1836 = vadd.f32 %v1739, %v1835
        %v1837 = vpop.f32.mrf.mxu0
        %v1838 = vpop.f32.mrf.mxu0
        %v1839 = vadd.f32 %v1742, %v1838
        %v1840 = vpop.f32.mrf.mxu0
        %1841 = vmatprep.mubr.bf16.mxu0 0
        %1842 = vmatmul.mubr.bf16.gmra.mxu0 %v713
        %v1843 = vpop.f32.mrf.mxu0
        %v1844 = vadd.f32 %v1747, %v1843
        %v1845 = vpop.f32.mrf.mxu0
        %v1846 = vpop.f32.mrf.mxu0
        %v1847 = vadd.f32 %v1750, %v1846
        %v1848 = vpop.f32.mrf.mxu0
        %1849 = vmatprep.mubr.bf16.mxu0 0
        %1850 = vmatmul.mubr.bf16.gmra.mxu0 %v716
        %v1851 = vpop.f32.mrf.mxu0
        %v1852 = vadd.f32 %v1755, %v1851
        %v1853 = vpop.f32.mrf.mxu0
        %v1854 = vpop.f32.mrf.mxu0
        %v1855 = vadd.f32 %v1758, %v1854
        %v1856 = vpop.f32.mrf.mxu0
        %1857 = vmatprep.mubr.bf16.mxu0 0
        %1858 = vmatmul.mubr.bf16.gmra.mxu0 %v719
        %v1859 = vpop.f32.mrf.mxu0
        %v1860 = vadd.f32 %v1763, %v1859
        %v1861 = vpop.f32.mrf.mxu0
        %v1862 = vpop.f32.mrf.mxu0
        %v1863 = vadd.f32 %v1766, %v1862
        %v1864 = vpop.f32.mrf.mxu0
        %1865 = vmatprep.mubr.bf16.mxu0 0
        %1866 = vmatmul.mubr.bf16.gmra.mxu0 %v722
        %v1867 = vpop.f32.mrf.mxu0
        %v1868 = vadd.f32 %v1771, %v1867
        %v1869 = vpop.f32.mrf.mxu0
        %v1870 = vpop.f32.mrf.mxu0
        %v1871 = vadd.f32 %v1774, %v1870
        %v1872 = vpop.f32.mrf.mxu0
        %1873 = vmatprep.mubr.bf16.mxu0 0
        %1874 = vmatmul.mubr.bf16.gmra.mxu0 %v725
        %v1875 = vpop.f32.mrf.mxu0
        %v1876 = vadd.f32 %v1779, %v1875
        %v1877 = vpop.f32.mrf.mxu0
        %v1878 = vpop.f32.mrf.mxu0
        %v1879 = vadd.f32 %v1782, %v1878
        %v1880 = vpop.f32.mrf.mxu0
        %1881 = vmatprep.mubr.bf16.mxu0 0
        %1882 = vmatmul.mubr.bf16.gmra.mxu0 %v728
        %v1883 = vpop.f32.mrf.mxu0
        %v1884 = vadd.f32 %v1787, %v1883
        %v1885 = vpop.f32.mrf.mxu0
        %v1886 = vpop.f32.mrf.mxu0
        %v1887 = vadd.f32 %v1790, %v1886
        %v1888 = vpop.f32.mrf.mxu0
        %1889 = vmatprep.mubr.bf16.mxu0 0
        %1890 = vmatmul.mubr.bf16.gmra.mxu0 %v731
        %v1891 = vpop.f32.mrf.mxu0
        %v1892 = vadd.f32 %v1795, %v1891
        %v1893 = vpop.f32.mrf.mxu0
        %v1894 = vpop.f32.mrf.mxu0
        %v1895 = vadd.f32 %v1798, %v1894
        %v1896 = vpop.f32.mrf.mxu0
        %1897 = vdwg.mxu0
        %v1898 = vld [vmem:[#allocation14] sm:$0xf]
        %v1899 = vld [vmem:[#allocation14 + $0x4] sm:$0xf]
        %v1900 = vld [vmem:[#allocation14 + $0x8] sm:$0xf]
        %v1901 = vld [vmem:[#allocation14 + $0xc] sm:$0xf]
        %v1902 = vld [vmem:[#allocation14 + $0x10] sm:$0xf]
        %v1903 = vld [vmem:[#allocation14 + $0x14] sm:$0xf]
        %v1904 = vld [vmem:[#allocation14 + $0x18] sm:$0xf]
        %v1905 = vld [vmem:[#allocation14 + $0x1c] sm:$0xf]
        %v1906 = vld [vmem:[#allocation14 + $0x20] sm:$0xf]
        %v1907 = vld [vmem:[#allocation14 + $0x24] sm:$0xf]
        %v1908 = vld [vmem:[#allocation14 + $0x28] sm:$0xf]
        %v1909 = vld [vmem:[#allocation14 + $0x2c] sm:$0xf]
        %v1910 = vld [vmem:[#allocation14 + $0x30] sm:$0xf]
        %v1911 = vld [vmem:[#allocation14 + $0x34] sm:$0xf]
        %v1912 = vld [vmem:[#allocation14 + $0x38] sm:$0xf]
        %v1913 = vld [vmem:[#allocation14 + $0x3c] sm:$0xf]
        %v1914 = vld [vmem:[#allocation14 + $0x40] sm:$0xf]
        %v1915 = vld [vmem:[#allocation14 + $0x44] sm:$0xf]
        %v1916 = vld [vmem:[#allocation14 + $0x48] sm:$0xf]
        %v1917 = vld [vmem:[#allocation14 + $0x4c] sm:$0xf]
        %v1918 = vld [vmem:[#allocation14 + $0x50] sm:$0xf]
        %v1919 = vld [vmem:[#allocation14 + $0x54] sm:$0xf]
        %v1920 = vld [vmem:[#allocation14 + $0x58] sm:$0xf]
        %v1921 = vld [vmem:[#allocation14 + $0x5c] sm:$0xf]
        %v1922 = vld [vmem:[#allocation14 + $0x60] sm:$0xf]
        %v1923 = vld [vmem:[#allocation14 + $0x64] sm:$0xf]
        %v1924 = vld [vmem:[#allocation14 + $0x68] sm:$0xf]
        %v1925 = vld [vmem:[#allocation14 + $0x6c] sm:$0xf]
        %v1926 = vld [vmem:[#allocation14 + $0x70] sm:$0xf]
        %v1927 = vld [vmem:[#allocation14 + $0x74] sm:$0xf]
        %v1928 = vld [vmem:[#allocation14 + $0x78] sm:$0xf]
        %v1929 = vld [vmem:[#allocation14 + $0x7c] sm:$0xf]
        %v1930 = vld [vmem:[#allocation14 + $0x80] sm:$0xf]
        %v1931 = vld [vmem:[#allocation14 + $0x84] sm:$0xf]
        %v1932 = vld [vmem:[#allocation14 + $0x88] sm:$0xf]
        %v1933 = vld [vmem:[#allocation14 + $0x8c] sm:$0xf]
        %v1934 = vld [vmem:[#allocation14 + $0x90] sm:$0xf]
        %v1935 = vld [vmem:[#allocation14 + $0x94] sm:$0xf]
        %v1936 = vld [vmem:[#allocation14 + $0x98] sm:$0xf]
        %v1937 = vld [vmem:[#allocation14 + $0x9c] sm:$0xf]
        %v1938 = vld [vmem:[#allocation14 + $0xa0] sm:$0xf]
        %v1939 = vld [vmem:[#allocation14 + $0xa4] sm:$0xf]
        %v1940 = vld [vmem:[#allocation14 + $0xa8] sm:$0xf]
        %v1941 = vld [vmem:[#allocation14 + $0xac] sm:$0xf]
        %v1942 = vld [vmem:[#allocation14 + $0xb0] sm:$0xf]
        %v1943 = vld [vmem:[#allocation14 + $0xb4] sm:$0xf]
        %v1944 = vld [vmem:[#allocation14 + $0xb8] sm:$0xf]
        %v1945 = vld [vmem:[#allocation14 + $0xbc] sm:$0xf]
        %v1946 = vld [vmem:[%s8] sm:$0x1]
        %v1948 = vlaneseq
        %v1949 = vshrl.u32 %v1948, 7
        %v1950 = vsub.s32 0, %v1949
        %v1951 = vrot.slane %v1946, %v1950
        %v2001 = vunpack.c.l.b16 %v1898
        %v2002 = vunpack.c.l.b16 %v1899
        %v2003 = vunpack.c.l.b16 %v1900
        %v2004 = vunpack.c.l.b16 %v1901
        %v2005 = vunpack.c.l.b16 %v1902
        %v2006 = vunpack.c.l.b16 %v1903
        %v2007 = vunpack.c.l.b16 %v1904
        %v2008 = vunpack.c.l.b16 %v1905
        %v2009 = vunpack.c.l.b16 %v1906
        %v2010 = vunpack.c.l.b16 %v1907
        %v2011 = vunpack.c.l.b16 %v1908
        %v2012 = vunpack.c.l.b16 %v1909
        %v2013 = vunpack.c.l.b16 %v1910
        %v2014 = vunpack.c.l.b16 %v1911
        %v2015 = vunpack.c.l.b16 %v1912
        %v2016 = vunpack.c.l.b16 %v1913
        %v2017 = vunpack.c.l.b16 %v1914
        %v2018 = vunpack.c.l.b16 %v1915
        %v2019 = vunpack.c.l.b16 %v1916
        %v2020 = vunpack.c.l.b16 %v1917
        %v2021 = vunpack.c.l.b16 %v1918
        %v2022 = vunpack.c.l.b16 %v1919
        %v2023 = vunpack.c.l.b16 %v1920
        %v2024 = vunpack.c.l.b16 %v1921
        %v2025 = vunpack.c.l.b16 %v1922
        %v2026 = vunpack.c.l.b16 %v1923
        %v2027 = vunpack.c.l.b16 %v1924
        %v2028 = vunpack.c.l.b16 %v1925
        %v2029 = vunpack.c.l.b16 %v1926
        %v2030 = vunpack.c.l.b16 %v1927
        %v2031 = vunpack.c.l.b16 %v1928
        %v2032 = vunpack.c.l.b16 %v1929
        %v2033 = vunpack.c.l.b16 %v1930
        %v2034 = vunpack.c.l.b16 %v1931
        %v2035 = vunpack.c.l.b16 %v1932
        %v2036 = vunpack.c.l.b16 %v1933
        %v2037 = vunpack.c.l.b16 %v1934
        %v2038 = vunpack.c.l.b16 %v1935
        %v2039 = vunpack.c.l.b16 %v1936
        %v2040 = vunpack.c.l.b16 %v1937
        %v2041 = vunpack.c.l.b16 %v1938
        %v2042 = vunpack.c.l.b16 %v1939
        %v2043 = vunpack.c.l.b16 %v1940
        %v2044 = vunpack.c.l.b16 %v1941
        %v2045 = vunpack.c.l.b16 %v1942
        %v2046 = vunpack.c.l.b16 %v1943
        %v2047 = vunpack.c.l.b16 %v1944
        %v2048 = vunpack.c.l.b16 %v1945
        %v2049 = vpack.c.b16 %v2002, %v2001
        %v2050 = vpack.c.b16 %v2004, %v2003
        %v2051 = vpack.c.b16 %v2006, %v2005
        %v2052 = vpack.c.b16 %v2008, %v2007
        %v2053 = vpack.c.b16 %v2010, %v2009
        %v2054 = vpack.c.b16 %v2012, %v2011
        %v2055 = vpack.c.b16 %v2014, %v2013
        %v2056 = vpack.c.b16 %v2016, %v2015
        %v2057 = vpack.c.b16 %v2018, %v2017
        %v2058 = vpack.c.b16 %v2020, %v2019
        %v2059 = vpack.c.b16 %v2022, %v2021
        %v2060 = vpack.c.b16 %v2024, %v2023
        %v2061 = vpack.c.b16 %v2026, %v2025
        %v2062 = vpack.c.b16 %v2028, %v2027
        %v2063 = vpack.c.b16 %v2030, %v2029
        %v2064 = vpack.c.b16 %v2032, %v2031
        %v2065 = vpack.c.b16 %v2034, %v2033
        %v2066 = vpack.c.b16 %v2036, %v2035
        %v2067 = vpack.c.b16 %v2038, %v2037
        %v2068 = vpack.c.b16 %v2040, %v2039
        %v2069 = vpack.c.b16 %v2042, %v2041
        %v2070 = vpack.c.b16 %v2044, %v2043
        %v2071 = vpack.c.b16 %v2046, %v2045
        %v2072 = vpack.c.b16 %v2048, %v2047
        %2097 = vmatprep.subr.bf16.mxu0 0
        %2098 = vmatpush1.bf16.msra.mxu0 %v2056
        %2099 = vmatprep.subr.bf16.mxu0 0
        %2100 = vmatpush1.bf16.msra.mxu0 %v2055
        %2101 = vmatprep.subr.bf16.mxu0 0
        %2102 = vmatpush1.bf16.msra.mxu0 %v2054
        %2103 = vmatprep.subr.bf16.mxu0 0
        %2104 = vmatpush1.bf16.msra.mxu0 %v2053
        %2105 = vmatprep.subr.bf16.mxu0 0
        %2106 = vmatpush1.bf16.msra.mxu0 %v2052
        %2107 = vmatprep.subr.bf16.mxu0 0
        %2108 = vmatpush1.bf16.msra.mxu0 %v2051
        %2109 = vmatprep.subr.bf16.mxu0 0
        %2110 = vmatpush1.bf16.msra.mxu0 %v2050
        %2111 = vmatprep.subr.bf16.mxu0 0
        %2112 = vmatpush1.bf16.msra.mxu0 %v2049
        %2113 = vmatprep.subr.bf16.mxu0 0
        %2114 = vmatpush2.bf16.msra.mxu0 %v2064
        %2115 = vmatprep.subr.bf16.mxu0 0
        %2116 = vmatpush2.bf16.msra.mxu0 %v2063
        %2117 = vmatprep.subr.bf16.mxu0 0
        %2118 = vmatpush2.bf16.msra.mxu0 %v2062
        %2119 = vmatprep.subr.bf16.mxu0 0
        %2120 = vmatpush2.bf16.msra.mxu0 %v2061
        %2121 = vmatprep.subr.bf16.mxu0 0
        %2122 = vmatpush2.bf16.msra.mxu0 %v2060
        %2123 = vmatprep.subr.bf16.mxu0 0
        %2124 = vmatpush2.bf16.msra.mxu0 %v2059
        %2125 = vmatprep.subr.bf16.mxu0 0
        %2126 = vmatpush2.bf16.msra.mxu0 %v2058
        %2127 = vmatprep.subr.bf16.mxu0 0
        %2128 = vmatpush2.bf16.msra.mxu0 %v2057
        %2129 = vmatprep.mubr.bf16.mxu0 %v709
        %2130 = vmatmul.mubr.bf16.gmra.mxu0 %v708
        %v2131 = vpop.f32.mrf.mxu0
        %v2132 = vadd.f32 %v1951, %v2131
        %v2133 = vpop.f32.mrf.mxu0
        %v2134 = vpop.f32.mrf.mxu0
        %v2135 = vadd.f32 %v1951, %v2134
        %v2136 = vpop.f32.mrf.mxu0
        %2137 = vmatprep.mubr.bf16.mxu0 %v712
        %2138 = vmatmul.mubr.bf16.gmra.mxu0 %v711
        %v2139 = vpop.f32.mrf.mxu0
        %v2140 = vadd.f32 %v1951, %v2139
        %v2141 = vpop.f32.mrf.mxu0
        %v2142 = vpop.f32.mrf.mxu0
        %v2143 = vadd.f32 %v1951, %v2142
        %v2144 = vpop.f32.mrf.mxu0
        %2145 = vmatprep.mubr.bf16.mxu0 %v715
        %2146 = vmatmul.mubr.bf16.gmra.mxu0 %v714
        %v2147 = vpop.f32.mrf.mxu0
        %v2148 = vadd.f32 %v1951, %v2147
        %v2149 = vpop.f32.mrf.mxu0
        %v2150 = vpop.f32.mrf.mxu0
        %v2151 = vadd.f32 %v1951, %v2150
        %v2152 = vpop.f32.mrf.mxu0
        %2153 = vmatprep.mubr.bf16.mxu0 %v718
        %2154 = vmatmul.mubr.bf16.gmra.mxu0 %v717
        %v2155 = vpop.f32.mrf.mxu0
        %v2156 = vadd.f32 %v1951, %v2155
        %v2157 = vpop.f32.mrf.mxu0
        %v2158 = vpop.f32.mrf.mxu0
        %v2159 = vadd.f32 %v1951, %v2158
        %v2160 = vpop.f32.mrf.mxu0
        %2161 = vmatprep.mubr.bf16.mxu0 %v721
        %2162 = vmatmul.mubr.bf16.gmra.mxu0 %v720
        %v2163 = vpop.f32.mrf.mxu0
        %v2164 = vadd.f32 %v1951, %v2163
        %v2165 = vpop.f32.mrf.mxu0
        %v2166 = vpop.f32.mrf.mxu0
        %v2167 = vadd.f32 %v1951, %v2166
        %v2168 = vpop.f32.mrf.mxu0
        %2169 = vmatprep.mubr.bf16.mxu0 %v724
        %2170 = vmatmul.mubr.bf16.gmra.mxu0 %v723
        %v2171 = vpop.f32.mrf.mxu0
        %v2172 = vadd.f32 %v1951, %v2171
        %v2173 = vpop.f32.mrf.mxu0
        %v2174 = vpop.f32.mrf.mxu0
        %v2175 = vadd.f32 %v1951, %v2174
        %v2176 = vpop.f32.mrf.mxu0
        %2177 = vmatprep.mubr.bf16.mxu0 %v727
        %2178 = vmatmul.mubr.bf16.gmra.mxu0 %v726
        %v2179 = vpop.f32.mrf.mxu0
        %v2180 = vadd.f32 %v1951, %v2179
        %v2181 = vpop.f32.mrf.mxu0
        %v2182 = vpop.f32.mrf.mxu0
        %v2183 = vadd.f32 %v1951, %v2182
        %v2184 = vpop.f32.mrf.mxu0
        %2185 = vmatprep.mubr.bf16.mxu0 %v730
        %2186 = vmatmul.mubr.bf16.gmra.mxu0 %v729
        %v2187 = vpop.f32.mrf.mxu0
        %v2188 = vadd.f32 %v1951, %v2187
        %v2189 = vpop.f32.mrf.mxu0
        %v2190 = vpop.f32.mrf.mxu0
        %v2191 = vadd.f32 %v1951, %v2190
        %v2192 = vpop.f32.mrf.mxu0
        %2193 = vdwg.mxu0
        %2194 = vmatprep.subr.bf16.mxu0 0
        %2195 = vmatpush1.bf16.msra.mxu0 %v2072
        %2196 = vmatprep.subr.bf16.mxu0 0
        %2197 = vmatpush1.bf16.msra.mxu0 %v2071
        %2198 = vmatprep.subr.bf16.mxu0 0
        %2199 = vmatpush1.bf16.msra.mxu0 %v2070
        %2200 = vmatprep.subr.bf16.mxu0 0
        %2201 = vmatpush1.bf16.msra.mxu0 %v2069
        %2202 = vmatprep.subr.bf16.mxu0 0
        %2203 = vmatpush1.bf16.msra.mxu0 %v2068
        %2204 = vmatprep.subr.bf16.mxu0 0
        %2205 = vmatpush1.bf16.msra.mxu0 %v2067
        %2206 = vmatprep.subr.bf16.mxu0 0
        %2207 = vmatpush1.bf16.msra.mxu0 %v2066
        %2208 = vmatprep.subr.bf16.mxu0 0
        %2209 = vmatpush1.bf16.msra.mxu0 %v2065
        %2210 = vmatprep.subr.bf16.mxu0 0
        %2211 = vmatpush2.bf16.msra.mxu0 0
        %2212 = vmatprep.subr.bf16.mxu0 0
        %2213 = vmatpush2.bf16.msra.mxu0 0
        %2214 = vmatprep.subr.bf16.mxu0 0
        %2215 = vmatpush2.bf16.msra.mxu0 0
        %2216 = vmatprep.subr.bf16.mxu0 0
        %2217 = vmatpush2.bf16.msra.mxu0 0
        %2218 = vmatprep.subr.bf16.mxu0 0
        %2219 = vmatpush2.bf16.msra.mxu0 0
        %2220 = vmatprep.subr.bf16.mxu0 0
        %2221 = vmatpush2.bf16.msra.mxu0 0
        %2222 = vmatprep.subr.bf16.mxu0 0
        %2223 = vmatpush2.bf16.msra.mxu0 0
        %2224 = vmatprep.subr.bf16.mxu0 0
        %2225 = vmatpush2.bf16.msra.mxu0 0
        %2226 = vmatprep.mubr.bf16.mxu0 0
        %2227 = vmatmul.mubr.bf16.gmra.mxu0 %v710
        %v2228 = vpop.f32.mrf.mxu0
        %v2229 = vadd.f32 %v2132, %v2228
        %v2230 = vpop.f32.mrf.mxu0
        %v2231 = vpop.f32.mrf.mxu0
        %v2232 = vadd.f32 %v2135, %v2231
        %v2233 = vpop.f32.mrf.mxu0
        %2234 = vmatprep.mubr.bf16.mxu0 0
        %2235 = vmatmul.mubr.bf16.gmra.mxu0 %v713
        %v2236 = vpop.f32.mrf.mxu0
        %v2237 = vadd.f32 %v2140, %v2236
        %v2238 = vpop.f32.mrf.mxu0
        %v2239 = vpop.f32.mrf.mxu0
        %v2240 = vadd.f32 %v2143, %v2239
        %v2241 = vpop.f32.mrf.mxu0
        %2242 = vmatprep.mubr.bf16.mxu0 0
        %2243 = vmatmul.mubr.bf16.gmra.mxu0 %v716
        %v2244 = vpop.f32.mrf.mxu0
        %v2245 = vadd.f32 %v2148, %v2244
        %v2246 = vpop.f32.mrf.mxu0
        %v2247 = vpop.f32.mrf.mxu0
        %v2248 = vadd.f32 %v2151, %v2247
        %v2249 = vpop.f32.mrf.mxu0
        %2250 = vmatprep.mubr.bf16.mxu0 0
        %2251 = vmatmul.mubr.bf16.gmra.mxu0 %v719
        %v2252 = vpop.f32.mrf.mxu0
        %v2253 = vadd.f32 %v2156, %v2252
        %v2254 = vpop.f32.mrf.mxu0
        %v2255 = vpop.f32.mrf.mxu0
        %v2256 = vadd.f32 %v2159, %v2255
        %v2257 = vpop.f32.mrf.mxu0
        %2258 = vmatprep.mubr.bf16.mxu0 0
        %2259 = vmatmul.mubr.bf16.gmra.mxu0 %v722
        %v2260 = vpop.f32.mrf.mxu0
        %v2261 = vadd.f32 %v2164, %v2260
        %v2262 = vpop.f32.mrf.mxu0
        %v2263 = vpop.f32.mrf.mxu0
        %v2264 = vadd.f32 %v2167, %v2263
        %v2265 = vpop.f32.mrf.mxu0
        %2266 = vmatprep.mubr.bf16.mxu0 0
        %2267 = vmatmul.mubr.bf16.gmra.mxu0 %v725
        %v2268 = vpop.f32.mrf.mxu0
        %v2269 = vadd.f32 %v2172, %v2268
        %v2270 = vpop.f32.mrf.mxu0
        %v2271 = vpop.f32.mrf.mxu0
        %v2272 = vadd.f32 %v2175, %v2271
        %v2273 = vpop.f32.mrf.mxu0
        %2274 = vmatprep.mubr.bf16.mxu0 0
        %2275 = vmatmul.mubr.bf16.gmra.mxu0 %v728
        %v2276 = vpop.f32.mrf.mxu0
        %v2277 = vadd.f32 %v2180, %v2276
        %v2278 = vpop.f32.mrf.mxu0
        %v2279 = vpop.f32.mrf.mxu0
        %v2280 = vadd.f32 %v2183, %v2279
        %v2281 = vpop.f32.mrf.mxu0
        %2282 = vmatprep.mubr.bf16.mxu0 0
        %2283 = vmatmul.mubr.bf16.gmra.mxu0 %v731
        %v2284 = vpop.f32.mrf.mxu0
        %v2285 = vadd.f32 %v2188, %v2284
        %v2286 = vpop.f32.mrf.mxu0
        %v2287 = vpop.f32.mrf.mxu0
        %v2288 = vadd.f32 %v2191, %v2287
        %v2289 = vpop.f32.mrf.mxu0
        %2290 = vdwg.mxu0
        %v2291 = vmul.f32 %v1337, 0.088388346
        %v2292 = vmul.f32 %v1339, 0.088388346
        %v2293 = vmul.f32 %v1475, 0.088388346
        %v2294 = vmul.f32 %v1341, 0.088388346
        %v2295 = vmul.f32 %v1343, 0.088388346
        %v2296 = vmul.f32 %v1478, 0.088388346
        %v2297 = vmul.f32 %v1347, 0.088388346
        %v2298 = vmul.f32 %v1349, 0.088388346
        %v2299 = vmul.f32 %v1483, 0.088388346
        %v2300 = vmul.f32 %v1351, 0.088388346
        %v2301 = vmul.f32 %v1353, 0.088388346
        %v2302 = vmul.f32 %v1486, 0.088388346
        %v2303 = vmul.f32 %v1357, 0.088388346
        %v2304 = vmul.f32 %v1359, 0.088388346
        %v2305 = vmul.f32 %v1491, 0.088388346
        %v2306 = vmul.f32 %v1361, 0.088388346
        %v2307 = vmul.f32 %v1363, 0.088388346
        %v2308 = vmul.f32 %v1494, 0.088388346
        %v2309 = vmul.f32 %v1367, 0.088388346
        %v2310 = vmul.f32 %v1369, 0.088388346
        %v2311 = vmul.f32 %v1499, 0.088388346
        %v2312 = vmul.f32 %v1371, 0.088388346
        %v2313 = vmul.f32 %v1373, 0.088388346
        %v2314 = vmul.f32 %v1502, 0.088388346
        %v2315 = vpack.c.bf16 %v2294, %v2291
        %v2316 = vpack.c.bf16 %v2295, %v2292
        %v2317 = vpack.c.bf16 %v2296, %v2293
        %v2318 = vpack.c.bf16 %v2300, %v2297
        %v2319 = vpack.c.bf16 %v2301, %v2298
        %v2320 = vpack.c.bf16 %v2302, %v2299
        %v2321 = vpack.c.bf16 %v2306, %v2303
        %v2322 = vpack.c.bf16 %v2307, %v2304
        %v2323 = vpack.c.bf16 %v2308, %v2305
        %v2324 = vpack.c.bf16 %v2312, %v2309
        %v2325 = vpack.c.bf16 %v2313, %v2310
        %v2326 = vpack.c.bf16 %v2314, %v2311
        %v2327 = vpack.c.bf16 %v1839, %v1836
        %v2328 = vpack.c.bf16 %v1847, %v1844
        %v2329 = vpack.c.bf16 %v1855, %v1852
        %v2330 = vpack.c.bf16 %v1863, %v1860
        %v2331 = vpack.c.bf16 %v1871, %v1868
        %v2332 = vpack.c.bf16 %v1879, %v1876
        %v2333 = vpack.c.bf16 %v1887, %v1884
        %v2334 = vpack.c.bf16 %v1895, %v1892
        %v2335 = vpack.c.bf16 %v2232, %v2229
        %v2336 = vpack.c.bf16 %v2240, %v2237
        %v2337 = vpack.c.bf16 %v2248, %v2245
        %v2338 = vpack.c.bf16 %v2256, %v2253
        %v2339 = vpack.c.bf16 %v2264, %v2261
        %v2340 = vpack.c.bf16 %v2272, %v2269
        %v2341 = vpack.c.bf16 %v2280, %v2277
        %v2342 = vpack.c.bf16 %v2288, %v2285
        %v2344 = vlaneseq
        %v2345 = vshrl.u32 %v2344, 7
        %v2346 = vsub.s32 0, %v2345
        %v2347 = vrot.slane %v695, %v2346
        %2349 = vmatprep.subr.bf16.mxu0 0
        %2350 = vmatpush1.bf16.xpose.msra.mxu0 %v2334
        %2351 = vmatprep.subr.bf16.mxu0 0
        %2352 = vmatpush1.bf16.xpose.msra.mxu0 %v2333
        %2353 = vmatprep.subr.bf16.mxu0 0
        %2354 = vmatpush1.bf16.xpose.msra.mxu0 %v2332
        %2355 = vmatprep.subr.bf16.mxu0 0
        %2356 = vmatpush1.bf16.xpose.msra.mxu0 %v2331
        %2357 = vmatprep.subr.bf16.mxu0 0
        %2358 = vmatpush1.bf16.xpose.msra.mxu0 %v2330
        %2359 = vmatprep.subr.bf16.mxu0 0
        %2360 = vmatpush1.bf16.xpose.msra.mxu0 %v2329
        %2361 = vmatprep.subr.bf16.mxu0 0
        %2362 = vmatpush1.bf16.xpose.msra.mxu0 %v2328
        %2363 = vmatprep.subr.bf16.mxu0 0
        %2364 = vmatpush1.bf16.xpose.msra.mxu0 %v2327
        %2365 = vmatprep.subr.bf16.mxu0 0
        %2366 = vmatpush2.bf16.xpose.msra.mxu0 0
        %2367 = vmatprep.subr.bf16.mxu0 0
        %2368 = vmatpush2.bf16.xpose.msra.mxu0 0
        %2369 = vmatprep.subr.bf16.mxu0 0
        %2370 = vmatpush2.bf16.xpose.msra.mxu0 0
        %2371 = vmatprep.subr.bf16.mxu0 0
        %2372 = vmatpush2.bf16.xpose.msra.mxu0 0
        %2373 = vmatprep.subr.bf16.mxu0 0
        %2374 = vmatpush2.bf16.xpose.msra.mxu0 0
        %2375 = vmatprep.subr.bf16.mxu0 0
        %2376 = vmatpush2.bf16.xpose.msra.mxu0 0
        %2377 = vmatprep.subr.bf16.mxu0 0
        %2378 = vmatpush2.bf16.xpose.msra.mxu0 0
        %2379 = vmatprep.subr.bf16.mxu0 0
        %2380 = vmatpush2.bf16.xpose.msra.mxu0 0
        %2381 = vmatprep.mubr.bf16.mxu0 0
        %2382 = vmatmul.mubr.bf16.gmra.mxu0 %v2315
        %v2383 = vpop.f32.mrf.mxu0
        %v2384 = vadd.f32 %v2347, %v2383
        %v2385 = vpop.f32.mrf.mxu0
        %v2386 = vpop.f32.mrf.mxu0
        %v2387 = vadd.f32 %v2347, %v2386
        %v2388 = vpop.f32.mrf.mxu0
        %2389 = vmatprep.mubr.bf16.mxu0 0
        %2390 = vmatmul.mubr.bf16.gmra.mxu0 %v2318
        %v2391 = vpop.f32.mrf.mxu0
        %v2392 = vadd.f32 %v2347, %v2391
        %v2393 = vpop.f32.mrf.mxu0
        %v2394 = vpop.f32.mrf.mxu0
        %v2395 = vadd.f32 %v2347, %v2394
        %v2396 = vpop.f32.mrf.mxu0
        %2397 = vmatprep.mubr.bf16.mxu0 0
        %2398 = vmatmul.mubr.bf16.gmra.mxu0 %v2321
        %v2399 = vpop.f32.mrf.mxu0
        %v2400 = vadd.f32 %v2347, %v2399
        %v2401 = vpop.f32.mrf.mxu0
        %v2402 = vpop.f32.mrf.mxu0
        %v2403 = vadd.f32 %v2347, %v2402
        %v2404 = vpop.f32.mrf.mxu0
        %2405 = vmatprep.mubr.bf16.mxu0 0
        %2406 = vmatmul.mubr.bf16.gmra.mxu0 %v2324
        %v2407 = vpop.f32.mrf.mxu0
        %v2408 = vadd.f32 %v2347, %v2407
        %v2409 = vpop.f32.mrf.mxu0
        %v2410 = vpop.f32.mrf.mxu0
        %v2411 = vadd.f32 %v2347, %v2410
        %v2412 = vpop.f32.mrf.mxu0
        %2413 = vdwg.mxu0
        %2414 = vmax.xlane.f32.xlu0 %v2384
        %v2415 = vpop.xlane.xlu0 %2414
        %2416 = vmax.xlane.f32.xlu0 %v2387
        %v2417 = vpop.xlane.xlu0 %2416
        %2418 = vmax.xlane.f32.xlu0 %v2392
        %v2419 = vpop.xlane.xlu0 %2418
        %2420 = vmax.xlane.f32.xlu0 %v2395
        %v2421 = vpop.xlane.xlu0 %2420
        %2422 = vmax.xlane.f32.xlu0 %v2400
        %v2423 = vpop.xlane.xlu0 %2422
        %2424 = vmax.xlane.f32.xlu0 %v2403
        %v2425 = vpop.xlane.xlu0 %2424
        %2426 = vmax.xlane.f32.xlu0 %v2408
        %v2427 = vpop.xlane.xlu0 %2426
        %2428 = vmax.xlane.f32.xlu0 %v2411
        %v2429 = vpop.xlane.xlu0 %2428
        %v2430 = vsub.f32 %v2384, %v2415
        %v2431 = vsub.f32 %v2387, %v2417
        %v2432 = vsub.f32 %v2392, %v2419
        %v2433 = vsub.f32 %v2395, %v2421
        %v2434 = vsub.f32 %v2400, %v2423
        %v2435 = vsub.f32 %v2403, %v2425
        %v2436 = vsub.f32 %v2408, %v2427
        %v2437 = vsub.f32 %v2411, %v2429
        %v2438 = vmul.f32 %v2430, 1.442695
        %v2439 = vpow.pop %v2438
        %v2440 = vmul.f32 %v2431, 1.442695
        %v2441 = vpow.pop %v2440
        %v2442 = vmul.f32 %v2432, 1.442695
        %v2443 = vpow.pop %v2442
        %v2444 = vmul.f32 %v2433, 1.442695
        %v2445 = vpow.pop %v2444
        %v2446 = vmul.f32 %v2434, 1.442695
        %v2447 = vpow.pop %v2446
        %v2448 = vmul.f32 %v2435, 1.442695
        %v2449 = vpow.pop %v2448
        %v2450 = vmul.f32 %v2436, 1.442695
        %v2451 = vpow.pop %v2450
        %v2452 = vmul.f32 %v2437, 1.442695
        %v2453 = vpow.pop %v2452
        %2454 = vadd.xlane.f32.xlu0 %v2439
        %v2455 = vpop.xlane.xlu0 %2454
        %2456 = vadd.xlane.f32.xlu0 %v2441
        %v2457 = vpop.xlane.xlu0 %2456
        %2458 = vadd.xlane.f32.xlu0 %v2443
        %v2459 = vpop.xlane.xlu0 %2458
        %2460 = vadd.xlane.f32.xlu0 %v2445
        %v2461 = vpop.xlane.xlu0 %2460
        %2462 = vadd.xlane.f32.xlu0 %v2447
        %v2463 = vpop.xlane.xlu0 %2462
        %2464 = vadd.xlane.f32.xlu0 %v2449
        %v2465 = vpop.xlane.xlu0 %2464
        %2466 = vadd.xlane.f32.xlu0 %v2451
        %v2467 = vpop.xlane.xlu0 %2466
        %2468 = vadd.xlane.f32.xlu0 %v2453
        %v2469 = vpop.xlane.xlu0 %2468
        %v2470 = vrcp.pop %v2455
        %v2471 = vrcp.pop %v2457
        %v2472 = vrcp.pop %v2459
        %v2473 = vrcp.pop %v2461
        %v2474 = vrcp.pop %v2463
        %v2475 = vrcp.pop %v2465
        %v2476 = vrcp.pop %v2467
        %v2477 = vrcp.pop %v2469
        %v2478 = vmul.f32 %v2439, %v2470
        %v2479 = vmul.f32 %v2441, %v2471
        %v2480 = vmul.f32 %v2443, %v2472
        %v2481 = vmul.f32 %v2445, %v2473
        %v2482 = vmul.f32 %v2447, %v2474
        %v2483 = vmul.f32 %v2449, %v2475
        %v2484 = vmul.f32 %v2451, %v2476
        %v2485 = vmul.f32 %v2453, %v2477
        %v2486 = vpack.c.bf16 %v2479, %v2478
        %v2487 = vpack.c.bf16 %v2481, %v2480
        %v2488 = vpack.c.bf16 %v2483, %v2482
        %v2489 = vpack.c.bf16 %v2485, %v2484
        %2490 = vmatprep.subr.bf16.mxu0 0
        %2491 = vmatpush1.bf16.msra.mxu0 %v2342
        %2492 = vmatprep.subr.bf16.mxu0 0
        %2493 = vmatpush1.bf16.msra.mxu0 %v2341
        %2494 = vmatprep.subr.bf16.mxu0 0
        %2495 = vmatpush1.bf16.msra.mxu0 %v2340
        %2496 = vmatprep.subr.bf16.mxu0 0
        %2497 = vmatpush1.bf16.msra.mxu0 %v2339
        %2498 = vmatprep.subr.bf16.mxu0 0
        %2499 = vmatpush1.bf16.msra.mxu0 %v2338
        %2500 = vmatprep.subr.bf16.mxu0 0
        %2501 = vmatpush1.bf16.msra.mxu0 %v2337
        %2502 = vmatprep.subr.bf16.mxu0 0
        %2503 = vmatpush1.bf16.msra.mxu0 %v2336
        %2504 = vmatprep.subr.bf16.mxu0 0
        %2505 = vmatpush1.bf16.msra.mxu0 %v2335
        %2506 = vmatprep.subr.bf16.mxu0 0
        %2507 = vmatpush2.bf16.msra.mxu0 0
        %2508 = vmatprep.subr.bf16.mxu0 0
        %2509 = vmatpush2.bf16.msra.mxu0 0
        %2510 = vmatprep.subr.bf16.mxu0 0
        %2511 = vmatpush2.bf16.msra.mxu0 0
        %2512 = vmatprep.subr.bf16.mxu0 0
        %2513 = vmatpush2.bf16.msra.mxu0 0
        %2514 = vmatprep.subr.bf16.mxu0 0
        %2515 = vmatpush2.bf16.msra.mxu0 0
        %2516 = vmatprep.subr.bf16.mxu0 0
        %2517 = vmatpush2.bf16.msra.mxu0 0
        %2518 = vmatprep.subr.bf16.mxu0 0
        %2519 = vmatpush2.bf16.msra.mxu0 0
        %2520 = vmatprep.subr.bf16.mxu0 0
        %2521 = vmatpush2.bf16.msra.mxu0 0
        %2522 = vmatprep.mubr.bf16.mxu0 0
        %2523 = vmatmul.mubr.bf16.gmra.mxu0 %v2486
        %v2524 = vpop.f32.mrf.mxu0
        %v2525 = vadd.f32 0.0, %v2524
        %v2526 = vpop.f32.mrf.mxu0
        %v2527 = vpop.f32.mrf.mxu0
        %v2528 = vadd.f32 0.0, %v2527
        %v2529 = vpop.f32.mrf.mxu0
        %2530 = vmatprep.mubr.bf16.mxu0 0
        %2531 = vmatmul.mubr.bf16.gmra.mxu0 %v2487
        %v2532 = vpop.f32.mrf.mxu0
        %v2533 = vadd.f32 0.0, %v2532
        %v2534 = vpop.f32.mrf.mxu0
        %v2535 = vpop.f32.mrf.mxu0
        %v2536 = vadd.f32 0.0, %v2535
        %v2537 = vpop.f32.mrf.mxu0
        %2538 = vmatprep.mubr.bf16.mxu0 0
        %2539 = vmatmul.mubr.bf16.gmra.mxu0 %v2488
        %v2540 = vpop.f32.mrf.mxu0
        %v2541 = vadd.f32 0.0, %v2540
        %v2542 = vpop.f32.mrf.mxu0
        %v2543 = vpop.f32.mrf.mxu0
        %v2544 = vadd.f32 0.0, %v2543
        %v2545 = vpop.f32.mrf.mxu0
        %2546 = vmatprep.mubr.bf16.mxu0 0
        %2547 = vmatmul.mubr.bf16.gmra.mxu0 %v2489
        %v2548 = vpop.f32.mrf.mxu0
        %v2549 = vadd.f32 0.0, %v2548
        %v2550 = vpop.f32.mrf.mxu0
        %v2551 = vpop.f32.mrf.mxu0
        %v2552 = vadd.f32 0.0, %v2551
        %v2553 = vpop.f32.mrf.mxu0
        %2554 = vdwg.mxu0
        %v2555 = vpack.c.bf16 %v2528, %v2525
        %v2556 = vpack.c.bf16 %v2536, %v2533
        %v2557 = vpack.c.bf16 %v2544, %v2541
        %v2558 = vpack.c.bf16 %v2552, %v2549
        %v2563 = vunpack.c.l.b16 %v2555
        %v2564 = vunpack.c.h.b16 %v2555
        %v2565 = vunpack.c.l.b16 %v2556
        %v2566 = vunpack.c.h.b16 %v2556
        %v2567 = vunpack.c.l.b16 %v2557
        %v2568 = vunpack.c.h.b16 %v2557
        %v2569 = vunpack.c.l.b16 %v2558
        %v2570 = vunpack.c.h.b16 %v2558
        %v2571 = vpack.c.b16 %v2563, %v2563
        %v2572 = vpack.c.b16 %v2564, %v2564
        %v2573 = vpack.c.b16 %v2565, %v2565
        %v2574 = vpack.c.b16 %v2566, %v2566
        %v2575 = vpack.c.b16 %v2567, %v2567
        %v2576 = vpack.c.b16 %v2568, %v2568
        %v2577 = vpack.c.b16 %v2569, %v2569
        %v2578 = vpack.c.b16 %v2570, %v2570
        %2587 = vst [vmem:[#allocation2] sm:$0xf] %v2571
        %2588 = vst [vmem:[#allocation2 + $0xc] sm:$0xf] %v2572
        %2589 = vst [vmem:[#allocation2 + $0x18] sm:$0xf] %v2573
        %2590 = vst [vmem:[#allocation2 + $0x24] sm:$0xf] %v2574
        %2591 = vst [vmem:[#allocation2 + $0x30] sm:$0xf] %v2575
        %2592 = vst [vmem:[#allocation2 + $0x3c] sm:$0xf] %v2576
        %2593 = vst [vmem:[#allocation2 + $0x48] sm:$0xf] %v2577
        %2594 = vst [vmem:[#allocation2 + $0x54] sm:$0xf] %v2578
        %2595 = vmatprep.subr.bf16.mxu0 0
        %2596 = vmatpush1.bf16.xpose.msra.mxu0 %v2334
        %2597 = vmatprep.subr.bf16.mxu0 0
        %2598 = vmatpush1.bf16.xpose.msra.mxu0 %v2333
        %2599 = vmatprep.subr.bf16.mxu0 0
        %2600 = vmatpush1.bf16.xpose.msra.mxu0 %v2332
        %2601 = vmatprep.subr.bf16.mxu0 0
        %2602 = vmatpush1.bf16.xpose.msra.mxu0 %v2331
        %2603 = vmatprep.subr.bf16.mxu0 0
        %2604 = vmatpush1.bf16.xpose.msra.mxu0 %v2330
        %2605 = vmatprep.subr.bf16.mxu0 0
        %2606 = vmatpush1.bf16.xpose.msra.mxu0 %v2329
        %2607 = vmatprep.subr.bf16.mxu0 0
        %2608 = vmatpush1.bf16.xpose.msra.mxu0 %v2328
        %2609 = vmatprep.subr.bf16.mxu0 0
        %2610 = vmatpush1.bf16.xpose.msra.mxu0 %v2327
        %2611 = vmatprep.subr.bf16.mxu0 0
        %2612 = vmatpush2.bf16.xpose.msra.mxu0 0
        %2613 = vmatprep.subr.bf16.mxu0 0
        %2614 = vmatpush2.bf16.xpose.msra.mxu0 0
        %2615 = vmatprep.subr.bf16.mxu0 0
        %2616 = vmatpush2.bf16.xpose.msra.mxu0 0
        %2617 = vmatprep.subr.bf16.mxu0 0
        %2618 = vmatpush2.bf16.xpose.msra.mxu0 0
        %2619 = vmatprep.subr.bf16.mxu0 0
        %2620 = vmatpush2.bf16.xpose.msra.mxu0 0
        %2621 = vmatprep.subr.bf16.mxu0 0
        %2622 = vmatpush2.bf16.xpose.msra.mxu0 0
        %2623 = vmatprep.subr.bf16.mxu0 0
        %2624 = vmatpush2.bf16.xpose.msra.mxu0 0
        %2625 = vmatprep.subr.bf16.mxu0 0
        %2626 = vmatpush2.bf16.xpose.msra.mxu0 0
        %2627 = vmatprep.mubr.bf16.mxu0 0
        %2628 = vmatmul.mubr.bf16.gmra.mxu0 %v2316
        %v2629 = vpop.f32.mrf.mxu0
        %v2630 = vadd.f32 %v2347, %v2629
        %v2631 = vpop.f32.mrf.mxu0
        %v2632 = vpop.f32.mrf.mxu0
        %v2633 = vadd.f32 %v2347, %v2632
        %v2634 = vpop.f32.mrf.mxu0
        %2635 = vmatprep.mubr.bf16.mxu0 0
        %2636 = vmatmul.mubr.bf16.gmra.mxu0 %v2319
        %v2637 = vpop.f32.mrf.mxu0
        %v2638 = vadd.f32 %v2347, %v2637
        %v2639 = vpop.f32.mrf.mxu0
        %v2640 = vpop.f32.mrf.mxu0
        %v2641 = vadd.f32 %v2347, %v2640
        %v2642 = vpop.f32.mrf.mxu0
        %2643 = vmatprep.mubr.bf16.mxu0 0
        %2644 = vmatmul.mubr.bf16.gmra.mxu0 %v2322
        %v2645 = vpop.f32.mrf.mxu0
        %v2646 = vadd.f32 %v2347, %v2645
        %v2647 = vpop.f32.mrf.mxu0
        %v2648 = vpop.f32.mrf.mxu0
        %v2649 = vadd.f32 %v2347, %v2648
        %v2650 = vpop.f32.mrf.mxu0
        %2651 = vmatprep.mubr.bf16.mxu0 0
        %2652 = vmatmul.mubr.bf16.gmra.mxu0 %v2325
        %v2653 = vpop.f32.mrf.mxu0
        %v2654 = vadd.f32 %v2347, %v2653
        %v2655 = vpop.f32.mrf.mxu0
        %v2656 = vpop.f32.mrf.mxu0
        %v2657 = vadd.f32 %v2347, %v2656
        %v2658 = vpop.f32.mrf.mxu0
        %2659 = vdwg.mxu0
        %2660 = vmax.xlane.f32.xlu0 %v2630
        %v2661 = vpop.xlane.xlu0 %2660
        %2662 = vmax.xlane.f32.xlu0 %v2633
        %v2663 = vpop.xlane.xlu0 %2662
        %2664 = vmax.xlane.f32.xlu0 %v2638
        %v2665 = vpop.xlane.xlu0 %2664
        %2666 = vmax.xlane.f32.xlu0 %v2641
        %v2667 = vpop.xlane.xlu0 %2666
        %2668 = vmax.xlane.f32.xlu0 %v2646
        %v2669 = vpop.xlane.xlu0 %2668
        %2670 = vmax.xlane.f32.xlu0 %v2649
        %v2671 = vpop.xlane.xlu0 %2670
        %2672 = vmax.xlane.f32.xlu0 %v2654
        %v2673 = vpop.xlane.xlu0 %2672
        %2674 = vmax.xlane.f32.xlu0 %v2657
        %v2675 = vpop.xlane.xlu0 %2674
        %v2676 = vsub.f32 %v2630, %v2661
        %v2677 = vsub.f32 %v2633, %v2663
        %v2678 = vsub.f32 %v2638, %v2665
        %v2679 = vsub.f32 %v2641, %v2667
        %v2680 = vsub.f32 %v2646, %v2669
        %v2681 = vsub.f32 %v2649, %v2671
        %v2682 = vsub.f32 %v2654, %v2673
        %v2683 = vsub.f32 %v2657, %v2675
        %v2684 = vmul.f32 %v2676, 1.442695
        %v2685 = vpow.pop %v2684
        %v2686 = vmul.f32 %v2677, 1.442695
        %v2687 = vpow.pop %v2686
        %v2688 = vmul.f32 %v2678, 1.442695
        %v2689 = vpow.pop %v2688
        %v2690 = vmul.f32 %v2679, 1.442695
        %v2691 = vpow.pop %v2690
        %v2692 = vmul.f32 %v2680, 1.442695
        %v2693 = vpow.pop %v2692
        %v2694 = vmul.f32 %v2681, 1.442695
        %v2695 = vpow.pop %v2694
        %v2696 = vmul.f32 %v2682, 1.442695
        %v2697 = vpow.pop %v2696
        %v2698 = vmul.f32 %v2683, 1.442695
        %v2699 = vpow.pop %v2698
        %2700 = vadd.xlane.f32.xlu0 %v2685
        %v2701 = vpop.xlane.xlu0 %2700
        %2702 = vadd.xlane.f32.xlu0 %v2687
        %v2703 = vpop.xlane.xlu0 %2702
        %2704 = vadd.xlane.f32.xlu0 %v2689
        %v2705 = vpop.xlane.xlu0 %2704
        %2706 = vadd.xlane.f32.xlu0 %v2691
        %v2707 = vpop.xlane.xlu0 %2706
        %2708 = vadd.xlane.f32.xlu0 %v2693
        %v2709 = vpop.xlane.xlu0 %2708
        %2710 = vadd.xlane.f32.xlu0 %v2695
        %v2711 = vpop.xlane.xlu0 %2710
        %2712 = vadd.xlane.f32.xlu0 %v2697
        %v2713 = vpop.xlane.xlu0 %2712
        %2714 = vadd.xlane.f32.xlu0 %v2699
        %v2715 = vpop.xlane.xlu0 %2714
        %v2716 = vrcp.pop %v2701
        %v2717 = vrcp.pop %v2703
        %v2718 = vrcp.pop %v2705
        %v2719 = vrcp.pop %v2707
        %v2720 = vrcp.pop %v2709
        %v2721 = vrcp.pop %v2711
        %v2722 = vrcp.pop %v2713
        %v2723 = vrcp.pop %v2715
        %v2724 = vmul.f32 %v2685, %v2716
        %v2725 = vmul.f32 %v2687, %v2717
        %v2726 = vmul.f32 %v2689, %v2718
        %v2727 = vmul.f32 %v2691, %v2719
        %v2728 = vmul.f32 %v2693, %v2720
        %v2729 = vmul.f32 %v2695, %v2721
        %v2730 = vmul.f32 %v2697, %v2722
        %v2731 = vmul.f32 %v2699, %v2723
        %v2732 = vpack.c.bf16 %v2725, %v2724
        %v2733 = vpack.c.bf16 %v2727, %v2726
        %v2734 = vpack.c.bf16 %v2729, %v2728
        %v2735 = vpack.c.bf16 %v2731, %v2730
        %2736 = vmatprep.subr.bf16.mxu0 0
        %2737 = vmatpush1.bf16.msra.mxu0 %v2342
        %2738 = vmatprep.subr.bf16.mxu0 0
        %2739 = vmatpush1.bf16.msra.mxu0 %v2341
        %2740 = vmatprep.subr.bf16.mxu0 0
        %2741 = vmatpush1.bf16.msra.mxu0 %v2340
        %2742 = vmatprep.subr.bf16.mxu0 0
        %2743 = vmatpush1.bf16.msra.mxu0 %v2339
        %2744 = vmatprep.subr.bf16.mxu0 0
        %2745 = vmatpush1.bf16.msra.mxu0 %v2338
        %2746 = vmatprep.subr.bf16.mxu0 0
        %2747 = vmatpush1.bf16.msra.mxu0 %v2337
        %2748 = vmatprep.subr.bf16.mxu0 0
        %2749 = vmatpush1.bf16.msra.mxu0 %v2336
        %2750 = vmatprep.subr.bf16.mxu0 0
        %2751 = vmatpush1.bf16.msra.mxu0 %v2335
        %2752 = vmatprep.subr.bf16.mxu0 0
        %2753 = vmatpush2.bf16.msra.mxu0 0
        %2754 = vmatprep.subr.bf16.mxu0 0
        %2755 = vmatpush2.bf16.msra.mxu0 0
        %2756 = vmatprep.subr.bf16.mxu0 0
        %2757 = vmatpush2.bf16.msra.mxu0 0
        %2758 = vmatprep.subr.bf16.mxu0 0
        %2759 = vmatpush2.bf16.msra.mxu0 0
        %2760 = vmatprep.subr.bf16.mxu0 0
        %2761 = vmatpush2.bf16.msra.mxu0 0
        %2762 = vmatprep.subr.bf16.mxu0 0
        %2763 = vmatpush2.bf16.msra.mxu0 0
        %2764 = vmatprep.subr.bf16.mxu0 0
        %2765 = vmatpush2.bf16.msra.mxu0 0
        %2766 = vmatprep.subr.bf16.mxu0 0
        %2767 = vmatpush2.bf16.msra.mxu0 0
        %2768 = vmatprep.mubr.bf16.mxu0 0
        %2769 = vmatmul.mubr.bf16.gmra.mxu0 %v2732
        %v2770 = vpop.f32.mrf.mxu0
        %v2771 = vadd.f32 0.0, %v2770
        %v2772 = vpop.f32.mrf.mxu0
        %v2773 = vpop.f32.mrf.mxu0
        %v2774 = vadd.f32 0.0, %v2773
        %v2775 = vpop.f32.mrf.mxu0
        %2776 = vmatprep.mubr.bf16.mxu0 0
        %2777 = vmatmul.mubr.bf16.gmra.mxu0 %v2733
        %v2778 = vpop.f32.mrf.mxu0
        %v2779 = vadd.f32 0.0, %v2778
        %v2780 = vpop.f32.mrf.mxu0
        %v2781 = vpop.f32.mrf.mxu0
        %v2782 = vadd.f32 0.0, %v2781
        %v2783 = vpop.f32.mrf.mxu0
        %2784 = vmatprep.mubr.bf16.mxu0 0
        %2785 = vmatmul.mubr.bf16.gmra.mxu0 %v2734
        %v2786 = vpop.f32.mrf.mxu0
        %v2787 = vadd.f32 0.0, %v2786
        %v2788 = vpop.f32.mrf.mxu0
        %v2789 = vpop.f32.mrf.mxu0
        %v2790 = vadd.f32 0.0, %v2789
        %v2791 = vpop.f32.mrf.mxu0
        %2792 = vmatprep.mubr.bf16.mxu0 0
        %2793 = vmatmul.mubr.bf16.gmra.mxu0 %v2735
        %v2794 = vpop.f32.mrf.mxu0
        %v2795 = vadd.f32 0.0, %v2794
        %v2796 = vpop.f32.mrf.mxu0
        %v2797 = vpop.f32.mrf.mxu0
        %v2798 = vadd.f32 0.0, %v2797
        %v2799 = vpop.f32.mrf.mxu0
        %2800 = vdwg.mxu0
        %v2801 = vpack.c.bf16 %v2774, %v2771
        %v2802 = vpack.c.bf16 %v2782, %v2779
        %v2803 = vpack.c.bf16 %v2790, %v2787
        %v2804 = vpack.c.bf16 %v2798, %v2795
        %v2809 = vunpack.c.l.b16 %v2801
        %v2810 = vunpack.c.h.b16 %v2801
        %v2811 = vunpack.c.l.b16 %v2802
        %v2812 = vunpack.c.h.b16 %v2802
        %v2813 = vunpack.c.l.b16 %v2803
        %v2814 = vunpack.c.h.b16 %v2803
        %v2815 = vunpack.c.l.b16 %v2804
        %v2816 = vunpack.c.h.b16 %v2804
        %v2817 = vpack.c.b16 %v2809, %v2809
        %v2818 = vpack.c.b16 %v2810, %v2810
        %v2819 = vpack.c.b16 %v2811, %v2811
        %v2820 = vpack.c.b16 %v2812, %v2812
        %v2821 = vpack.c.b16 %v2813, %v2813
        %v2822 = vpack.c.b16 %v2814, %v2814
        %v2823 = vpack.c.b16 %v2815, %v2815
        %v2824 = vpack.c.b16 %v2816, %v2816
        %2833 = vst [vmem:[#allocation2 + $0x4] sm:$0xf] %v2817
        %2834 = vst [vmem:[#allocation2 + $0x10] sm:$0xf] %v2818
        %2835 = vst [vmem:[#allocation2 + $0x1c] sm:$0xf] %v2819
        %2836 = vst [vmem:[#allocation2 + $0x28] sm:$0xf] %v2820
        %2837 = vst [vmem:[#allocation2 + $0x34] sm:$0xf] %v2821
        %2838 = vst [vmem:[#allocation2 + $0x40] sm:$0xf] %v2822
        %2839 = vst [vmem:[#allocation2 + $0x4c] sm:$0xf] %v2823
        %2840 = vst [vmem:[#allocation2 + $0x58] sm:$0xf] %v2824
        %2841 = vmatprep.subr.bf16.mxu0 0
        %2842 = vmatpush1.bf16.xpose.msra.mxu0 %v2334
        %2843 = vmatprep.subr.bf16.mxu0 0
        %2844 = vmatpush1.bf16.xpose.msra.mxu0 %v2333
        %2845 = vmatprep.subr.bf16.mxu0 0
        %2846 = vmatpush1.bf16.xpose.msra.mxu0 %v2332
        %2847 = vmatprep.subr.bf16.mxu0 0
        %2848 = vmatpush1.bf16.xpose.msra.mxu0 %v2331
        %2849 = vmatprep.subr.bf16.mxu0 0
        %2850 = vmatpush1.bf16.xpose.msra.mxu0 %v2330
        %2851 = vmatprep.subr.bf16.mxu0 0
        %2852 = vmatpush1.bf16.xpose.msra.mxu0 %v2329
        %2853 = vmatprep.subr.bf16.mxu0 0
        %2854 = vmatpush1.bf16.xpose.msra.mxu0 %v2328
        %2855 = vmatprep.subr.bf16.mxu0 0
        %2856 = vmatpush1.bf16.xpose.msra.mxu0 %v2327
        %2857 = vmatprep.subr.bf16.mxu0 0
        %2858 = vmatpush2.bf16.xpose.msra.mxu0 0
        %2859 = vmatprep.subr.bf16.mxu0 0
        %2860 = vmatpush2.bf16.xpose.msra.mxu0 0
        %2861 = vmatprep.subr.bf16.mxu0 0
        %2862 = vmatpush2.bf16.xpose.msra.mxu0 0
        %2863 = vmatprep.subr.bf16.mxu0 0
        %2864 = vmatpush2.bf16.xpose.msra.mxu0 0
        %2865 = vmatprep.subr.bf16.mxu0 0
        %2866 = vmatpush2.bf16.xpose.msra.mxu0 0
        %2867 = vmatprep.subr.bf16.mxu0 0
        %2868 = vmatpush2.bf16.xpose.msra.mxu0 0
        %2869 = vmatprep.subr.bf16.mxu0 0
        %2870 = vmatpush2.bf16.xpose.msra.mxu0 0
        %2871 = vmatprep.subr.bf16.mxu0 0
        %2872 = vmatpush2.bf16.xpose.msra.mxu0 0
        %2873 = vmatprep.mubr.bf16.mxu0 0
        %2874 = vmatmul.mubr.bf16.gmra.mxu0 %v2317
        %v2875 = vpop.f32.mrf.mxu0
        %v2876 = vadd.f32 %v2347, %v2875
        %v2877 = vpop.f32.mrf.mxu0
        %v2878 = vpop.f32.mrf.mxu0
        %v2879 = vadd.f32 %v2347, %v2878
        %v2880 = vpop.f32.mrf.mxu0
        %2881 = vmatprep.mubr.bf16.mxu0 0
        %2882 = vmatmul.mubr.bf16.gmra.mxu0 %v2320
        %v2883 = vpop.f32.mrf.mxu0
        %v2884 = vadd.f32 %v2347, %v2883
        %v2885 = vpop.f32.mrf.mxu0
        %v2886 = vpop.f32.mrf.mxu0
        %v2887 = vadd.f32 %v2347, %v2886
        %v2888 = vpop.f32.mrf.mxu0
        %2889 = vmatprep.mubr.bf16.mxu0 0
        %2890 = vmatmul.mubr.bf16.gmra.mxu0 %v2323
        %v2891 = vpop.f32.mrf.mxu0
        %v2892 = vadd.f32 %v2347, %v2891
        %v2893 = vpop.f32.mrf.mxu0
        %v2894 = vpop.f32.mrf.mxu0
        %v2895 = vadd.f32 %v2347, %v2894
        %v2896 = vpop.f32.mrf.mxu0
        %2897 = vmatprep.mubr.bf16.mxu0 0
        %2898 = vmatmul.mubr.bf16.gmra.mxu0 %v2326
        %v2899 = vpop.f32.mrf.mxu0
        %v2900 = vadd.f32 %v2347, %v2899
        %v2901 = vpop.f32.mrf.mxu0
        %v2902 = vpop.f32.mrf.mxu0
        %v2903 = vadd.f32 %v2347, %v2902
        %v2904 = vpop.f32.mrf.mxu0
        %2905 = vdwg.mxu0
        %2906 = vmax.xlane.f32.xlu0 %v2876
        %v2907 = vpop.xlane.xlu0 %2906
        %2908 = vmax.xlane.f32.xlu0 %v2879
        %v2909 = vpop.xlane.xlu0 %2908
        %2910 = vmax.xlane.f32.xlu0 %v2884
        %v2911 = vpop.xlane.xlu0 %2910
        %2912 = vmax.xlane.f32.xlu0 %v2887
        %v2913 = vpop.xlane.xlu0 %2912
        %2914 = vmax.xlane.f32.xlu0 %v2892
        %v2915 = vpop.xlane.xlu0 %2914
        %2916 = vmax.xlane.f32.xlu0 %v2895
        %v2917 = vpop.xlane.xlu0 %2916
        %2918 = vmax.xlane.f32.xlu0 %v2900
        %v2919 = vpop.xlane.xlu0 %2918
        %2920 = vmax.xlane.f32.xlu0 %v2903
        %v2921 = vpop.xlane.xlu0 %2920
        %v2922 = vsub.f32 %v2876, %v2907
        %v2923 = vsub.f32 %v2879, %v2909
        %v2924 = vsub.f32 %v2884, %v2911
        %v2925 = vsub.f32 %v2887, %v2913
        %v2926 = vsub.f32 %v2892, %v2915
        %v2927 = vsub.f32 %v2895, %v2917
        %v2928 = vsub.f32 %v2900, %v2919
        %v2929 = vsub.f32 %v2903, %v2921
        %v2930 = vmul.f32 %v2922, 1.442695
        %v2931 = vpow.pop %v2930
        %v2932 = vmul.f32 %v2923, 1.442695
        %v2933 = vpow.pop %v2932
        %v2934 = vmul.f32 %v2924, 1.442695
        %v2935 = vpow.pop %v2934
        %v2936 = vmul.f32 %v2925, 1.442695
        %v2937 = vpow.pop %v2936
        %v2938 = vmul.f32 %v2926, 1.442695
        %v2939 = vpow.pop %v2938
        %v2940 = vmul.f32 %v2927, 1.442695
        %v2941 = vpow.pop %v2940
        %v2942 = vmul.f32 %v2928, 1.442695
        %v2943 = vpow.pop %v2942
        %v2944 = vmul.f32 %v2929, 1.442695
        %v2945 = vpow.pop %v2944
        %2946 = vadd.xlane.f32.xlu0 %v2931
        %v2947 = vpop.xlane.xlu0 %2946
        %2948 = vadd.xlane.f32.xlu0 %v2933
        %v2949 = vpop.xlane.xlu0 %2948
        %2950 = vadd.xlane.f32.xlu0 %v2935
        %v2951 = vpop.xlane.xlu0 %2950
        %2952 = vadd.xlane.f32.xlu0 %v2937
        %v2953 = vpop.xlane.xlu0 %2952
        %2954 = vadd.xlane.f32.xlu0 %v2939
        %v2955 = vpop.xlane.xlu0 %2954
        %2956 = vadd.xlane.f32.xlu0 %v2941
        %v2957 = vpop.xlane.xlu0 %2956
        %2958 = vadd.xlane.f32.xlu0 %v2943
        %v2959 = vpop.xlane.xlu0 %2958
        %2960 = vadd.xlane.f32.xlu0 %v2945
        %v2961 = vpop.xlane.xlu0 %2960
        %v2962 = vrcp.pop %v2947
        %v2963 = vrcp.pop %v2949
        %v2964 = vrcp.pop %v2951
        %v2965 = vrcp.pop %v2953
        %v2966 = vrcp.pop %v2955
        %v2967 = vrcp.pop %v2957
        %v2968 = vrcp.pop %v2959
        %v2969 = vrcp.pop %v2961
        %v2970 = vmul.f32 %v2931, %v2962
        %v2971 = vmul.f32 %v2933, %v2963
        %v2972 = vmul.f32 %v2935, %v2964
        %v2973 = vmul.f32 %v2937, %v2965
        %v2974 = vmul.f32 %v2939, %v2966
        %v2975 = vmul.f32 %v2941, %v2967
        %v2976 = vmul.f32 %v2943, %v2968
        %v2977 = vmul.f32 %v2945, %v2969
        %v2978 = vpack.c.bf16 %v2971, %v2970
        %v2979 = vpack.c.bf16 %v2973, %v2972
        %v2980 = vpack.c.bf16 %v2975, %v2974
        %v2981 = vpack.c.bf16 %v2977, %v2976
        %2982 = vmatprep.subr.bf16.mxu0 0
        %2983 = vmatpush1.bf16.msra.mxu0 %v2342
        %2984 = vmatprep.subr.bf16.mxu0 0
        %2985 = vmatpush1.bf16.msra.mxu0 %v2341
        %2986 = vmatprep.subr.bf16.mxu0 0
        %2987 = vmatpush1.bf16.msra.mxu0 %v2340
        %2988 = vmatprep.subr.bf16.mxu0 0
        %2989 = vmatpush1.bf16.msra.mxu0 %v2339
        %2990 = vmatprep.subr.bf16.mxu0 0
        %2991 = vmatpush1.bf16.msra.mxu0 %v2338
        %2992 = vmatprep.subr.bf16.mxu0 0
        %2993 = vmatpush1.bf16.msra.mxu0 %v2337
        %2994 = vmatprep.subr.bf16.mxu0 0
        %2995 = vmatpush1.bf16.msra.mxu0 %v2336
        %2996 = vmatprep.subr.bf16.mxu0 0
        %2997 = vmatpush1.bf16.msra.mxu0 %v2335
        %2998 = vmatprep.subr.bf16.mxu0 0
        %2999 = vmatpush2.bf16.msra.mxu0 0
        %3000 = vmatprep.subr.bf16.mxu0 0
        %3001 = vmatpush2.bf16.msra.mxu0 0
        %3002 = vmatprep.subr.bf16.mxu0 0
        %3003 = vmatpush2.bf16.msra.mxu0 0
        %3004 = vmatprep.subr.bf16.mxu0 0
        %3005 = vmatpush2.bf16.msra.mxu0 0
        %3006 = vmatprep.subr.bf16.mxu0 0
        %3007 = vmatpush2.bf16.msra.mxu0 0
        %3008 = vmatprep.subr.bf16.mxu0 0
        %3009 = vmatpush2.bf16.msra.mxu0 0
        %3010 = vmatprep.subr.bf16.mxu0 0
        %3011 = vmatpush2.bf16.msra.mxu0 0
        %3012 = vmatprep.subr.bf16.mxu0 0
        %3013 = vmatpush2.bf16.msra.mxu0 0
        %3014 = vmatprep.mubr.bf16.mxu0 0
        %3015 = vmatmul.mubr.bf16.gmra.mxu0 %v2978
        %v3016 = vpop.f32.mrf.mxu0
        %v3017 = vadd.f32 0.0, %v3016
        %v3018 = vpop.f32.mrf.mxu0
        %v3019 = vpop.f32.mrf.mxu0
        %v3020 = vadd.f32 0.0, %v3019
        %v3021 = vpop.f32.mrf.mxu0
        %3022 = vmatprep.mubr.bf16.mxu0 0
        %3023 = vmatmul.mubr.bf16.gmra.mxu0 %v2979
        %v3024 = vpop.f32.mrf.mxu0
        %v3025 = vadd.f32 0.0, %v3024
        %v3026 = vpop.f32.mrf.mxu0
        %v3027 = vpop.f32.mrf.mxu0
        %v3028 = vadd.f32 0.0, %v3027
        %v3029 = vpop.f32.mrf.mxu0
        %3030 = vmatprep.mubr.bf16.mxu0 0
        %3031 = vmatmul.mubr.bf16.gmra.mxu0 %v2980
        %v3032 = vpop.f32.mrf.mxu0
        %v3033 = vadd.f32 0.0, %v3032
        %v3034 = vpop.f32.mrf.mxu0
        %v3035 = vpop.f32.mrf.mxu0
        %v3036 = vadd.f32 0.0, %v3035
        %v3037 = vpop.f32.mrf.mxu0
        %3038 = vmatprep.mubr.bf16.mxu0 0
        %3039 = vmatmul.mubr.bf16.gmra.mxu0 %v2981
        %v3040 = vpop.f32.mrf.mxu0
        %v3041 = vadd.f32 0.0, %v3040
        %v3042 = vpop.f32.mrf.mxu0
        %v3043 = vpop.f32.mrf.mxu0
        %v3044 = vadd.f32 0.0, %v3043
        %v3045 = vpop.f32.mrf.mxu0
        %3046 = vdwg.mxu0
        %v3047 = vpack.c.bf16 %v3020, %v3017
        %v3048 = vpack.c.bf16 %v3028, %v3025
        %v3049 = vpack.c.bf16 %v3036, %v3033
        %v3050 = vpack.c.bf16 %v3044, %v3041
        %v3055 = vunpack.c.l.b16 %v3047
        %v3056 = vunpack.c.h.b16 %v3047
        %v3057 = vunpack.c.l.b16 %v3048
        %v3058 = vunpack.c.h.b16 %v3048
        %v3059 = vunpack.c.l.b16 %v3049
        %v3060 = vunpack.c.h.b16 %v3049
        %v3061 = vunpack.c.l.b16 %v3050
        %v3062 = vunpack.c.h.b16 %v3050
        %v3063 = vpack.c.b16 %v3055, %v3055
        %v3064 = vpack.c.b16 %v3056, %v3056
        %v3065 = vpack.c.b16 %v3057, %v3057
        %v3066 = vpack.c.b16 %v3058, %v3058
        %v3067 = vpack.c.b16 %v3059, %v3059
        %v3068 = vpack.c.b16 %v3060, %v3060
        %v3069 = vpack.c.b16 %v3061, %v3061
        %v3070 = vpack.c.b16 %v3062, %v3062
        %3079 = vst [vmem:[#allocation2 + $0x8] sm:$0xf] %v3063
        %3080 = vst [vmem:[#allocation2 + $0x14] sm:$0xf] %v3064
        %3081 = vst [vmem:[#allocation2 + $0x20] sm:$0xf] %v3065
        %3082 = vst [vmem:[#allocation2 + $0x2c] sm:$0xf] %v3066
        %3083 = vst [vmem:[#allocation2 + $0x38] sm:$0xf] %v3067
        %3084 = vst [vmem:[#allocation2 + $0x44] sm:$0xf] %v3068
        %3085 = vst [vmem:[#allocation2 + $0x50] sm:$0xf] %v3069
        %3086 = vst [vmem:[#allocation2 + $0x5c] sm:$0xf] %v3070
        %v3087 = vld [vmem:[#allocation2] sm:$0xff]
        %v3088 = vld [vmem:[#allocation2 + $0x8] sm:$0xf]
        %v3089 = vld [vmem:[#allocation2 + $0xc] sm:$0xff]
        %v3090 = vld [vmem:[#allocation2 + $0x14] sm:$0xf]
        %v3091 = vld [vmem:[#allocation2 + $0x18] sm:$0xff]
        %v3092 = vld [vmem:[#allocation2 + $0x20] sm:$0xf]
        %v3093 = vld [vmem:[#allocation2 + $0x24] sm:$0xff]
        %v3094 = vld [vmem:[#allocation2 + $0x2c] sm:$0xf]
        %v3095 = vld [vmem:[#allocation2 + $0x30] sm:$0xff]
        %v3096 = vld [vmem:[#allocation2 + $0x38] sm:$0xf]
        %v3097 = vld [vmem:[#allocation2 + $0x3c] sm:$0xff]
        %v3098 = vld [vmem:[#allocation2 + $0x44] sm:$0xf]
        %v3099 = vld [vmem:[#allocation2 + $0x48] sm:$0xff]
        %v3100 = vld [vmem:[#allocation2 + $0x50] sm:$0xf]
        %v3101 = vld [vmem:[#allocation2 + $0x54] sm:$0xff]
        %v3102 = vld [vmem:[#allocation2 + $0x5c] sm:$0xf]
        %v3103 = vld [vmem:[#allocation15] sm:$0xff]
        %v3104 = vld [vmem:[#allocation15 + $0x8] sm:$0xf]
        %v3105 = vld [vmem:[#allocation15 + $0xc] sm:$0xff]
        %v3106 = vld [vmem:[#allocation15 + $0x14] sm:$0xf]
        %v3107 = vld [vmem:[#allocation15 + $0x18] sm:$0xff]
        %v3108 = vld [vmem:[#allocation15 + $0x20] sm:$0xf]
        %v3109 = vld [vmem:[#allocation15 + $0x24] sm:$0xff]
        %v3110 = vld [vmem:[#allocation15 + $0x2c] sm:$0xf]
        %v3111 = vld [vmem:[#allocation15 + $0x30] sm:$0xff]
        %v3112 = vld [vmem:[#allocation15 + $0x38] sm:$0xf]
        %v3113 = vld [vmem:[#allocation15 + $0x3c] sm:$0xff]
        %v3114 = vld [vmem:[#allocation15 + $0x44] sm:$0xf]
        %v3115 = vld [vmem:[#allocation15 + $0x48] sm:$0xff]
        %v3116 = vld [vmem:[#allocation15 + $0x50] sm:$0xf]
        %v3117 = vld [vmem:[#allocation15 + $0x54] sm:$0xff]
        %v3118 = vld [vmem:[#allocation15 + $0x5c] sm:$0xf]
        %v3119 = vld [vmem:[#allocation15 + $0x60] sm:$0xff]
        %v3120 = vld [vmem:[#allocation15 + $0x68] sm:$0xf]
        %v3121 = vld [vmem:[#allocation15 + $0x6c] sm:$0xff]
        %v3122 = vld [vmem:[#allocation15 + $0x74] sm:$0xf]
        %v3123 = vld [vmem:[#allocation15 + $0x78] sm:$0xff]
        %v3124 = vld [vmem:[#allocation15 + $0x80] sm:$0xf]
        %v3125 = vld [vmem:[#allocation15 + $0x84] sm:$0xff]
        %v3126 = vld [vmem:[#allocation15 + $0x8c] sm:$0xf]
        %v3127 = vld [vmem:[#allocation15 + $0x90] sm:$0xff]
        %v3128 = vld [vmem:[#allocation15 + $0x98] sm:$0xf]
        %v3129 = vld [vmem:[#allocation15 + $0x9c] sm:$0xff]
        %v3130 = vld [vmem:[#allocation15 + $0xa4] sm:$0xf]
        %v3131 = vld [vmem:[#allocation15 + $0xa8] sm:$0xff]
        %v3132 = vld [vmem:[#allocation15 + $0xb0] sm:$0xf]
        %v3133 = vld [vmem:[#allocation15 + $0xb4] sm:$0xff]
        %v3134 = vld [vmem:[#allocation15 + $0xbc] sm:$0xf]
        %v3135 = vld [vmem:[#allocation15 + $0xc0] sm:$0xff]
        %v3136 = vld [vmem:[#allocation15 + $0xc8] sm:$0xf]
        %v3137 = vld [vmem:[#allocation15 + $0xcc] sm:$0xff]
        %v3138 = vld [vmem:[#allocation15 + $0xd4] sm:$0xf]
        %v3139 = vld [vmem:[#allocation15 + $0xd8] sm:$0xff]
        %v3140 = vld [vmem:[#allocation15 + $0xe0] sm:$0xf]
        %v3141 = vld [vmem:[#allocation15 + $0xe4] sm:$0xff]
        %v3142 = vld [vmem:[#allocation15 + $0xec] sm:$0xf]
        %v3143 = vld [vmem:[#allocation15 + $0xf0] sm:$0xff]
        %v3144 = vld [vmem:[#allocation15 + $0xf8] sm:$0xf]
        %v3145 = vld [vmem:[#allocation15 + $0xfc] sm:$0xff]
        %v3146 = vld [vmem:[#allocation15 + $0x104] sm:$0xf]
        %v3147 = vld [vmem:[#allocation15 + $0x108] sm:$0xff]
        %v3148 = vld [vmem:[#allocation15 + $0x110] sm:$0xf]
        %v3149 = vld [vmem:[#allocation15 + $0x114] sm:$0xff]
        %v3150 = vld [vmem:[#allocation15 + $0x11c] sm:$0xf]
        %v3151 = vld [vmem:[#allocation15 + $0x120] sm:$0xff]
        %v3152 = vld [vmem:[#allocation15 + $0x128] sm:$0xf]
        %v3153 = vld [vmem:[#allocation15 + $0x12c] sm:$0xff]
        %v3154 = vld [vmem:[#allocation15 + $0x134] sm:$0xf]
        %v3155 = vld [vmem:[#allocation15 + $0x138] sm:$0xff]
        %v3156 = vld [vmem:[#allocation15 + $0x140] sm:$0xf]
        %v3157 = vld [vmem:[#allocation15 + $0x144] sm:$0xff]
        %v3158 = vld [vmem:[#allocation15 + $0x14c] sm:$0xf]
        %v3159 = vld [vmem:[#allocation15 + $0x150] sm:$0xff]
        %v3160 = vld [vmem:[#allocation15 + $0x158] sm:$0xf]
        %v3161 = vld [vmem:[#allocation15 + $0x15c] sm:$0xff]
        %v3162 = vld [vmem:[#allocation15 + $0x164] sm:$0xf]
        %v3163 = vld [vmem:[#allocation15 + $0x168] sm:$0xff]
        %v3164 = vld [vmem:[#allocation15 + $0x170] sm:$0xf]
        %v3165 = vld [vmem:[#allocation15 + $0x174] sm:$0xff]
        %v3166 = vld [vmem:[#allocation15 + $0x17c] sm:$0xf]
        %v3167 = vld [vmem:[#allocation15 + $0x180] sm:$0xff]
        %v3168 = vld [vmem:[#allocation15 + $0x188] sm:$0xf]
        %v3169 = vld [vmem:[#allocation15 + $0x18c] sm:$0xff]
        %v3170 = vld [vmem:[#allocation15 + $0x194] sm:$0xf]
        %v3171 = vld [vmem:[#allocation15 + $0x198] sm:$0xff]
        %v3172 = vld [vmem:[#allocation15 + $0x1a0] sm:$0xf]
        %v3173 = vld [vmem:[#allocation15 + $0x1a4] sm:$0xff]
        %v3174 = vld [vmem:[#allocation15 + $0x1ac] sm:$0xf]
        %v3175 = vld [vmem:[#allocation15 + $0x1b0] sm:$0xff]
        %v3176 = vld [vmem:[#allocation15 + $0x1b8] sm:$0xf]
        %v3177 = vld [vmem:[#allocation15 + $0x1bc] sm:$0xff]
        %v3178 = vld [vmem:[#allocation15 + $0x1c4] sm:$0xf]
        %v3179 = vld [vmem:[#allocation15 + $0x1c8] sm:$0xff]
        %v3180 = vld [vmem:[#allocation15 + $0x1d0] sm:$0xf]
        %v3181 = vld [vmem:[#allocation15 + $0x1d4] sm:$0xff]
        %v3182 = vld [vmem:[#allocation15 + $0x1dc] sm:$0xf]
        %v3183 = vld [vmem:[#allocation15 + $0x1e0] sm:$0xff]
        %v3184 = vld [vmem:[#allocation15 + $0x1e8] sm:$0xf]
        %v3185 = vld [vmem:[#allocation15 + $0x1ec] sm:$0xff]
        %v3186 = vld [vmem:[#allocation15 + $0x1f4] sm:$0xf]
        %v3187 = vld [vmem:[#allocation15 + $0x1f8] sm:$0xff]
        %v3188 = vld [vmem:[#allocation15 + $0x200] sm:$0xf]
        %v3189 = vld [vmem:[#allocation15 + $0x204] sm:$0xff]
        %v3190 = vld [vmem:[#allocation15 + $0x20c] sm:$0xf]
        %v3191 = vld [vmem:[#allocation15 + $0x210] sm:$0xff]
        %v3192 = vld [vmem:[#allocation15 + $0x218] sm:$0xf]
        %v3193 = vld [vmem:[#allocation15 + $0x21c] sm:$0xff]
        %v3194 = vld [vmem:[#allocation15 + $0x224] sm:$0xf]
        %v3195 = vld [vmem:[#allocation15 + $0x228] sm:$0xff]
        %v3196 = vld [vmem:[#allocation15 + $0x230] sm:$0xf]
        %v3197 = vld [vmem:[#allocation15 + $0x234] sm:$0xff]
        %v3198 = vld [vmem:[#allocation15 + $0x23c] sm:$0xf]
        %v3199 = vld [vmem:[%s10] sm:$0x7]
        %v3201 = vlaneseq
        %v3202 = vshrl.u32 %v3201, 7
        %v3203 = vsub.s32 0, %v3202
        %v3204 = vrot.slane %v3199, %v3203
        %v3205 = vlaneseq
        %v3206 = vshrl.u32 %v3205, 7
        %v3207 = vsub.s32 1, %v3206
        %v3208 = vrot.slane %v3199, %v3207
        %v3209 = vlaneseq
        %v3210 = vshrl.u32 %v3209, 7
        %v3211 = vsub.s32 2, %v3210
        %v3212 = vrot.slane %v3199, %v3211
        %v3232 = vunpack.c.l.b16 %v3087
        %v3233 = vunpack.c.h.b16 %v3087
        %v3234 = vunpack.c.l.b16 %v3088
        %v3235 = vunpack.c.l.b16 %v3089
        %v3236 = vunpack.c.h.b16 %v3089
        %v3237 = vunpack.c.l.b16 %v3090
        %v3238 = vunpack.c.l.b16 %v3091
        %v3239 = vunpack.c.h.b16 %v3091
        %v3240 = vunpack.c.l.b16 %v3092
        %v3241 = vunpack.c.l.b16 %v3093
        %v3242 = vunpack.c.h.b16 %v3093
        %v3243 = vunpack.c.l.b16 %v3094
        %v3244 = vunpack.c.l.b16 %v3095
        %v3245 = vunpack.c.h.b16 %v3095
        %v3246 = vunpack.c.l.b16 %v3096
        %v3247 = vunpack.c.l.b16 %v3097
        %v3248 = vunpack.c.h.b16 %v3097
        %v3249 = vunpack.c.l.b16 %v3098
        %v3250 = vunpack.c.l.b16 %v3099
        %v3251 = vunpack.c.h.b16 %v3099
        %v3252 = vunpack.c.l.b16 %v3100
        %v3253 = vunpack.c.l.b16 %v3101
        %v3254 = vunpack.c.h.b16 %v3101
        %v3255 = vunpack.c.l.b16 %v3102
        %v3256 = vpack.c.b16 %v3235, %v3232
        %v3257 = vpack.c.b16 %v3236, %v3233
        %v3258 = vpack.c.b16 %v3237, %v3234
        %v3259 = vpack.c.b16 %v3241, %v3238
        %v3260 = vpack.c.b16 %v3242, %v3239
        %v3261 = vpack.c.b16 %v3243, %v3240
        %v3262 = vpack.c.b16 %v3247, %v3244
        %v3263 = vpack.c.b16 %v3248, %v3245
        %v3264 = vpack.c.b16 %v3249, %v3246
        %v3265 = vpack.c.b16 %v3253, %v3250
        %v3266 = vpack.c.b16 %v3254, %v3251
        %v3267 = vpack.c.b16 %v3255, %v3252
        %v3376 = vunpack.c.l.b16 %v3103
        %v3377 = vunpack.c.h.b16 %v3103
        %v3378 = vunpack.c.l.b16 %v3104
        %v3379 = vunpack.c.l.b16 %v3105
        %v3380 = vunpack.c.h.b16 %v3105
        %v3381 = vunpack.c.l.b16 %v3106
        %v3382 = vunpack.c.l.b16 %v3107
        %v3383 = vunpack.c.h.b16 %v3107
        %v3384 = vunpack.c.l.b16 %v3108
        %v3385 = vunpack.c.l.b16 %v3109
        %v3386 = vunpack.c.h.b16 %v3109
        %v3387 = vunpack.c.l.b16 %v3110
        %v3388 = vunpack.c.l.b16 %v3111
        %v3389 = vunpack.c.h.b16 %v3111
        %v3390 = vunpack.c.l.b16 %v3112
        %v3391 = vunpack.c.l.b16 %v3113
        %v3392 = vunpack.c.h.b16 %v3113
        %v3393 = vunpack.c.l.b16 %v3114
        %v3394 = vunpack.c.l.b16 %v3115
        %v3395 = vunpack.c.h.b16 %v3115
        %v3396 = vunpack.c.l.b16 %v3116
        %v3397 = vunpack.c.l.b16 %v3117
        %v3398 = vunpack.c.h.b16 %v3117
        %v3399 = vunpack.c.l.b16 %v3118
        %v3400 = vunpack.c.l.b16 %v3119
        %v3401 = vunpack.c.h.b16 %v3119
        %v3402 = vunpack.c.l.b16 %v3120
        %v3403 = vunpack.c.l.b16 %v3121
        %v3404 = vunpack.c.h.b16 %v3121
        %v3405 = vunpack.c.l.b16 %v3122
        %v3406 = vunpack.c.l.b16 %v3123
        %v3407 = vunpack.c.h.b16 %v3123
        %v3408 = vunpack.c.l.b16 %v3124
        %v3409 = vunpack.c.l.b16 %v3125
        %v3410 = vunpack.c.h.b16 %v3125
        %v3411 = vunpack.c.l.b16 %v3126
        %v3412 = vunpack.c.l.b16 %v3127
        %v3413 = vunpack.c.h.b16 %v3127
        %v3414 = vunpack.c.l.b16 %v3128
        %v3415 = vunpack.c.l.b16 %v3129
        %v3416 = vunpack.c.h.b16 %v3129
        %v3417 = vunpack.c.l.b16 %v3130
        %v3418 = vunpack.c.l.b16 %v3131
        %v3419 = vunpack.c.h.b16 %v3131
        %v3420 = vunpack.c.l.b16 %v3132
        %v3421 = vunpack.c.l.b16 %v3133
        %v3422 = vunpack.c.h.b16 %v3133
        %v3423 = vunpack.c.l.b16 %v3134
        %v3424 = vunpack.c.l.b16 %v3135
        %v3425 = vunpack.c.h.b16 %v3135
        %v3426 = vunpack.c.l.b16 %v3136
        %v3427 = vunpack.c.l.b16 %v3137
        %v3428 = vunpack.c.h.b16 %v3137
        %v3429 = vunpack.c.l.b16 %v3138
        %v3430 = vunpack.c.l.b16 %v3139
        %v3431 = vunpack.c.h.b16 %v3139
        %v3432 = vunpack.c.l.b16 %v3140
        %v3433 = vunpack.c.l.b16 %v3141
        %v3434 = vunpack.c.h.b16 %v3141
        %v3435 = vunpack.c.l.b16 %v3142
        %v3436 = vunpack.c.l.b16 %v3143
        %v3437 = vunpack.c.h.b16 %v3143
        %v3438 = vunpack.c.l.b16 %v3144
        %v3439 = vunpack.c.l.b16 %v3145
        %v3440 = vunpack.c.h.b16 %v3145
        %v3441 = vunpack.c.l.b16 %v3146
        %v3442 = vunpack.c.l.b16 %v3147
        %v3443 = vunpack.c.h.b16 %v3147
        %v3444 = vunpack.c.l.b16 %v3148
        %v3445 = vunpack.c.l.b16 %v3149
        %v3446 = vunpack.c.h.b16 %v3149
        %v3447 = vunpack.c.l.b16 %v3150
        %v3448 = vunpack.c.l.b16 %v3151
        %v3449 = vunpack.c.h.b16 %v3151
        %v3450 = vunpack.c.l.b16 %v3152
        %v3451 = vunpack.c.l.b16 %v3153
        %v3452 = vunpack.c.h.b16 %v3153
        %v3453 = vunpack.c.l.b16 %v3154
        %v3454 = vunpack.c.l.b16 %v3155
        %v3455 = vunpack.c.h.b16 %v3155
        %v3456 = vunpack.c.l.b16 %v3156
        %v3457 = vunpack.c.l.b16 %v3157
        %v3458 = vunpack.c.h.b16 %v3157
        %v3459 = vunpack.c.l.b16 %v3158
        %v3460 = vunpack.c.l.b16 %v3159
        %v3461 = vunpack.c.h.b16 %v3159
        %v3462 = vunpack.c.l.b16 %v3160
        %v3463 = vunpack.c.l.b16 %v3161
        %v3464 = vunpack.c.h.b16 %v3161
        %v3465 = vunpack.c.l.b16 %v3162
        %v3466 = vunpack.c.l.b16 %v3163
        %v3467 = vunpack.c.h.b16 %v3163
        %v3468 = vunpack.c.l.b16 %v3164
        %v3469 = vunpack.c.l.b16 %v3165
        %v3470 = vunpack.c.h.b16 %v3165
        %v3471 = vunpack.c.l.b16 %v3166
        %v3472 = vunpack.c.l.b16 %v3167
        %v3473 = vunpack.c.h.b16 %v3167
        %v3474 = vunpack.c.l.b16 %v3168
        %v3475 = vunpack.c.l.b16 %v3169
        %v3476 = vunpack.c.h.b16 %v3169
        %v3477 = vunpack.c.l.b16 %v3170
        %v3478 = vunpack.c.l.b16 %v3171
        %v3479 = vunpack.c.h.b16 %v3171
        %v3480 = vunpack.c.l.b16 %v3172
        %v3481 = vunpack.c.l.b16 %v3173
        %v3482 = vunpack.c.h.b16 %v3173
        %v3483 = vunpack.c.l.b16 %v3174
        %v3484 = vunpack.c.l.b16 %v3175
        %v3485 = vunpack.c.h.b16 %v3175
        %v3486 = vunpack.c.l.b16 %v3176
        %v3487 = vunpack.c.l.b16 %v3177
        %v3488 = vunpack.c.h.b16 %v3177
        %v3489 = vunpack.c.l.b16 %v3178
        %v3490 = vunpack.c.l.b16 %v3179
        %v3491 = vunpack.c.h.b16 %v3179
        %v3492 = vunpack.c.l.b16 %v3180
        %v3493 = vunpack.c.l.b16 %v3181
        %v3494 = vunpack.c.h.b16 %v3181
        %v3495 = vunpack.c.l.b16 %v3182
        %v3496 = vunpack.c.l.b16 %v3183
        %v3497 = vunpack.c.h.b16 %v3183
        %v3498 = vunpack.c.l.b16 %v3184
        %v3499 = vunpack.c.l.b16 %v3185
        %v3500 = vunpack.c.h.b16 %v3185
        %v3501 = vunpack.c.l.b16 %v3186
        %v3502 = vunpack.c.l.b16 %v3187
        %v3503 = vunpack.c.h.b16 %v3187
        %v3504 = vunpack.c.l.b16 %v3188
        %v3505 = vunpack.c.l.b16 %v3189
        %v3506 = vunpack.c.h.b16 %v3189
        %v3507 = vunpack.c.l.b16 %v3190
        %v3508 = vunpack.c.l.b16 %v3191
        %v3509 = vunpack.c.h.b16 %v3191
        %v3510 = vunpack.c.l.b16 %v3192
        %v3511 = vunpack.c.l.b16 %v3193
        %v3512 = vunpack.c.h.b16 %v3193
        %v3513 = vunpack.c.l.b16 %v3194
        %v3514 = vunpack.c.l.b16 %v3195
        %v3515 = vunpack.c.h.b16 %v3195
        %v3516 = vunpack.c.l.b16 %v3196
        %v3517 = vunpack.c.l.b16 %v3197
        %v3518 = vunpack.c.h.b16 %v3197
        %v3519 = vunpack.c.l.b16 %v3198
        %v3520 = vpack.c.b16 %v3379, %v3376
        %v3521 = vpack.c.b16 %v3380, %v3377
        %v3522 = vpack.c.b16 %v3381, %v3378
        %v3523 = vpack.c.b16 %v3385, %v3382
        %v3524 = vpack.c.b16 %v3386, %v3383
        %v3525 = vpack.c.b16 %v3387, %v3384
        %v3526 = vpack.c.b16 %v3391, %v3388
        %v3527 = vpack.c.b16 %v3392, %v3389
        %v3528 = vpack.c.b16 %v3393, %v3390
        %v3529 = vpack.c.b16 %v3397, %v3394
        %v3530 = vpack.c.b16 %v3398, %v3395
        %v3531 = vpack.c.b16 %v3399, %v3396
        %v3532 = vpack.c.b16 %v3403, %v3400
        %v3533 = vpack.c.b16 %v3404, %v3401
        %v3534 = vpack.c.b16 %v3405, %v3402
        %v3535 = vpack.c.b16 %v3409, %v3406
        %v3536 = vpack.c.b16 %v3410, %v3407
        %v3537 = vpack.c.b16 %v3411, %v3408
        %v3538 = vpack.c.b16 %v3415, %v3412
        %v3539 = vpack.c.b16 %v3416, %v3413
        %v3540 = vpack.c.b16 %v3417, %v3414
        %v3541 = vpack.c.b16 %v3421, %v3418
        %v3542 = vpack.c.b16 %v3422, %v3419
        %v3543 = vpack.c.b16 %v3423, %v3420
        %v3544 = vpack.c.b16 %v3427, %v3424
        %v3545 = vpack.c.b16 %v3428, %v3425
        %v3546 = vpack.c.b16 %v3429, %v3426
        %v3547 = vpack.c.b16 %v3433, %v3430
        %v3548 = vpack.c.b16 %v3434, %v3431
        %v3549 = vpack.c.b16 %v3435, %v3432
        %v3550 = vpack.c.b16 %v3439, %v3436
        %v3551 = vpack.c.b16 %v3440, %v3437
        %v3552 = vpack.c.b16 %v3441, %v3438
        %v3553 = vpack.c.b16 %v3445, %v3442
        %v3554 = vpack.c.b16 %v3446, %v3443
        %v3555 = vpack.c.b16 %v3447, %v3444
        %v3556 = vpack.c.b16 %v3451, %v3448
        %v3557 = vpack.c.b16 %v3452, %v3449
        %v3558 = vpack.c.b16 %v3453, %v3450
        %v3559 = vpack.c.b16 %v3457, %v3454
        %v3560 = vpack.c.b16 %v3458, %v3455
        %v3561 = vpack.c.b16 %v3459, %v3456
        %v3562 = vpack.c.b16 %v3463, %v3460
        %v3563 = vpack.c.b16 %v3464, %v3461
        %v3564 = vpack.c.b16 %v3465, %v3462
        %v3565 = vpack.c.b16 %v3469, %v3466
        %v3566 = vpack.c.b16 %v3470, %v3467
        %v3567 = vpack.c.b16 %v3471, %v3468
        %v3568 = vpack.c.b16 %v3475, %v3472
        %v3569 = vpack.c.b16 %v3476, %v3473
        %v3570 = vpack.c.b16 %v3477, %v3474
        %v3571 = vpack.c.b16 %v3481, %v3478
        %v3572 = vpack.c.b16 %v3482, %v3479
        %v3573 = vpack.c.b16 %v3483, %v3480
        %v3574 = vpack.c.b16 %v3487, %v3484
        %v3575 = vpack.c.b16 %v3488, %v3485
        %v3576 = vpack.c.b16 %v3489, %v3486
        %v3577 = vpack.c.b16 %v3493, %v3490
        %v3578 = vpack.c.b16 %v3494, %v3491
        %v3579 = vpack.c.b16 %v3495, %v3492
        %v3580 = vpack.c.b16 %v3499, %v3496
        %v3581 = vpack.c.b16 %v3500, %v3497
        %v3582 = vpack.c.b16 %v3501, %v3498
        %v3583 = vpack.c.b16 %v3505, %v3502
        %v3584 = vpack.c.b16 %v3506, %v3503
        %v3585 = vpack.c.b16 %v3507, %v3504
        %v3586 = vpack.c.b16 %v3511, %v3508
        %v3587 = vpack.c.b16 %v3512, %v3509
        %v3588 = vpack.c.b16 %v3513, %v3510
        %v3589 = vpack.c.b16 %v3517, %v3514
        %v3590 = vpack.c.b16 %v3518, %v3515
        %v3591 = vpack.c.b16 %v3519, %v3516
        %3664 = vmatprep.subr.bf16.mxu0 %v3542
        %3665 = vmatpush1.bf16.msra.mxu0 %v3541
        %3666 = vmatprep.subr.bf16.mxu0 %v3539
        %3667 = vmatpush1.bf16.msra.mxu0 %v3538
        %3668 = vmatprep.subr.bf16.mxu0 %v3536
        %3669 = vmatpush1.bf16.msra.mxu0 %v3535
        %3670 = vmatprep.subr.bf16.mxu0 %v3533
        %3671 = vmatpush1.bf16.msra.mxu0 %v3532
        %3672 = vmatprep.subr.bf16.mxu0 %v3530
        %3673 = vmatpush1.bf16.msra.mxu0 %v3529
        %3674 = vmatprep.subr.bf16.mxu0 %v3527
        %3675 = vmatpush1.bf16.msra.mxu0 %v3526
        %3676 = vmatprep.subr.bf16.mxu0 %v3524
        %3677 = vmatpush1.bf16.msra.mxu0 %v3523
        %3678 = vmatprep.subr.bf16.mxu0 %v3521
        %3679 = vmatpush1.bf16.msra.mxu0 %v3520
        %3680 = vmatprep.subr.bf16.mxu0 %v3566
        %3681 = vmatpush2.bf16.msra.mxu0 %v3565
        %3682 = vmatprep.subr.bf16.mxu0 %v3563
        %3683 = vmatpush2.bf16.msra.mxu0 %v3562
        %3684 = vmatprep.subr.bf16.mxu0 %v3560
        %3685 = vmatpush2.bf16.msra.mxu0 %v3559
        %3686 = vmatprep.subr.bf16.mxu0 %v3557
        %3687 = vmatpush2.bf16.msra.mxu0 %v3556
        %3688 = vmatprep.subr.bf16.mxu0 %v3554
        %3689 = vmatpush2.bf16.msra.mxu0 %v3553
        %3690 = vmatprep.subr.bf16.mxu0 %v3551
        %3691 = vmatpush2.bf16.msra.mxu0 %v3550
        %3692 = vmatprep.subr.bf16.mxu0 %v3548
        %3693 = vmatpush2.bf16.msra.mxu0 %v3547
        %3694 = vmatprep.subr.bf16.mxu0 %v3545
        %3695 = vmatpush2.bf16.msra.mxu0 %v3544
        %3696 = vmatprep.mubr.bf16.mxu0 %v3257
        %3697 = vmatmul.mubr.bf16.gmra.mxu0 %v3256
        %v3698 = vpop.f32.mrf.mxu0
        %v3699 = vadd.f32 %v3204, %v3698
        %v3700 = vpop.f32.mrf.mxu0
        %v3701 = vadd.f32 %v3208, %v3700
        %v3702 = vpop.f32.mrf.mxu0
        %v3703 = vadd.f32 %v3204, %v3702
        %v3704 = vpop.f32.mrf.mxu0
        %v3705 = vadd.f32 %v3208, %v3704
        %3706 = vmatprep.mubr.bf16.mxu0 %v3260
        %3707 = vmatmul.mubr.bf16.gmra.mxu0 %v3259
        %v3708 = vpop.f32.mrf.mxu0
        %v3709 = vadd.f32 %v3204, %v3708
        %v3710 = vpop.f32.mrf.mxu0
        %v3711 = vadd.f32 %v3208, %v3710
        %v3712 = vpop.f32.mrf.mxu0
        %v3713 = vadd.f32 %v3204, %v3712
        %v3714 = vpop.f32.mrf.mxu0
        %v3715 = vadd.f32 %v3208, %v3714
        %3716 = vmatprep.mubr.bf16.mxu0 %v3263
        %3717 = vmatmul.mubr.bf16.gmra.mxu0 %v3262
        %v3718 = vpop.f32.mrf.mxu0
        %v3719 = vadd.f32 %v3204, %v3718
        %v3720 = vpop.f32.mrf.mxu0
        %v3721 = vadd.f32 %v3208, %v3720
        %v3722 = vpop.f32.mrf.mxu0
        %v3723 = vadd.f32 %v3204, %v3722
        %v3724 = vpop.f32.mrf.mxu0
        %v3725 = vadd.f32 %v3208, %v3724
        %3726 = vmatprep.mubr.bf16.mxu0 %v3266
        %3727 = vmatmul.mubr.bf16.gmra.mxu0 %v3265
        %v3728 = vpop.f32.mrf.mxu0
        %v3729 = vadd.f32 %v3204, %v3728
        %v3730 = vpop.f32.mrf.mxu0
        %v3731 = vadd.f32 %v3208, %v3730
        %v3732 = vpop.f32.mrf.mxu0
        %v3733 = vadd.f32 %v3204, %v3732
        %v3734 = vpop.f32.mrf.mxu0
        %v3735 = vadd.f32 %v3208, %v3734
        %3736 = vdwg.mxu0
        %3737 = vmatprep.subr.bf16.mxu0 %v3590
        %3738 = vmatpush1.bf16.msra.mxu0 %v3589
        %3739 = vmatprep.subr.bf16.mxu0 %v3587
        %3740 = vmatpush1.bf16.msra.mxu0 %v3586
        %3741 = vmatprep.subr.bf16.mxu0 %v3584
        %3742 = vmatpush1.bf16.msra.mxu0 %v3583
        %3743 = vmatprep.subr.bf16.mxu0 %v3581
        %3744 = vmatpush1.bf16.msra.mxu0 %v3580
        %3745 = vmatprep.subr.bf16.mxu0 %v3578
        %3746 = vmatpush1.bf16.msra.mxu0 %v3577
        %3747 = vmatprep.subr.bf16.mxu0 %v3575
        %3748 = vmatpush1.bf16.msra.mxu0 %v3574
        %3749 = vmatprep.subr.bf16.mxu0 %v3572
        %3750 = vmatpush1.bf16.msra.mxu0 %v3571
        %3751 = vmatprep.subr.bf16.mxu0 %v3569
        %3752 = vmatpush1.bf16.msra.mxu0 %v3568
        %3753 = vmatprep.subr.bf16.mxu0 0
        %3754 = vmatpush2.bf16.msra.mxu0 0
        %3755 = vmatprep.subr.bf16.mxu0 0
        %3756 = vmatpush2.bf16.msra.mxu0 0
        %3757 = vmatprep.subr.bf16.mxu0 0
        %3758 = vmatpush2.bf16.msra.mxu0 0
        %3759 = vmatprep.subr.bf16.mxu0 0
        %3760 = vmatpush2.bf16.msra.mxu0 0
        %3761 = vmatprep.subr.bf16.mxu0 0
        %3762 = vmatpush2.bf16.msra.mxu0 0
        %3763 = vmatprep.subr.bf16.mxu0 0
        %3764 = vmatpush2.bf16.msra.mxu0 0
        %3765 = vmatprep.subr.bf16.mxu0 0
        %3766 = vmatpush2.bf16.msra.mxu0 0
        %3767 = vmatprep.subr.bf16.mxu0 0
        %3768 = vmatpush2.bf16.msra.mxu0 0
        %3769 = vmatprep.mubr.bf16.mxu0 0
        %3770 = vmatmul.mubr.bf16.gmra.mxu0 %v3258
        %v3771 = vpop.f32.mrf.mxu0
        %v3772 = vadd.f32 %v3699, %v3771
        %v3773 = vpop.f32.mrf.mxu0
        %v3774 = vadd.f32 %v3701, %v3773
        %v3775 = vpop.f32.mrf.mxu0
        %v3776 = vadd.f32 %v3703, %v3775
        %v3777 = vpop.f32.mrf.mxu0
        %v3778 = vadd.f32 %v3705, %v3777
        %3779 = vmatprep.mubr.bf16.mxu0 0
        %3780 = vmatmul.mubr.bf16.gmra.mxu0 %v3261
        %v3781 = vpop.f32.mrf.mxu0
        %v3782 = vadd.f32 %v3709, %v3781
        %v3783 = vpop.f32.mrf.mxu0
        %v3784 = vadd.f32 %v3711, %v3783
        %v3785 = vpop.f32.mrf.mxu0
        %v3786 = vadd.f32 %v3713, %v3785
        %v3787 = vpop.f32.mrf.mxu0
        %v3788 = vadd.f32 %v3715, %v3787
        %3789 = vmatprep.mubr.bf16.mxu0 0
        %3790 = vmatmul.mubr.bf16.gmra.mxu0 %v3264
        %v3791 = vpop.f32.mrf.mxu0
        %v3792 = vadd.f32 %v3719, %v3791
        %v3793 = vpop.f32.mrf.mxu0
        %v3794 = vadd.f32 %v3721, %v3793
        %v3795 = vpop.f32.mrf.mxu0
        %v3796 = vadd.f32 %v3723, %v3795
        %v3797 = vpop.f32.mrf.mxu0
        %v3798 = vadd.f32 %v3725, %v3797
        %3799 = vmatprep.mubr.bf16.mxu0 0
        %3800 = vmatmul.mubr.bf16.gmra.mxu0 %v3267
        %v3801 = vpop.f32.mrf.mxu0
        %v3802 = vadd.f32 %v3729, %v3801
        %v3803 = vpop.f32.mrf.mxu0
        %v3804 = vadd.f32 %v3731, %v3803
        %v3805 = vpop.f32.mrf.mxu0
        %v3806 = vadd.f32 %v3733, %v3805
        %v3807 = vpop.f32.mrf.mxu0
        %v3808 = vadd.f32 %v3735, %v3807
        %3809 = vdwg.mxu0
        %3810 = vmatprep.subr.bf16.mxu0 0
        %3811 = vmatpush1.bf16.msra.mxu0 %v3543
        %3812 = vmatprep.subr.bf16.mxu0 0
        %3813 = vmatpush1.bf16.msra.mxu0 %v3540
        %3814 = vmatprep.subr.bf16.mxu0 0
        %3815 = vmatpush1.bf16.msra.mxu0 %v3537
        %3816 = vmatprep.subr.bf16.mxu0 0
        %3817 = vmatpush1.bf16.msra.mxu0 %v3534
        %3818 = vmatprep.subr.bf16.mxu0 0
        %3819 = vmatpush1.bf16.msra.mxu0 %v3531
        %3820 = vmatprep.subr.bf16.mxu0 0
        %3821 = vmatpush1.bf16.msra.mxu0 %v3528
        %3822 = vmatprep.subr.bf16.mxu0 0
        %3823 = vmatpush1.bf16.msra.mxu0 %v3525
        %3824 = vmatprep.subr.bf16.mxu0 0
        %3825 = vmatpush1.bf16.msra.mxu0 %v3522
        %3826 = vmatprep.subr.bf16.mxu0 0
        %3827 = vmatpush2.bf16.msra.mxu0 %v3567
        %3828 = vmatprep.subr.bf16.mxu0 0
        %3829 = vmatpush2.bf16.msra.mxu0 %v3564
        %3830 = vmatprep.subr.bf16.mxu0 0
        %3831 = vmatpush2.bf16.msra.mxu0 %v3561
        %3832 = vmatprep.subr.bf16.mxu0 0
        %3833 = vmatpush2.bf16.msra.mxu0 %v3558
        %3834 = vmatprep.subr.bf16.mxu0 0
        %3835 = vmatpush2.bf16.msra.mxu0 %v3555
        %3836 = vmatprep.subr.bf16.mxu0 0
        %3837 = vmatpush2.bf16.msra.mxu0 %v3552
        %3838 = vmatprep.subr.bf16.mxu0 0
        %3839 = vmatpush2.bf16.msra.mxu0 %v3549
        %3840 = vmatprep.subr.bf16.mxu0 0
        %3841 = vmatpush2.bf16.msra.mxu0 %v3546
        %3842 = vmatprep.mubr.bf16.mxu0 %v3257
        %3843 = vmatmul.mubr.bf16.gmra.mxu0 %v3256
        %v3844 = vpop.f32.mrf.mxu0
        %v3845 = vadd.f32 %v3212, %v3844
        %v3846 = vpop.f32.mrf.mxu0
        %v3847 = vpop.f32.mrf.mxu0
        %v3848 = vadd.f32 %v3212, %v3847
        %v3849 = vpop.f32.mrf.mxu0
        %3850 = vmatprep.mubr.bf16.mxu0 %v3260
        %3851 = vmatmul.mubr.bf16.gmra.mxu0 %v3259
        %v3852 = vpop.f32.mrf.mxu0
        %v3853 = vadd.f32 %v3212, %v3852
        %v3854 = vpop.f32.mrf.mxu0
        %v3855 = vpop.f32.mrf.mxu0
        %v3856 = vadd.f32 %v3212, %v3855
        %v3857 = vpop.f32.mrf.mxu0
        %3858 = vmatprep.mubr.bf16.mxu0 %v3263
        %3859 = vmatmul.mubr.bf16.gmra.mxu0 %v3262
        %v3860 = vpop.f32.mrf.mxu0
        %v3861 = vadd.f32 %v3212, %v3860
        %v3862 = vpop.f32.mrf.mxu0
        %v3863 = vpop.f32.mrf.mxu0
        %v3864 = vadd.f32 %v3212, %v3863
        %v3865 = vpop.f32.mrf.mxu0
        %3866 = vmatprep.mubr.bf16.mxu0 %v3266
        %3867 = vmatmul.mubr.bf16.gmra.mxu0 %v3265
        %v3868 = vpop.f32.mrf.mxu0
        %v3869 = vadd.f32 %v3212, %v3868
        %v3870 = vpop.f32.mrf.mxu0
        %v3871 = vpop.f32.mrf.mxu0
        %v3872 = vadd.f32 %v3212, %v3871
        %v3873 = vpop.f32.mrf.mxu0
        %3874 = vdwg.mxu0
        %3875 = vmatprep.subr.bf16.mxu0 0
        %3876 = vmatpush1.bf16.msra.mxu0 %v3591
        %3877 = vmatprep.subr.bf16.mxu0 0
        %3878 = vmatpush1.bf16.msra.mxu0 %v3588
        %3879 = vmatprep.subr.bf16.mxu0 0
        %3880 = vmatpush1.bf16.msra.mxu0 %v3585
        %3881 = vmatprep.subr.bf16.mxu0 0
        %3882 = vmatpush1.bf16.msra.mxu0 %v3582
        %3883 = vmatprep.subr.bf16.mxu0 0
        %3884 = vmatpush1.bf16.msra.mxu0 %v3579
        %3885 = vmatprep.subr.bf16.mxu0 0
        %3886 = vmatpush1.bf16.msra.mxu0 %v3576
        %3887 = vmatprep.subr.bf16.mxu0 0
        %3888 = vmatpush1.bf16.msra.mxu0 %v3573
        %3889 = vmatprep.subr.bf16.mxu0 0
        %3890 = vmatpush1.bf16.msra.mxu0 %v3570
        %3891 = vmatprep.subr.bf16.mxu0 0
        %3892 = vmatpush2.bf16.msra.mxu0 0
        %3893 = vmatprep.subr.bf16.mxu0 0
        %3894 = vmatpush2.bf16.msra.mxu0 0
        %3895 = vmatprep.subr.bf16.mxu0 0
        %3896 = vmatpush2.bf16.msra.mxu0 0
        %3897 = vmatprep.subr.bf16.mxu0 0
        %3898 = vmatpush2.bf16.msra.mxu0 0
        %3899 = vmatprep.subr.bf16.mxu0 0
        %3900 = vmatpush2.bf16.msra.mxu0 0
        %3901 = vmatprep.subr.bf16.mxu0 0
        %3902 = vmatpush2.bf16.msra.mxu0 0
        %3903 = vmatprep.subr.bf16.mxu0 0
        %3904 = vmatpush2.bf16.msra.mxu0 0
        %3905 = vmatprep.subr.bf16.mxu0 0
        %3906 = vmatpush2.bf16.msra.mxu0 0
        %3907 = vmatprep.mubr.bf16.mxu0 0
        %3908 = vmatmul.mubr.bf16.gmra.mxu0 %v3258
        %v3909 = vpop.f32.mrf.mxu0
        %v3910 = vadd.f32 %v3845, %v3909
        %v3911 = vpop.f32.mrf.mxu0
        %v3912 = vpop.f32.mrf.mxu0
        %v3913 = vadd.f32 %v3848, %v3912
        %v3914 = vpop.f32.mrf.mxu0
        %3915 = vmatprep.mubr.bf16.mxu0 0
        %3916 = vmatmul.mubr.bf16.gmra.mxu0 %v3261
        %v3917 = vpop.f32.mrf.mxu0
        %v3918 = vadd.f32 %v3853, %v3917
        %v3919 = vpop.f32.mrf.mxu0
        %v3920 = vpop.f32.mrf.mxu0
        %v3921 = vadd.f32 %v3856, %v3920
        %v3922 = vpop.f32.mrf.mxu0
        %3923 = vmatprep.mubr.bf16.mxu0 0
        %3924 = vmatmul.mubr.bf16.gmra.mxu0 %v3264
        %v3925 = vpop.f32.mrf.mxu0
        %v3926 = vadd.f32 %v3861, %v3925
        %v3927 = vpop.f32.mrf.mxu0
        %v3928 = vpop.f32.mrf.mxu0
        %v3929 = vadd.f32 %v3864, %v3928
        %v3930 = vpop.f32.mrf.mxu0
        %3931 = vmatprep.mubr.bf16.mxu0 0
        %3932 = vmatmul.mubr.bf16.gmra.mxu0 %v3267
        %v3933 = vpop.f32.mrf.mxu0
        %v3934 = vadd.f32 %v3869, %v3933
        %v3935 = vpop.f32.mrf.mxu0
        %v3936 = vpop.f32.mrf.mxu0
        %v3937 = vadd.f32 %v3872, %v3936
        %v3938 = vpop.f32.mrf.mxu0
        %3939 = vdwg.mxu0
        %v3940 = vadd.f32 %v3772, %v623
        %v3941 = vadd.f32 %v3774, %v624
        %v3942 = vadd.f32 %v3910, %v625
        %v3943 = vadd.f32 %v3776, %v626
        %v3944 = vadd.f32 %v3778, %v627
        %v3945 = vadd.f32 %v3913, %v628
        %v3946 = vadd.f32 %v3782, %v629
        %v3947 = vadd.f32 %v3784, %v630
        %v3948 = vadd.f32 %v3918, %v631
        %v3949 = vadd.f32 %v3786, %v632
        %v3950 = vadd.f32 %v3788, %v633
        %v3951 = vadd.f32 %v3921, %v634
        %v3952 = vadd.f32 %v3792, %v635
        %v3953 = vadd.f32 %v3794, %v636
        %v3954 = vadd.f32 %v3926, %v637
        %v3955 = vadd.f32 %v3796, %v638
        %v3956 = vadd.f32 %v3798, %v639
        %v3957 = vadd.f32 %v3929, %v640
        %v3958 = vadd.f32 %v3802, %v641
        %v3959 = vadd.f32 %v3804, %v642
        %v3960 = vadd.f32 %v3934, %v643
        %v3961 = vadd.f32 %v3806, %v644
        %v3962 = vadd.f32 %v3808, %v645
        %v3963 = vadd.f32 %v3937, %v646
        %v3964 = vadd.f32 %v3940, %v3941
        %v3965 = vadd.f32 %v3964, %v3942
        %3966 = vadd.xlane.f32.xlu0 %v3965
        %v3967 = vpop.xlane.xlu0 %3966
        %v3968 = vadd.f32 %v3943, %v3944
        %v3969 = vadd.f32 %v3968, %v3945
        %3970 = vadd.xlane.f32.xlu0 %v3969
        %v3971 = vpop.xlane.xlu0 %3970
        %v3972 = vadd.f32 %v3946, %v3947
        %v3973 = vadd.f32 %v3972, %v3948
        %3974 = vadd.xlane.f32.xlu0 %v3973
        %v3975 = vpop.xlane.xlu0 %3974
        %v3976 = vadd.f32 %v3949, %v3950
        %v3977 = vadd.f32 %v3976, %v3951
        %3978 = vadd.xlane.f32.xlu0 %v3977
        %v3979 = vpop.xlane.xlu0 %3978
        %v3980 = vadd.f32 %v3952, %v3953
        %v3981 = vadd.f32 %v3980, %v3954
        %3982 = vadd.xlane.f32.xlu0 %v3981
        %v3983 = vpop.xlane.xlu0 %3982
        %v3984 = vadd.f32 %v3955, %v3956
        %v3985 = vadd.f32 %v3984, %v3957
        %3986 = vadd.xlane.f32.xlu0 %v3985
        %v3987 = vpop.xlane.xlu0 %3986
        %v3988 = vadd.f32 %v3958, %v3959
        %v3989 = vadd.f32 %v3988, %v3960
        %3990 = vadd.xlane.f32.xlu0 %v3989
        %v3991 = vpop.xlane.xlu0 %3990
        %v3992 = vadd.f32 %v3961, %v3962
        %v3993 = vadd.f32 %v3992, %v3963
        %3994 = vadd.xlane.f32.xlu0 %v3993
        %v3995 = vpop.xlane.xlu0 %3994
        %v3996 = vrcp.pop 384.0
        %v3997 = vmul.f32 %v3967, %v3996
        %v3998 = vmul.f32 %v3971, %v3996
        %v3999 = vmul.f32 %v3975, %v3996
        %v4000 = vmul.f32 %v3979, %v3996
        %v4001 = vmul.f32 %v3983, %v3996
        %v4002 = vmul.f32 %v3987, %v3996
        %v4003 = vmul.f32 %v3991, %v3996
        %v4004 = vmul.f32 %v3995, %v3996
        %v4005 = vsub.f32 %v3940, %v3997
        %v4006 = vsub.f32 %v3941, %v3997
        %v4007 = vsub.f32 %v3942, %v3997
        %v4008 = vsub.f32 %v3943, %v3998
        %v4009 = vsub.f32 %v3944, %v3998
        %v4010 = vsub.f32 %v3945, %v3998
        %v4011 = vsub.f32 %v3946, %v3999
        %v4012 = vsub.f32 %v3947, %v3999
        %v4013 = vsub.f32 %v3948, %v3999
        %v4014 = vsub.f32 %v3949, %v4000
        %v4015 = vsub.f32 %v3950, %v4000
        %v4016 = vsub.f32 %v3951, %v4000
        %v4017 = vsub.f32 %v3952, %v4001
        %v4018 = vsub.f32 %v3953, %v4001
        %v4019 = vsub.f32 %v3954, %v4001
        %v4020 = vsub.f32 %v3955, %v4002
        %v4021 = vsub.f32 %v3956, %v4002
        %v4022 = vsub.f32 %v3957, %v4002
        %v4023 = vsub.f32 %v3958, %v4003
        %v4024 = vsub.f32 %v3959, %v4003
        %v4025 = vsub.f32 %v3960, %v4003
        %v4026 = vsub.f32 %v3961, %v4004
        %v4027 = vsub.f32 %v3962, %v4004
        %v4028 = vsub.f32 %v3963, %v4004
        %v4029 = vmul.f32 %v4005, %v4005
        %v4030 = vmul.f32 %v4006, %v4006
        %v4031 = vmul.f32 %v4007, %v4007
        %v4032 = vmul.f32 %v4008, %v4008
        %v4033 = vmul.f32 %v4009, %v4009
        %v4034 = vmul.f32 %v4010, %v4010
        %v4035 = vmul.f32 %v4011, %v4011
        %v4036 = vmul.f32 %v4012, %v4012
        %v4037 = vmul.f32 %v4013, %v4013
        %v4038 = vmul.f32 %v4014, %v4014
        %v4039 = vmul.f32 %v4015, %v4015
        %v4040 = vmul.f32 %v4016, %v4016
        %v4041 = vmul.f32 %v4017, %v4017
        %v4042 = vmul.f32 %v4018, %v4018
        %v4043 = vmul.f32 %v4019, %v4019
        %v4044 = vmul.f32 %v4020, %v4020
        %v4045 = vmul.f32 %v4021, %v4021
        %v4046 = vmul.f32 %v4022, %v4022
        %v4047 = vmul.f32 %v4023, %v4023
        %v4048 = vmul.f32 %v4024, %v4024
        %v4049 = vmul.f32 %v4025, %v4025
        %v4050 = vmul.f32 %v4026, %v4026
        %v4051 = vmul.f32 %v4027, %v4027
        %v4052 = vmul.f32 %v4028, %v4028
        %v4053 = vadd.f32 %v4029, %v4030
        %v4054 = vadd.f32 %v4053, %v4031
        %4055 = vadd.xlane.f32.xlu0 %v4054
        %v4056 = vpop.xlane.xlu0 %4055
        %v4057 = vadd.f32 %v4032, %v4033
        %v4058 = vadd.f32 %v4057, %v4034
        %4059 = vadd.xlane.f32.xlu0 %v4058
        %v4060 = vpop.xlane.xlu0 %4059
        %v4061 = vadd.f32 %v4035, %v4036
        %v4062 = vadd.f32 %v4061, %v4037
        %4063 = vadd.xlane.f32.xlu0 %v4062
        %v4064 = vpop.xlane.xlu0 %4063
        %v4065 = vadd.f32 %v4038, %v4039
        %v4066 = vadd.f32 %v4065, %v4040
        %4067 = vadd.xlane.f32.xlu0 %v4066
        %v4068 = vpop.xlane.xlu0 %4067
        %v4069 = vadd.f32 %v4041, %v4042
        %v4070 = vadd.f32 %v4069, %v4043
        %4071 = vadd.xlane.f32.xlu0 %v4070
        %v4072 = vpop.xlane.xlu0 %4071
        %v4073 = vadd.f32 %v4044, %v4045
        %v4074 = vadd.f32 %v4073, %v4046
        %4075 = vadd.xlane.f32.xlu0 %v4074
        %v4076 = vpop.xlane.xlu0 %4075
        %v4077 = vadd.f32 %v4047, %v4048
        %v4078 = vadd.f32 %v4077, %v4049
        %4079 = vadd.xlane.f32.xlu0 %v4078
        %v4080 = vpop.xlane.xlu0 %4079
        %v4081 = vadd.f32 %v4050, %v4051
        %v4082 = vadd.f32 %v4081, %v4052
        %4083 = vadd.xlane.f32.xlu0 %v4082
        %v4084 = vpop.xlane.xlu0 %4083
        %v4085 = vmul.f32 %v4056, %v3996
        %v4086 = vmul.f32 %v4060, %v3996
        %v4087 = vmul.f32 %v4064, %v3996
        %v4088 = vmul.f32 %v4068, %v3996
        %v4089 = vmul.f32 %v4072, %v3996
        %v4090 = vmul.f32 %v4076, %v3996
        %v4091 = vmul.f32 %v4080, %v3996
        %v4092 = vmul.f32 %v4084, %v3996
        %v4093 = vadd.f32 %v4085, 1e-12
        %v4094 = vadd.f32 %v4086, 1e-12
        %v4095 = vadd.f32 %v4087, 1e-12
        %v4096 = vadd.f32 %v4088, 1e-12
        %v4097 = vadd.f32 %v4089, 1e-12
        %v4098 = vadd.f32 %v4090, 1e-12
        %v4099 = vadd.f32 %v4091, 1e-12
        %v4100 = vadd.f32 %v4092, 1e-12
        %v4101 = vrsqrt.pop %v4093
        %v4102 = vrsqrt.pop %v4094
        %v4103 = vrsqrt.pop %v4095
        %v4104 = vrsqrt.pop %v4096
        %v4105 = vrsqrt.pop %v4097
        %v4106 = vrsqrt.pop %v4098
        %v4107 = vrsqrt.pop %v4099
        %v4108 = vrsqrt.pop %v4100
        %v4109 = vmul.f32 %v4005, %v4101
        %v4110 = vmul.f32 %v4006, %v4101
        %v4111 = vmul.f32 %v4007, %v4101
        %v4112 = vmul.f32 %v4008, %v4102
        %v4113 = vmul.f32 %v4009, %v4102
        %v4114 = vmul.f32 %v4010, %v4102
        %v4115 = vmul.f32 %v4011, %v4103
        %v4116 = vmul.f32 %v4012, %v4103
        %v4117 = vmul.f32 %v4013, %v4103
        %v4118 = vmul.f32 %v4014, %v4104
        %v4119 = vmul.f32 %v4015, %v4104
        %v4120 = vmul.f32 %v4016, %v4104
        %v4121 = vmul.f32 %v4017, %v4105
        %v4122 = vmul.f32 %v4018, %v4105
        %v4123 = vmul.f32 %v4019, %v4105
        %v4124 = vmul.f32 %v4020, %v4106
        %v4125 = vmul.f32 %v4021, %v4106
        %v4126 = vmul.f32 %v4022, %v4106
        %v4127 = vmul.f32 %v4023, %v4107
        %v4128 = vmul.f32 %v4024, %v4107
        %v4129 = vmul.f32 %v4025, %v4107
        %v4130 = vmul.f32 %v4026, %v4108
        %v4131 = vmul.f32 %v4027, %v4108
        %v4132 = vmul.f32 %v4028, %v4108
        %v4133 = vld [vmem:[%s11] sm:$0x7]
        %v4135 = vlaneseq
        %v4136 = vshrl.u32 %v4135, 7
        %v4137 = vsub.s32 0, %v4136
        %v4138 = vrot.slane %v4133, %v4137
        %v4139 = vlaneseq
        %v4140 = vshrl.u32 %v4139, 7
        %v4141 = vsub.s32 1, %v4140
        %v4142 = vrot.slane %v4133, %v4141
        %v4143 = vlaneseq
        %v4144 = vshrl.u32 %v4143, 7
        %v4145 = vsub.s32 2, %v4144
        %v4146 = vrot.slane %v4133, %v4145
        %v4150 = vmul.f32 %v4109, %v4138
        %v4151 = vmul.f32 %v4110, %v4142
        %v4152 = vmul.f32 %v4111, %v4146
        %v4153 = vmul.f32 %v4112, %v4138
        %v4154 = vmul.f32 %v4113, %v4142
        %v4155 = vmul.f32 %v4114, %v4146
        %v4156 = vmul.f32 %v4115, %v4138
        %v4157 = vmul.f32 %v4116, %v4142
        %v4158 = vmul.f32 %v4117, %v4146
        %v4159 = vmul.f32 %v4118, %v4138
        %v4160 = vmul.f32 %v4119, %v4142
        %v4161 = vmul.f32 %v4120, %v4146
        %v4162 = vmul.f32 %v4121, %v4138
        %v4163 = vmul.f32 %v4122, %v4142
        %v4164 = vmul.f32 %v4123, %v4146
        %v4165 = vmul.f32 %v4124, %v4138
        %v4166 = vmul.f32 %v4125, %v4142
        %v4167 = vmul.f32 %v4126, %v4146
        %v4168 = vmul.f32 %v4127, %v4138
        %v4169 = vmul.f32 %v4128, %v4142
        %v4170 = vmul.f32 %v4129, %v4146
        %v4171 = vmul.f32 %v4130, %v4138
        %v4172 = vmul.f32 %v4131, %v4142
        %v4173 = vmul.f32 %v4132, %v4146
        %v4174 = vld [vmem:[%s12] sm:$0x7]
        %v4176 = vlaneseq
        %v4177 = vshrl.u32 %v4176, 7
        %v4178 = vsub.s32 0, %v4177
        %v4179 = vrot.slane %v4174, %v4178
        %v4180 = vlaneseq
        %v4181 = vshrl.u32 %v4180, 7
        %v4182 = vsub.s32 1, %v4181
        %v4183 = vrot.slane %v4174, %v4182
        %v4184 = vlaneseq
        %v4185 = vshrl.u32 %v4184, 7
        %v4186 = vsub.s32 2, %v4185
        %v4187 = vrot.slane %v4174, %v4186
        %v4191 = vadd.f32 %v4150, %v4179
        %v4192 = vadd.f32 %v4151, %v4183
        %v4193 = vadd.f32 %v4152, %v4187
        %v4194 = vadd.f32 %v4153, %v4179
        %v4195 = vadd.f32 %v4154, %v4183
        %v4196 = vadd.f32 %v4155, %v4187
        %v4197 = vadd.f32 %v4156, %v4179
        %v4198 = vadd.f32 %v4157, %v4183
        %v4199 = vadd.f32 %v4158, %v4187
        %v4200 = vadd.f32 %v4159, %v4179
        %v4201 = vadd.f32 %v4160, %v4183
        %v4202 = vadd.f32 %v4161, %v4187
        %v4203 = vadd.f32 %v4162, %v4179
        %v4204 = vadd.f32 %v4163, %v4183
        %v4205 = vadd.f32 %v4164, %v4187
        %v4206 = vadd.f32 %v4165, %v4179
        %v4207 = vadd.f32 %v4166, %v4183
        %v4208 = vadd.f32 %v4167, %v4187
        %v4209 = vadd.f32 %v4168, %v4179
        %v4210 = vadd.f32 %v4169, %v4183
        %v4211 = vadd.f32 %v4170, %v4187
        %v4212 = vadd.f32 %v4171, %v4179
        %v4213 = vadd.f32 %v4172, %v4183
        %v4214 = vadd.f32 %v4173, %v4187
        %4215 = vst [vmem:[%s619] sm:$0xff] %v4191
        %4216 = vst [vmem:[%s619 + $0x8] sm:$0xff] %v4192
        %4217 = vst [vmem:[%s619 + $0x10] sm:$0xff] %v4193
        %4218 = vst [vmem:[%s619 + $0x18] sm:$0xff] %v4194
        %4219 = vst [vmem:[%s619 + $0x20] sm:$0xff] %v4195
        %4220 = vst [vmem:[%s619 + $0x28] sm:$0xff] %v4196
        %4221 = vst [vmem:[%s619 + $0x30] sm:$0xff] %v4197
        %4222 = vst [vmem:[%s619 + $0x38] sm:$0xff] %v4198
        %4223 = vst [vmem:[%s619 + $0x40] sm:$0xff] %v4199
        %4224 = vst [vmem:[%s619 + $0x48] sm:$0xff] %v4200
        %4225 = vst [vmem:[%s619 + $0x50] sm:$0xff] %v4201
        %4226 = vst [vmem:[%s619 + $0x58] sm:$0xff] %v4202
        %4227 = vst [vmem:[%s619 + $0x60] sm:$0xff] %v4203
        %4228 = vst [vmem:[%s619 + $0x68] sm:$0xff] %v4204
        %4229 = vst [vmem:[%s619 + $0x70] sm:$0xff] %v4205
        %4230 = vst [vmem:[%s619 + $0x78] sm:$0xff] %v4206
        %4231 = vst [vmem:[%s619 + $0x80] sm:$0xff] %v4207
        %4232 = vst [vmem:[%s619 + $0x88] sm:$0xff] %v4208
        %4233 = vst [vmem:[%s619 + $0x90] sm:$0xff] %v4209
        %4234 = vst [vmem:[%s619 + $0x98] sm:$0xff] %v4210
        %4235 = vst [vmem:[%s619 + $0xa0] sm:$0xff] %v4211
        %4236 = vst [vmem:[%s619 + $0xa8] sm:$0xff] %v4212
        %4237 = vst [vmem:[%s619 + $0xb0] sm:$0xff] %v4213
        %4238 = vst [vmem:[%s619 + $0xb8] sm:$0xff] %v4214
        %s4239 = sand.u32 %s348, 1
        %s4240 = scalar_lea.sflag [#allocation5], %s4239
        %s4241 = sand.u32 %s348, 1
        %s4242 = smul.addr %s4241, 192
        %s4243 = scalar_lea.vmem [#allocation17], %s4242
        // Predicated region
        $region105: #{tpu_custom_call.1} parent=71 // pred_check
          %p4244 = pneg %p358
        $region106: #{tpu_custom_call.1} parent=71 // pred_check_branch
          %4246 = sbr.rel (%p4244) target = $region108
        $region107: #{tpu_custom_call.1} parent=71 // pred_region
          %s4247 = smul.u32 8, %s41
          %s4249 = ssub.s32 3072, 3072
          %4250 = vsyncadd %s4240, %s4249
          %s4251 = smul.addr %s4247, 3
          %s4252 = smul.addr %s40, 48
          %s4253 = sadd.s32 %s4251, %s4252
          %s4254 = smul.addr %s4253, 128
          %s4255 = scalar_lea.hbm %s13, %s4254
          %s4256 = sshll.u32 %s4243, 4
          %s4257 = int_to_ptr.vmem [resolvable:$true] %s4256
          %4262 = dma.vmem_to_hbm [thread:$0]  %s4257, 3072, %s4255, %s4240, 384, 384, 24
        $region108: #{tpu_custom_call.1} parent=71 // pred_fallthru
          _
      $region72: #{tpu_custom_call.1} parent=5 // pred_fallthru
        _
      %p4263 = scmp.le.s32.totalorder 2, %s31
      // Predicated region
      $region109: #{tpu_custom_call.1} parent=5 // pred_check
        %p4264 = pneg %p4263
      $region110: #{tpu_custom_call.1} parent=5 // pred_check_branch
        %4266 = sbr.rel (%p4264) target = $region112
      $region111: #{tpu_custom_call.1} parent=5 // pred_region
        %s4267 = ssub.s32 %s31, 2
        // Predicated region
        $region113: #{tpu_custom_call.1} parent=111 // pred_check
          %p4268 = pneg %p364
        $region114: #{tpu_custom_call.1} parent=111 // pred_check_branch
          %4270 = sbr.rel (%p4268) target = $region116
        $region115: #{tpu_custom_call.1} parent=111 // pred_region
          %s4271 = sand.u32 %s349, 1
          %s4272 = scalar_lea.sflag [#allocation5], %s4271
          %s4273 = sand.u32 %s349, 1
          %s4274 = smul.addr %s4273, 192
          %s4275 = scalar_lea.vmem [#allocation17], %s4274
          %4276 = dma.done %s4272, 3072
        $region116: #{tpu_custom_call.1} parent=111 // pred_fallthru
          _
      $region112: #{tpu_custom_call.1} parent=5 // pred_fallthru
        _
    $region6: #{tpu_custom_call.1} parent=1 // loop_footer
      %s35 = sadd.s32 1, %s31
    $region7: #{tpu_custom_call.1} parent=1 // loop_footer_branch
      %30 = sbr.rel target = $region3
    $region8: #{tpu_custom_call.1} parent=1 // loop_exit
      _
    %4277 = vsyncpa [#allocation4], 1
    %s4278 = scalar_lea.sflag [#allocation4], 1
    %4279 = vsyncpa %s4278, 1
    %4280 = vsyncpa [#allocation7], 1
    %s4281 = scalar_lea.sflag [#allocation7], 1
    %4282 = vsyncpa %s4281, 1
    %4283 = vsyncpa [#allocation10], 1
    %4284 = vsyncpa [#allocation13], 1
    %4285 = vsyncpa [#allocation16], 1
    %4286 = vsyncpa [#allocation5], 1
    %s4287 = scalar_lea.sflag [#allocation5], 1
    %4288 = vsyncpa %s4287, 1

</llo_original>
